<compile_context>
chip_gen: v7x
topology: tpu7x:2x2x1
jax: 0.10.0
libtpu: 0.0.40
codegen_flags: <defaults>
</compile_context>

<pallas_src>
import numpy as np
import jax
import jax.numpy as jnp
from jax.experimental import pallas as pl
from jax.experimental.pallas import tpu as pltpu


def _maxpool_2x2(y2d, nb, hc, wc, c):
    """2x2 stride-2 max-pool.  y2d: (nb*hc*wc, c), rows ordered (n, h, w)."""
    h2, w2 = hc // 2, wc // 2
    # Minor dim (c) is preserved by the reshape -> no lane relayout.
    y6 = y2d.reshape(nb, h2, 2, w2, 2, c)
    return jnp.maximum(
        jnp.maximum(y6[:, :, 0, :, 0, :], y6[:, :, 0, :, 1, :]),
        jnp.maximum(y6[:, :, 1, :, 0, :], y6[:, :, 1, :, 1, :]))  # (nb,h2,w2,c)


# ----------------------------------------------------------------------------
# Stage 1: conv1 -> relu -> pool -> conv2 -> relu -> pool   (per batch block)
# ----------------------------------------------------------------------------
def make_conv_kernel(NB, H, W, C_IN, C1, C2):
    H2, W2, H4, W4 = H // 2, W // 2, H // 4, W // 4
    f32, bf16 = jnp.float32, jnp.bfloat16

    def kernel(x_ref, w1_ref, b1_ref, w2_ref, b2_ref, out_ref):
        # ---- conv1 (3x3, pad=1): kx taps fused -> 3 matmuls with K=3*C_IN --
        acc1 = jnp.zeros((NB * H * W, C1), f32)
        for ky in range(3):
            lhs = jnp.concatenate(
                [x_ref[:, ky:ky + H, kx:kx + W, :] for kx in range(3)],
                axis=-1)                                    # (NB,H,W,3*C_IN) bf16
            acc1 = acc1 + jnp.dot(lhs.reshape(NB * H * W, 3 * C_IN),
                                  w1_ref[ky], preferred_element_type=f32)
        y1 = jnp.maximum(acc1 + b1_ref[...], 0.0)           # (NB*H*W, C1) f32

        # ---- maxpool 2x2 -> bf16 activation --------------------------------
        p1 = _maxpool_2x2(y1, NB, H, W, C1).astype(bf16)    # (NB,H2,W2,C1)

        # ---- spatial zero-pad by 1 (values; no scratch, no sliced stores) --
        zc = jnp.zeros((NB, H2, 1, C1), bf16)
        zr = jnp.zeros((NB, 1, W2 + 2, C1), bf16)
        p1p = jnp.concatenate([zc, p1, zc], axis=2)         # (NB,H2,W2+2,C1)
        p1p = jnp.concatenate([zr, p1p, zr], axis=1)        # (NB,H2+2,W2+2,C1)

        # ---- conv2 (3x3, pad=1): kx taps fused -> 3 matmuls with K=3*C1 ----
        acc2 = jnp.zeros((NB * H2 * W2, C2), f32)
        for ky in range(3):
            lhs = jnp.concatenate(
                [p1p[:, ky:ky + H2, kx:kx + W2, :] for kx in range(3)],
                axis=-1)                                    # (NB,H2,W2,3*C1) bf16
            acc2 = acc2 + jnp.dot(lhs.reshape(NB * H2 * W2, 3 * C1),
                                  w2_ref[ky], preferred_element_type=f32)
        y2 = jnp.maximum(acc2 + b2_ref[...], 0.0)           # (NB*H2*W2, C2) f32

        # ---- maxpool 2x2 ----------------------------------------------------
        p2 = _maxpool_2x2(y2, NB, H2, W2, C2)               # (NB,H4,W4,C2) f32

        # ---- lane-dense output block: (NB, H4, W4*C2) ------------------------
        out = jnp.concatenate([p2[:, :, w, :] for w in range(W4)], axis=-1)
        out_ref[...] = out.astype(out_ref.dtype)

    return kernel


# ----------------------------------------------------------------------------
# Stage 2: fc1 (+relu) + fc2, fc1 reduction streamed over the k grid axis
# ----------------------------------------------------------------------------
def fc_kernel(x_ref, w1_ref, b1_ref, w2_ref, b2_ref, out_ref, acc_ref):
    k = pl.program_id(1)

    @pl.when(k == 0)
    def _():
        acc_ref[...] = jnp.zeros_like(acc_ref)

    acc_ref[...] += jnp.dot(x_ref[...], w1_ref[...],
                            preferred_element_type=jnp.float32)

    @pl.when(k == pl.num_programs(1) - 1)
    def _():
        h = jnp.maximum(acc_ref[...] + b1_ref[...], 0.0)    # (MB, HID) f32
        out_ref[...] = (jnp.dot(h.astype(jnp.bfloat16), w2_ref[...],
                                preferred_element_type=jnp.float32)
                        + b2_ref[...])                      # (MB, NCLS) f32


# ----------------------------------------------------------------------------
# Wrapper: PyTorch (NCHW / torch weight layouts) -> Pallas kernels
# ----------------------------------------------------------------------------
def skin_cancer_cnn_forward(x_nchw, params):
    w1, b1, w2, b2, wf1, bf1, wf2, bf2 = params
    B, C_IN, H, W = x_nchw.shape
    C1, C2 = w1.shape[0], w2.shape[0]
    HID, NCLS = wf1.shape[0], wf2.shape[0]
    assert H % 4 == 0 and W % 4 == 0, "pooling path requires H, W divisible by 4"
    H2, W2, H4, W4 = H // 2, W // 2, H // 4, W // 4
    Kf = H4 * W4 * C2

    # ---- glue: NCHW -> NHWC, spatial zero-pad by 1, bf16 for DMA -----------
    x = jnp.transpose(x_nchw, (0, 2, 3, 1))
    x = jnp.pad(x, ((0, 0), (1, 1), (1, 1), (0, 0))).astype(jnp.bfloat16)

    # ---- glue: weights -> fused-kx kernel layouts, bf16 for the MXU --------
    w1k = jnp.transpose(w1, (2, 3, 1, 0)).reshape(3, 3 * C_IN, C1).astype(jnp.bfloat16)
    w2k = jnp.transpose(w2, (2, 3, 1, 0)).reshape(3, 3 * C1, C2).astype(jnp.bfloat16)
    b1k = b1.reshape(1, C1).astype(jnp.float32)
    b2k = b2.reshape(1, C2).astype(jnp.float32)
    # torch flatten order is (C2,H4,W4); kernel feature order is (H4,W4,C2)
    wf1k = jnp.transpose(wf1.reshape(HID, C2, H4, W4),
                         (2, 3, 1, 0)).reshape(Kf, HID).astype(jnp.bfloat16)
    wf2k = wf2.T.astype(jnp.bfloat16)                       # (HID, NCLS)
    bf1k = bf1.reshape(1, HID).astype(jnp.float32)
    bf2k = bf2.reshape(1, NCLS).astype(jnp.float32)

    # ---- stage 1: conv stack; keep the parallel grid axis extent >= 2 ------
    divs = [d for d in range(1, B + 1) if B % d == 0 and d <= 8]
    pref = [d for d in divs if B // d >= 2]
    NB = max(pref) if pref else max(divs)
    conv_k = make_conv_kernel(NB, H, W, C_IN, C1, C2)
    feat = pl.pallas_call(
        conv_k,
        out_shape=jax.ShapeDtypeStruct((B, H4, W4 * C2), jnp.bfloat16),
        grid_spec=pltpu.PrefetchScalarGridSpec(
            num_scalar_prefetch=0,
            grid=(B // NB,),
            in_specs=[
                pl.BlockSpec((NB, H + 2, W + 2, C_IN), lambda b: (b, 0, 0, 0)),
                pl.BlockSpec((3, 3 * C_IN, C1), lambda b: (0, 0, 0)),
                pl.BlockSpec((1, C1), lambda b: (0, 0)),
                pl.BlockSpec((3, 3 * C1, C2), lambda b: (0, 0, 0)),
                pl.BlockSpec((1, C2), lambda b: (0, 0)),
            ],
            out_specs=pl.BlockSpec((NB, H4, W4 * C2), lambda b: (b, 0, 0)),
        ),
        compiler_params=pltpu.CompilerParams(
            dimension_semantics=("parallel",),
            vmem_limit_bytes=48 * 1024 * 1024),
    )(x, w1k, b1k, w2k, b2k)

    # ---- glue: (B, H4, W4*C2) -> (B, Kf) is a free contiguous reshape ------
    xf = feat.reshape(B, Kf)

    # ---- stage 2: FC stack; fc1 reduction streamed in large TK tiles -------
    TK = next((t for t in (16384, 8192, 4096, 2048, 1024, 512, 256, 128)
               if Kf % t == 0), Kf)
    MB = B
    out = pl.pallas_call(
        fc_kernel,
        out_shape=jax.ShapeDtypeStruct((B, NCLS), jnp.float32),
        grid_spec=pltpu.PrefetchScalarGridSpec(
            num_scalar_prefetch=0,
            grid=(B // MB, Kf // TK),
            in_specs=[
                pl.BlockSpec((MB, TK), lambda i, k: (i, k)),
                pl.BlockSpec((TK, HID), lambda i, k: (k, 0)),
                pl.BlockSpec((1, HID), lambda i, k: (0, 0)),
                pl.BlockSpec((HID, NCLS), lambda i, k: (0, 0)),
                pl.BlockSpec((1, NCLS), lambda i, k: (0, 0)),
            ],
            out_specs=pl.BlockSpec((MB, NCLS), lambda i, k: (i, 0)),
            scratch_shapes=[pltpu.VMEM((MB, HID), jnp.float32)],
        ),
        compiler_params=pltpu.CompilerParams(
            dimension_semantics=("parallel", "arbitrary"),
            vmem_limit_bytes=32 * 1024 * 1024),
    )(xf, wf1k, bf1k, wf2k, bf2k)
    return out


# ----------------------------------------------------------------------------
# Pure-JAX reference (mirrors the PyTorch module exactly, f32 everywhere)
# ----------------------------------------------------------------------------
def reference_forward(x, params):
    w1, b1, w2, b2, wf1, bf1, wf2, bf2 = params
    dn = ('NCHW', 'OIHW', 'NCHW')
    y = jax.lax.conv_general_dilated(x, w1, (1, 1), ((1, 1), (1, 1)),
                                     dimension_numbers=dn)
    y = jnp.maximum(y + b1[None, :, None, None], 0.0)
    y = jax.lax.reduce_window(y, -jnp.inf, jax.lax.max,
                              (1, 1, 2, 2), (1, 1, 2, 2), 'VALID')
    y = jax.lax.conv_general_dilated(y, w2, (1, 1), ((1, 1), (1, 1)),
                                     dimension_numbers=dn)
    y = jnp.maximum(y + b2[None, :, None, None], 0.0)
    y = jax.lax.reduce_window(y, -jnp.inf, jax.lax.max,
                              (1, 1, 2, 2), (1, 1, 2, 2), 'VALID')
    y = y.reshape(y.shape[0], -1)
    y = jnp.maximum(y @ wf1.T + bf1, 0.0)
    return y @ wf2.T + bf2


if __name__ == "__main__":
    # Small shapes consistent with the module: in_channels=6 fixed by conv1.
    # 16x16 input -> two 2x2 pools -> 4x4, so fc1 in_features = 64*4*4 = 1024
    # (the original module uses 224x224 -> 64*56*56; same structure).
    B, C_IN, H, W = 2, 6, 16, 16
    C1, C2, HID, NUM_CLASSES = 32, 64, 128, 7
    H4, W4 = H // 4, W // 4

    key = jax.random.PRNGKey(0)
    ks = jax.random.split(key, 9)
    params = (
        0.05 * jax.random.normal(ks[0], (C1, C_IN, 3, 3), jnp.float32),    # conv1.weight
        0.05 * jax.random.normal(ks[1], (C1,), jnp.float32),               # conv1.bias
        0.05 * jax.random.normal(ks[2], (C2, C1, 3, 3), jnp.float32),      # conv2.weight
        0.05 * jax.random.normal(ks[3], (C2,), jnp.float32),               # conv2.bias
        0.05 * jax.random.normal(ks[4], (HID, C2 * H4 * W4), jnp.float32), # fc1.weight
        0.05 * jax.random.normal(ks[5], (HID,), jnp.float32),              # fc1.bias
        0.05 * jax.random.normal(ks[6], (NUM_CLASSES, HID), jnp.float32),  # fc2.weight
        0.05 * jax.random.normal(ks[7], (NUM_CLASSES,), jnp.float32),      # fc2.bias
    )
    x = jax.random.normal(ks[8], (B, C_IN, H, W), jnp.float32)

    out = jax.block_until_ready(skin_cancer_cnn_forward(x, params))
    ref = jax.block_until_ready(reference_forward(x, params))

    # bf16 matmul operands / bf16 inter-layer activations (f32 accumulation)
    # vs the f32 reference -> loose tolerance.
    np.testing.assert_allclose(np.asarray(out), np.asarray(ref),
                               rtol=2e-2, atol=2e-2)
    print("KERNEL_OK")
</pallas_src>

<mosaic_0001>
module attributes {stable_mosaic.version = 11 : i64} {
  func.func @kernel(%arg0: i32, %arg1: memref<1x18x18x6xbf16, #tpu.memory_space<vmem>>, %arg2: memref<3x18x32xbf16, #tpu.memory_space<vmem>>, %arg3: memref<1x32xf32, #tpu.memory_space<vmem>>, %arg4: memref<3x96x64xbf16, #tpu.memory_space<vmem>>, %arg5: memref<1x64xf32, #tpu.memory_space<vmem>>, %arg6: memref<1x4x256xbf16, #tpu.memory_space<vmem>>) attributes {dimension_semantics = [#tpu.dimension_semantics<parallel>], iteration_bounds = array<i64: 2>, scalar_prefetch = 0 : i64, scratch_operands = 0 : i64, tpu.core_type = #tpu.core_type<tc>, window_params = [{transform_indices = @transform_0, window_bounds = array<i64: 1, 18, 18, 6>}, {pipeline_mode = #tpu.pipeline_mode<synchronous>, transform_indices = @transform_1, window_bounds = array<i64: 3, 18, 32>}, {pipeline_mode = #tpu.pipeline_mode<synchronous>, transform_indices = @transform_2, window_bounds = array<i64: 1, 32>}, {pipeline_mode = #tpu.pipeline_mode<synchronous>, transform_indices = @transform_3, window_bounds = array<i64: 3, 96, 64>}, {pipeline_mode = #tpu.pipeline_mode<synchronous>, transform_indices = @transform_4, window_bounds = array<i64: 1, 64>}, {transform_indices = @transform_5, window_bounds = array<i64: 1, 4, 256>}]} {
    %cst = arith.constant 0.000000e+00 : f32
    %0 = vector.broadcast %cst : f32 to vector<256x32xf32>
    %c0 = arith.constant 0 : index
    %c0_0 = arith.constant 0 : index
    %c0_1 = arith.constant 0 : index
    %c0_2 = arith.constant 0 : index
    %1 = vector.load %arg1[%c0, %c0_0, %c0_1, %c0_2] : memref<1x18x18x6xbf16, #tpu.memory_space<vmem>>, vector<1x16x16x6xbf16>
    %c0_3 = arith.constant 0 : index
    %c0_4 = arith.constant 0 : index
    %c1 = arith.constant 1 : index
    %c0_5 = arith.constant 0 : index
    %2 = vector.load %arg1[%c0_3, %c0_4, %c1, %c0_5] : memref<1x18x18x6xbf16, #tpu.memory_space<vmem>>, vector<1x16x16x6xbf16>
    %c0_6 = arith.constant 0 : index
    %c0_7 = arith.constant 0 : index
    %c2 = arith.constant 2 : index
    %c0_8 = arith.constant 0 : index
    %3 = vector.load %arg1[%c0_6, %c0_7, %c2, %c0_8] : memref<1x18x18x6xbf16, #tpu.memory_space<vmem>>, vector<1x16x16x6xbf16>
    %4 = tpu.concatenate %1, %2, %3 in 3 : vector<1x16x16x6xbf16>, vector<1x16x16x6xbf16>, vector<1x16x16x6xbf16> -> vector<1x16x16x18xbf16>
    %5 = vector.shape_cast %4 : vector<1x16x16x18xbf16> to vector<256x18xbf16>
    %c0_9 = arith.constant 0 : index
    %c0_10 = arith.constant 0 : index
    %c0_11 = arith.constant 0 : index
    %6 = vector.load %arg2[%c0_9, %c0_10, %c0_11] : memref<3x18x32xbf16, #tpu.memory_space<vmem>>, vector<1x18x32xbf16>
    %7 = vector.shape_cast %6 : vector<1x18x32xbf16> to vector<18x32xbf16>
    %cst_12 = arith.constant dense<0.000000e+00> : vector<256x32xf32>
    %8 = tpu.matmul %5, %7, %cst_12 {dimension_numbers = #tpu.dot_dimension_numbers<[1], [0], [0], [1], [0, 0, 1, 1], [], []>} : vector<256x18xbf16>, vector<18x32xbf16>, vector<256x32xf32> -> vector<256x32xf32>
    %9 = arith.addf %0, %8 : vector<256x32xf32>
    %c0_13 = arith.constant 0 : index
    %c1_14 = arith.constant 1 : index
    %c0_15 = arith.constant 0 : index
    %c0_16 = arith.constant 0 : index
    %10 = vector.load %arg1[%c0_13, %c1_14, %c0_15, %c0_16] : memref<1x18x18x6xbf16, #tpu.memory_space<vmem>>, vector<1x16x16x6xbf16>
    %c0_17 = arith.constant 0 : index
    %c1_18 = arith.constant 1 : index
    %c1_19 = arith.constant 1 : index
    %c0_20 = arith.constant 0 : index
    %11 = vector.load %arg1[%c0_17, %c1_18, %c1_19, %c0_20] : memref<1x18x18x6xbf16, #tpu.memory_space<vmem>>, vector<1x16x16x6xbf16>
    %c0_21 = arith.constant 0 : index
    %c1_22 = arith.constant 1 : index
    %c2_23 = arith.constant 2 : index
    %c0_24 = arith.constant 0 : index
    %12 = vector.load %arg1[%c0_21, %c1_22, %c2_23, %c0_24] : memref<1x18x18x6xbf16, #tpu.memory_space<vmem>>, vector<1x16x16x6xbf16>
    %13 = tpu.concatenate %10, %11, %12 in 3 : vector<1x16x16x6xbf16>, vector<1x16x16x6xbf16>, vector<1x16x16x6xbf16> -> vector<1x16x16x18xbf16>
    %14 = vector.shape_cast %13 : vector<1x16x16x18xbf16> to vector<256x18xbf16>
    %c1_25 = arith.constant 1 : index
    %c0_26 = arith.constant 0 : index
    %c0_27 = arith.constant 0 : index
    %15 = vector.load %arg2[%c1_25, %c0_26, %c0_27] : memref<3x18x32xbf16, #tpu.memory_space<vmem>>, vector<1x18x32xbf16>
    %16 = vector.shape_cast %15 : vector<1x18x32xbf16> to vector<18x32xbf16>
    %cst_28 = arith.constant dense<0.000000e+00> : vector<256x32xf32>
    %17 = tpu.matmul %14, %16, %cst_28 {dimension_numbers = #tpu.dot_dimension_numbers<[1], [0], [0], [1], [0, 0, 1, 1], [], []>} : vector<256x18xbf16>, vector<18x32xbf16>, vector<256x32xf32> -> vector<256x32xf32>
    %18 = arith.addf %9, %17 : vector<256x32xf32>
    %c0_29 = arith.constant 0 : index
    %c2_30 = arith.constant 2 : index
    %c0_31 = arith.constant 0 : index
    %c0_32 = arith.constant 0 : index
    %19 = vector.load %arg1[%c0_29, %c2_30, %c0_31, %c0_32] : memref<1x18x18x6xbf16, #tpu.memory_space<vmem>>, vector<1x16x16x6xbf16>
    %c0_33 = arith.constant 0 : index
    %c2_34 = arith.constant 2 : index
    %c1_35 = arith.constant 1 : index
    %c0_36 = arith.constant 0 : index
    %20 = vector.load %arg1[%c0_33, %c2_34, %c1_35, %c0_36] : memref<1x18x18x6xbf16, #tpu.memory_space<vmem>>, vector<1x16x16x6xbf16>
    %c0_37 = arith.constant 0 : index
    %c2_38 = arith.constant 2 : index
    %c2_39 = arith.constant 2 : index
    %c0_40 = arith.constant 0 : index
    %21 = vector.load %arg1[%c0_37, %c2_38, %c2_39, %c0_40] : memref<1x18x18x6xbf16, #tpu.memory_space<vmem>>, vector<1x16x16x6xbf16>
    %22 = tpu.concatenate %19, %20, %21 in 3 : vector<1x16x16x6xbf16>, vector<1x16x16x6xbf16>, vector<1x16x16x6xbf16> -> vector<1x16x16x18xbf16>
    %23 = vector.shape_cast %22 : vector<1x16x16x18xbf16> to vector<256x18xbf16>
    %c2_41 = arith.constant 2 : index
    %c0_42 = arith.constant 0 : index
    %c0_43 = arith.constant 0 : index
    %24 = vector.load %arg2[%c2_41, %c0_42, %c0_43] : memref<3x18x32xbf16, #tpu.memory_space<vmem>>, vector<1x18x32xbf16>
    %25 = vector.shape_cast %24 : vector<1x18x32xbf16> to vector<18x32xbf16>
    %cst_44 = arith.constant dense<0.000000e+00> : vector<256x32xf32>
    %26 = tpu.matmul %23, %25, %cst_44 {dimension_numbers = #tpu.dot_dimension_numbers<[1], [0], [0], [1], [0, 0, 1, 1], [], []>} : vector<256x18xbf16>, vector<18x32xbf16>, vector<256x32xf32> -> vector<256x32xf32>
    %27 = arith.addf %18, %26 : vector<256x32xf32>
    %c0_45 = arith.constant 0 : index
    %c0_46 = arith.constant 0 : index
    %28 = vector.load %arg3[%c0_45, %c0_46] : memref<1x32xf32, #tpu.memory_space<vmem>>, vector<1x32xf32>
    %29 = vector.broadcast %28 : vector<1x32xf32> to vector<256x32xf32>
    %30 = arith.addf %27, %29 : vector<256x32xf32>
    %cst_47 = arith.constant 0.000000e+00 : f32
    %31 = vector.broadcast %cst_47 : f32 to vector<256x32xf32>
    %32 = arith.maximumf %30, %31 : vector<256x32xf32>
    %33 = vector.shape_cast %32 : vector<256x32xf32> to vector<1x8x2x8x2x32xf32>
    %34 = vector.extract_strided_slice %33 {offsets = [0, 0, 0, 0, 0, 0], sizes = [1, 8, 1, 8, 1, 32], strides = [1, 1, 1, 1, 1, 1]} : vector<1x8x2x8x2x32xf32> to vector<1x8x1x8x1x32xf32>
    %35 = vector.shape_cast %34 : vector<1x8x1x8x1x32xf32> to vector<1x8x8x32xf32>
    %36 = vector.extract_strided_slice %33 {offsets = [0, 0, 0, 0, 1, 0], sizes = [1, 8, 1, 8, 1, 32], strides = [1, 1, 1, 1, 1, 1]} : vector<1x8x2x8x2x32xf32> to vector<1x8x1x8x1x32xf32>
    %37 = vector.shape_cast %36 : vector<1x8x1x8x1x32xf32> to vector<1x8x8x32xf32>
    %38 = arith.maximumf %35, %37 : vector<1x8x8x32xf32>
    %39 = vector.extract_strided_slice %33 {offsets = [0, 0, 1, 0, 0, 0], sizes = [1, 8, 1, 8, 1, 32], strides = [1, 1, 1, 1, 1, 1]} : vector<1x8x2x8x2x32xf32> to vector<1x8x1x8x1x32xf32>
    %40 = vector.shape_cast %39 : vector<1x8x1x8x1x32xf32> to vector<1x8x8x32xf32>
    %41 = vector.extract_strided_slice %33 {offsets = [0, 0, 1, 0, 1, 0], sizes = [1, 8, 1, 8, 1, 32], strides = [1, 1, 1, 1, 1, 1]} : vector<1x8x2x8x2x32xf32> to vector<1x8x1x8x1x32xf32>
    %42 = vector.shape_cast %41 : vector<1x8x1x8x1x32xf32> to vector<1x8x8x32xf32>
    %43 = arith.maximumf %40, %42 : vector<1x8x8x32xf32>
    %44 = arith.maximumf %38, %43 : vector<1x8x8x32xf32>
    %45 = arith.truncf %44 : vector<1x8x8x32xf32> to vector<1x8x8x32xbf16>
    %cst_48 = arith.constant 0.000000e+00 : bf16
    %46 = vector.broadcast %cst_48 : bf16 to vector<1x8x1x32xbf16>
    %cst_49 = arith.constant 0.000000e+00 : bf16
    %47 = vector.broadcast %cst_49 : bf16 to vector<1x1x10x32xbf16>
    %48 = tpu.concatenate %46, %45, %46 in 2 : vector<1x8x1x32xbf16>, vector<1x8x8x32xbf16>, vector<1x8x1x32xbf16> -> vector<1x8x10x32xbf16>
    %49 = tpu.concatenate %47, %48, %47 in 1 : vector<1x1x10x32xbf16>, vector<1x8x10x32xbf16>, vector<1x1x10x32xbf16> -> vector<1x10x10x32xbf16>
    %cst_50 = arith.constant 0.000000e+00 : f32
    %50 = vector.broadcast %cst_50 : f32 to vector<64x64xf32>
    %51 = vector.extract_strided_slice %49 {offsets = [0, 0, 0, 0], sizes = [1, 8, 8, 32], strides = [1, 1, 1, 1]} : vector<1x10x10x32xbf16> to vector<1x8x8x32xbf16>
    %52 = vector.extract_strided_slice %49 {offsets = [0, 0, 1, 0], sizes = [1, 8, 8, 32], strides = [1, 1, 1, 1]} : vector<1x10x10x32xbf16> to vector<1x8x8x32xbf16>
    %53 = vector.extract_strided_slice %49 {offsets = [0, 0, 2, 0], sizes = [1, 8, 8, 32], strides = [1, 1, 1, 1]} : vector<1x10x10x32xbf16> to vector<1x8x8x32xbf16>
    %54 = tpu.concatenate %51, %52, %53 in 3 : vector<1x8x8x32xbf16>, vector<1x8x8x32xbf16>, vector<1x8x8x32xbf16> -> vector<1x8x8x96xbf16>
    %55 = vector.shape_cast %54 : vector<1x8x8x96xbf16> to vector<64x96xbf16>
    %c0_51 = arith.constant 0 : index
    %c0_52 = arith.constant 0 : index
    %c0_53 = arith.constant 0 : index
    %56 = vector.load %arg4[%c0_51, %c0_52, %c0_53] : memref<3x96x64xbf16, #tpu.memory_space<vmem>>, vector<1x96x64xbf16>
    %57 = vector.shape_cast %56 : vector<1x96x64xbf16> to vector<96x64xbf16>
    %cst_54 = arith.constant dense<0.000000e+00> : vector<64x64xf32>
    %58 = tpu.matmul %55, %57, %cst_54 {dimension_numbers = #tpu.dot_dimension_numbers<[1], [0], [0], [1], [0, 0, 1, 1], [], []>} : vector<64x96xbf16>, vector<96x64xbf16>, vector<64x64xf32> -> vector<64x64xf32>
    %59 = arith.addf %50, %58 : vector<64x64xf32>
    %60 = vector.extract_strided_slice %49 {offsets = [0, 1, 0, 0], sizes = [1, 8, 8, 32], strides = [1, 1, 1, 1]} : vector<1x10x10x32xbf16> to vector<1x8x8x32xbf16>
    %61 = vector.extract_strided_slice %49 {offsets = [0, 1, 1, 0], sizes = [1, 8, 8, 32], strides = [1, 1, 1, 1]} : vector<1x10x10x32xbf16> to vector<1x8x8x32xbf16>
    %62 = vector.extract_strided_slice %49 {offsets = [0, 1, 2, 0], sizes = [1, 8, 8, 32], strides = [1, 1, 1, 1]} : vector<1x10x10x32xbf16> to vector<1x8x8x32xbf16>
    %63 = tpu.concatenate %60, %61, %62 in 3 : vector<1x8x8x32xbf16>, vector<1x8x8x32xbf16>, vector<1x8x8x32xbf16> -> vector<1x8x8x96xbf16>
    %64 = vector.shape_cast %63 : vector<1x8x8x96xbf16> to vector<64x96xbf16>
    %c1_55 = arith.constant 1 : index
    %c0_56 = arith.constant 0 : index
    %c0_57 = arith.constant 0 : index
    %65 = vector.load %arg4[%c1_55, %c0_56, %c0_57] : memref<3x96x64xbf16, #tpu.memory_space<vmem>>, vector<1x96x64xbf16>
    %66 = vector.shape_cast %65 : vector<1x96x64xbf16> to vector<96x64xbf16>
    %cst_58 = arith.constant dense<0.000000e+00> : vector<64x64xf32>
    %67 = tpu.matmul %64, %66, %cst_58 {dimension_numbers = #tpu.dot_dimension_numbers<[1], [0], [0], [1], [0, 0, 1, 1], [], []>} : vector<64x96xbf16>, vector<96x64xbf16>, vector<64x64xf32> -> vector<64x64xf32>
    %68 = arith.addf %59, %67 : vector<64x64xf32>
    %69 = vector.extract_strided_slice %49 {offsets = [0, 2, 0, 0], sizes = [1, 8, 8, 32], strides = [1, 1, 1, 1]} : vector<1x10x10x32xbf16> to vector<1x8x8x32xbf16>
    %70 = vector.extract_strided_slice %49 {offsets = [0, 2, 1, 0], sizes = [1, 8, 8, 32], strides = [1, 1, 1, 1]} : vector<1x10x10x32xbf16> to vector<1x8x8x32xbf16>
    %71 = vector.extract_strided_slice %49 {offsets = [0, 2, 2, 0], sizes = [1, 8, 8, 32], strides = [1, 1, 1, 1]} : vector<1x10x10x32xbf16> to vector<1x8x8x32xbf16>
    %72 = tpu.concatenate %69, %70, %71 in 3 : vector<1x8x8x32xbf16>, vector<1x8x8x32xbf16>, vector<1x8x8x32xbf16> -> vector<1x8x8x96xbf16>
    %73 = vector.shape_cast %72 : vector<1x8x8x96xbf16> to vector<64x96xbf16>
    %c2_59 = arith.constant 2 : index
    %c0_60 = arith.constant 0 : index
    %c0_61 = arith.constant 0 : index
    %74 = vector.load %arg4[%c2_59, %c0_60, %c0_61] : memref<3x96x64xbf16, #tpu.memory_space<vmem>>, vector<1x96x64xbf16>
    %75 = vector.shape_cast %74 : vector<1x96x64xbf16> to vector<96x64xbf16>
    %cst_62 = arith.constant dense<0.000000e+00> : vector<64x64xf32>
    %76 = tpu.matmul %73, %75, %cst_62 {dimension_numbers = #tpu.dot_dimension_numbers<[1], [0], [0], [1], [0, 0, 1, 1], [], []>} : vector<64x96xbf16>, vector<96x64xbf16>, vector<64x64xf32> -> vector<64x64xf32>
    %77 = arith.addf %68, %76 : vector<64x64xf32>
    %c0_63 = arith.constant 0 : index
    %c0_64 = arith.constant 0 : index
    %78 = vector.load %arg5[%c0_63, %c0_64] : memref<1x64xf32, #tpu.memory_space<vmem>>, vector<1x64xf32>
    %79 = vector.broadcast %78 : vector<1x64xf32> to vector<64x64xf32>
    %80 = arith.addf %77, %79 : vector<64x64xf32>
    %cst_65 = arith.constant 0.000000e+00 : f32
    %81 = vector.broadcast %cst_65 : f32 to vector<64x64xf32>
    %82 = arith.maximumf %80, %81 : vector<64x64xf32>
    %83 = vector.shape_cast %82 : vector<64x64xf32> to vector<1x4x2x4x2x64xf32>
    %84 = vector.extract_strided_slice %83 {offsets = [0, 0, 0, 0, 0, 0], sizes = [1, 4, 1, 4, 1, 64], strides = [1, 1, 1, 1, 1, 1]} : vector<1x4x2x4x2x64xf32> to vector<1x4x1x4x1x64xf32>
    %85 = vector.shape_cast %84 : vector<1x4x1x4x1x64xf32> to vector<1x4x4x64xf32>
    %86 = vector.extract_strided_slice %83 {offsets = [0, 0, 0, 0, 1, 0], sizes = [1, 4, 1, 4, 1, 64], strides = [1, 1, 1, 1, 1, 1]} : vector<1x4x2x4x2x64xf32> to vector<1x4x1x4x1x64xf32>
    %87 = vector.shape_cast %86 : vector<1x4x1x4x1x64xf32> to vector<1x4x4x64xf32>
    %88 = arith.maximumf %85, %87 : vector<1x4x4x64xf32>
    %89 = vector.extract_strided_slice %83 {offsets = [0, 0, 1, 0, 0, 0], sizes = [1, 4, 1, 4, 1, 64], strides = [1, 1, 1, 1, 1, 1]} : vector<1x4x2x4x2x64xf32> to vector<1x4x1x4x1x64xf32>
    %90 = vector.shape_cast %89 : vector<1x4x1x4x1x64xf32> to vector<1x4x4x64xf32>
    %91 = vector.extract_strided_slice %83 {offsets = [0, 0, 1, 0, 1, 0], sizes = [1, 4, 1, 4, 1, 64], strides = [1, 1, 1, 1, 1, 1]} : vector<1x4x2x4x2x64xf32> to vector<1x4x1x4x1x64xf32>
    %92 = vector.shape_cast %91 : vector<1x4x1x4x1x64xf32> to vector<1x4x4x64xf32>
    %93 = arith.maximumf %90, %92 : vector<1x4x4x64xf32>
    %94 = arith.maximumf %88, %93 : vector<1x4x4x64xf32>
    %95 = vector.extract_strided_slice %94 {offsets = [0, 0, 0, 0], sizes = [1, 4, 1, 64], strides = [1, 1, 1, 1]} : vector<1x4x4x64xf32> to vector<1x4x1x64xf32>
    %96 = vector.shape_cast %95 : vector<1x4x1x64xf32> to vector<1x4x64xf32>
    %97 = vector.extract_strided_slice %94 {offsets = [0, 0, 1, 0], sizes = [1, 4, 1, 64], strides = [1, 1, 1, 1]} : vector<1x4x4x64xf32> to vector<1x4x1x64xf32>
    %98 = vector.shape_cast %97 : vector<1x4x1x64xf32> to vector<1x4x64xf32>
    %99 = vector.extract_strided_slice %94 {offsets = [0, 0, 2, 0], sizes = [1, 4, 1, 64], strides = [1, 1, 1, 1]} : vector<1x4x4x64xf32> to vector<1x4x1x64xf32>
    %100 = vector.shape_cast %99 : vector<1x4x1x64xf32> to vector<1x4x64xf32>
    %101 = vector.extract_strided_slice %94 {offsets = [0, 0, 3, 0], sizes = [1, 4, 1, 64], strides = [1, 1, 1, 1]} : vector<1x4x4x64xf32> to vector<1x4x1x64xf32>
    %102 = vector.shape_cast %101 : vector<1x4x1x64xf32> to vector<1x4x64xf32>
    %103 = tpu.concatenate %96, %98, %100, %102 in 2 : vector<1x4x64xf32>, vector<1x4x64xf32>, vector<1x4x64xf32>, vector<1x4x64xf32> -> vector<1x4x256xf32>
    %104 = arith.truncf %103 : vector<1x4x256xf32> to vector<1x4x256xbf16>
    %c0_66 = arith.constant 0 : index
    %c0_67 = arith.constant 0 : index
    %c0_68 = arith.constant 0 : index
    %105 = vector.load %arg6[%c0_66, %c0_67, %c0_68] : memref<1x4x256xbf16, #tpu.memory_space<vmem>>, vector<1x4x256xbf16>
    tpu.vector_store %arg6[%c0_66, %c0_67, %c0_68], %104 {strides = array<i32>} : memref<1x4x256xbf16, #tpu.memory_space<vmem>>, vector<1x4x256xbf16>,
    return
  }
  func.func @transform_0(%arg0: i32) -> (i32, i32, i32, i32) {
    %c0_i32 = arith.constant 0 : i32
    %c0_i32_0 = arith.constant 0 : i32
    %c0_i32_1 = arith.constant 0 : i32
    %c0_i32_2 = arith.constant 0 : i32
    return %arg0, %c0_i32, %c0_i32_0, %c0_i32_1 : i32, i32, i32, i32
  }
  func.func @transform_1(%arg0: i32) -> (i32, i32, i32) {
    %c0_i32 = arith.constant 0 : i32
    %c0_i32_0 = arith.constant 0 : i32
    %c0_i32_1 = arith.constant 0 : i32
    %c0_i32_2 = arith.constant 0 : i32
    return %c0_i32, %c0_i32_0, %c0_i32_1 : i32, i32, i32
  }
  func.func @transform_2(%arg0: i32) -> (i32, i32) {
    %c0_i32 = arith.constant 0 : i32
    %c0_i32_0 = arith.constant 0 : i32
    %c0_i32_1 = arith.constant 0 : i32
    return %c0_i32, %c0_i32_0 : i32, i32
  }
  func.func @transform_3(%arg0: i32) -> (i32, i32, i32) {
    %c0_i32 = arith.constant 0 : i32
    %c0_i32_0 = arith.constant 0 : i32
    %c0_i32_1 = arith.constant 0 : i32
    %c0_i32_2 = arith.constant 0 : i32
    return %c0_i32, %c0_i32_0, %c0_i32_1 : i32, i32, i32
  }
  func.func @transform_4(%arg0: i32) -> (i32, i32) {
    %c0_i32 = arith.constant 0 : i32
    %c0_i32_0 = arith.constant 0 : i32
    %c0_i32_1 = arith.constant 0 : i32
    return %c0_i32, %c0_i32_0 : i32, i32
  }
  func.func @transform_5(%arg0: i32) -> (i32, i32, i32) {
    %c0_i32 = arith.constant 0 : i32
    %c0_i32_0 = arith.constant 0 : i32
    %c0_i32_1 = arith.constant 0 : i32
    return %arg0, %c0_i32, %c0_i32_0 : i32, i32, i32
  }
}

</mosaic_0001>

<llo_original>
// kernel: tpu_custom_call.1
$region0: #{tpu_custom_call.1}
  #allocation0 [shape = 'u32[]', space=smem, size = 0x4, offset = 0x4, fixed_abs, tag = 'smem constant byte address 0x4 - core index']
  #allocation1 [shape = 'u32[144,128]{1,0:T(1,128)}', space=vmem, size = 0x12000, scoped, tag = 'internal scratch']
  %s0 = inlined_call_operand.vmem [shape: bf16[2,18,18,6], index: 0, kind: input, shape index: {}]
  %s1 = inlined_call_operand.vmem [shape: bf16[3,18,32], index: 1, kind: input, shape index: {}]
  %s2 = inlined_call_operand.vmem [shape: f32[1,32], index: 2, kind: input, shape index: {}]
  %s3 = inlined_call_operand.vmem [shape: bf16[3,96,64], index: 3, kind: input, shape index: {}]
  %s4 = inlined_call_operand.vmem [shape: f32[1,64], index: 4, kind: input, shape index: {}]
  %s5 = inlined_call_operand.hbm [shape: bf16[2,4,256], index: 5, kind: output, shape index: {}]
  %s6 = sld [smem:[#allocation0]]
  $region53: #{tpu_custom_call.1} parent=0
    _
  %s8 = ssub.s32 1, %s6
  %s9 = scalar_select 0, %s8, %s6
  $region1: #{tpu_custom_call.1} parent=0
    #allocation2 [shape = 'u8[4096]{0}', space=vmem, size = 0x1000, scoped, tag = 'output window, operand 0']
    #allocation3 [shape = 's32[2]{0}', space=sflag, size = 0x8, scoped, tag = 'scoped memory for tpu_custom_call.1']
    %10 = vsyncpa [#allocation3], 0
    %s11 = scalar_lea.sflag [#allocation3], 1
    %12 = vsyncpa %s11, 0
    loop: start=0, step=1, limit=4
    $region2: #{tpu_custom_call.1} parent=1 // loop_pre_header
      _
    $region3: #{tpu_custom_call.1} parent=1 // loop_header
      %s14 = sphi 0, %s18
      %p15 = scmp.ge.s32.totalorder %s14, 4
      %s24 = sphi 0, %s26
      %s27 = sphi 0, %s24
      %s28 = sphi 0, %s27
      %s44 = sphi 0, %s28
      %s48 = sphi 0, %s48
      %s50 = sphi 0, %s48
      %s51 = sphi 0, %s50
      %s65 = sphi 0, %s51
      %s69 = sphi 0, %s69
      %s71 = sphi 0, %s69
      %s72 = sphi 0, %s71
      %s86 = sphi 0, %s72
      %s90 = sphi 0, %s90
      %s92 = sphi 0, %s90
      %s93 = sphi 0, %s92
      %s107 = sphi 0, %s93
      %s111 = sphi 0, %s111
      %s113 = sphi 0, %s111
      %s114 = sphi 0, %s113
      %s128 = sphi 0, %s114
      %s134 = sphi 0, %s136
      %s137 = sphi 0, %s134
      %s138 = sphi 0, %s137
      %s154 = sphi 0, %s138
    $region4: #{tpu_custom_call.1} parent=1 // loop_header_branch
      %17 = sbr.rel (%p15) target = $region8
    $region5: #{tpu_custom_call.1} parent=1 // loop_body
      %s19 = ssub.s32 %s14, 1
      %s20 = ssub.s32 %s14, 2
      %s21 = sadd.s32 %s14, 1
      %s22 = ssub.s32 %s14, %s21
      %p23 = scmp.eq.s32.totalorder %s22, 0
      %s25 = sadd.s32 %s24, 1
      %s26 = scalar_select %p23, %s24, %s25
      %p29 = pneg %p23
      %p30 = scmp.eq.s32.totalorder %s14, 1
      %p31 = por %p29, %p30
      %p32 = scmp.ne.s32.totalorder %s24, %s27
      %p33 = scmp.eq.s32.totalorder %s14, 0
      %p34 = por %p32, %p33
      %p35 = scmp.ne.s32.totalorder %s24, %s27
      %p36 = scmp.eq.s32.totalorder %s19, 1
      %p37 = por %p35, %p36
      %p38 = scmp.ne.s32.totalorder %s27, %s28
      %p39 = scmp.eq.s32.totalorder %s19, 0
      %p40 = por %p38, %p39
      %p41 = scmp.ne.s32.totalorder %s27, %s28
      %p42 = scmp.eq.s32.totalorder %s20, 1
      %p43 = por %p41, %p42
      %p45 = scmp.ne.s32.totalorder %s28, %s44
      %p46 = scmp.eq.s32.totalorder %s20, 0
      %p47 = por %p45, %p46
      %s49 = sadd.s32 %s48, 1
      %p52 = scmp.eq.s32.totalorder %s14, 1
      %p53 = scmp.ne.s32.totalorder %s48, %s50
      %p54 = scmp.eq.s32.totalorder %s14, 0
      %p55 = por %p53, %p54
      %p56 = scmp.ne.s32.totalorder %s48, %s50
      %p57 = scmp.eq.s32.totalorder %s19, 1
      %p58 = por %p56, %p57
      %p59 = scmp.ne.s32.totalorder %s50, %s51
      %p60 = scmp.eq.s32.totalorder %s19, 0
      %p61 = por %p59, %p60
      %p62 = scmp.ne.s32.totalorder %s50, %s51
      %p63 = scmp.eq.s32.totalorder %s20, 1
      %p64 = por %p62, %p63
      %p66 = scmp.ne.s32.totalorder %s51, %s65
      %p67 = scmp.eq.s32.totalorder %s20, 0
      %p68 = por %p66, %p67
      %s70 = sadd.s32 %s69, 1
      %p73 = scmp.eq.s32.totalorder %s14, 1
      %p74 = scmp.ne.s32.totalorder %s69, %s71
      %p75 = scmp.eq.s32.totalorder %s14, 0
      %p76 = por %p74, %p75
      %p77 = scmp.ne.s32.totalorder %s69, %s71
      %p78 = scmp.eq.s32.totalorder %s19, 1
      %p79 = por %p77, %p78
      %p80 = scmp.ne.s32.totalorder %s71, %s72
      %p81 = scmp.eq.s32.totalorder %s19, 0
      %p82 = por %p80, %p81
      %p83 = scmp.ne.s32.totalorder %s71, %s72
      %p84 = scmp.eq.s32.totalorder %s20, 1
      %p85 = por %p83, %p84
      %p87 = scmp.ne.s32.totalorder %s72, %s86
      %p88 = scmp.eq.s32.totalorder %s20, 0
      %p89 = por %p87, %p88
      %s91 = sadd.s32 %s90, 1
      %p94 = scmp.eq.s32.totalorder %s14, 1
      %p95 = scmp.ne.s32.totalorder %s90, %s92
      %p96 = scmp.eq.s32.totalorder %s14, 0
      %p97 = por %p95, %p96
      %p98 = scmp.ne.s32.totalorder %s90, %s92
      %p99 = scmp.eq.s32.totalorder %s19, 1
      %p100 = por %p98, %p99
      %p101 = scmp.ne.s32.totalorder %s92, %s93
      %p102 = scmp.eq.s32.totalorder %s19, 0
      %p103 = por %p101, %p102
      %p104 = scmp.ne.s32.totalorder %s92, %s93
      %p105 = scmp.eq.s32.totalorder %s20, 1
      %p106 = por %p104, %p105
      %p108 = scmp.ne.s32.totalorder %s93, %s107
      %p109 = scmp.eq.s32.totalorder %s20, 0
      %p110 = por %p108, %p109
      %s112 = sadd.s32 %s111, 1
      %p115 = scmp.eq.s32.totalorder %s14, 1
      %p116 = scmp.ne.s32.totalorder %s111, %s113
      %p117 = scmp.eq.s32.totalorder %s14, 0
      %p118 = por %p116, %p117
      %p119 = scmp.ne.s32.totalorder %s111, %s113
      %p120 = scmp.eq.s32.totalorder %s19, 1
      %p121 = por %p119, %p120
      %p122 = scmp.ne.s32.totalorder %s113, %s114
      %p123 = scmp.eq.s32.totalorder %s19, 0
      %p124 = por %p122, %p123
      %p125 = scmp.ne.s32.totalorder %s113, %s114
      %p126 = scmp.eq.s32.totalorder %s20, 1
      %p127 = por %p125, %p126
      %p129 = scmp.ne.s32.totalorder %s114, %s128
      %p130 = scmp.eq.s32.totalorder %s20, 0
      %p131 = por %p129, %p130
      %s132 = ssub.s32 %s14, %s21
      %p133 = scmp.eq.s32.totalorder %s132, 0
      %s135 = sadd.s32 %s134, 1
      %s136 = scalar_select %p133, %s134, %s135
      %p139 = pneg %p133
      %p140 = scmp.eq.s32.totalorder %s14, 1
      %p141 = por %p139, %p140
      %p142 = scmp.ne.s32.totalorder %s134, %s137
      %p143 = scmp.eq.s32.totalorder %s14, 0
      %p144 = por %p142, %p143
      %p145 = scmp.ne.s32.totalorder %s134, %s137
      %p146 = scmp.eq.s32.totalorder %s19, 1
      %p147 = por %p145, %p146
      %p148 = scmp.ne.s32.totalorder %s137, %s138
      %p149 = scmp.eq.s32.totalorder %s19, 0
      %p150 = por %p148, %p149
      %p151 = scmp.ne.s32.totalorder %s137, %s138
      %p152 = scmp.eq.s32.totalorder %s20, 1
      %p153 = por %p151, %p152
      %p155 = scmp.ne.s32.totalorder %s138, %s154
      %p156 = scmp.eq.s32.totalorder %s20, 0
      %p157 = por %p155, %p156
      %p158 = scmp.le.s32.totalorder 1, %s14
      %p159 = scmp.lt.s32.totalorder %s14, 3
      %p160 = pnand %p158, %p159
      %p161 = pneg %p160
      // Predicated region
      $region9: #{tpu_custom_call.1} parent=5 // pred_check
        _
      $region10: #{tpu_custom_call.1} parent=5 // pred_check_branch
        %163 = sbr.rel (%p160) target = $region12
      $region11: #{tpu_custom_call.1} parent=5 // pred_region
        %s164 = ssub.s32 %s14, 1
        // Predicated region
        $region13: #{tpu_custom_call.1} parent=11 // pred_check
          %p165 = pneg %p61
        $region14: #{tpu_custom_call.1} parent=11 // pred_check_branch
          %167 = sbr.rel (%p165) target = $region16
        $region15: #{tpu_custom_call.1} parent=11 // pred_region
          _
        $region16: #{tpu_custom_call.1} parent=11 // pred_fallthru
          _
        // Predicated region
        $region17: #{tpu_custom_call.1} parent=11 // pred_check
          %p168 = pneg %p82
        $region18: #{tpu_custom_call.1} parent=11 // pred_check_branch
          %170 = sbr.rel (%p168) target = $region20
        $region19: #{tpu_custom_call.1} parent=11 // pred_region
          _
        $region20: #{tpu_custom_call.1} parent=11 // pred_fallthru
          _
        // Predicated region
        $region21: #{tpu_custom_call.1} parent=11 // pred_check
          %p171 = pneg %p103
        $region22: #{tpu_custom_call.1} parent=11 // pred_check_branch
          %173 = sbr.rel (%p171) target = $region24
        $region23: #{tpu_custom_call.1} parent=11 // pred_region
          _
        $region24: #{tpu_custom_call.1} parent=11 // pred_fallthru
          _
        // Predicated region
        $region25: #{tpu_custom_call.1} parent=11 // pred_check
          %p174 = pneg %p124
        $region26: #{tpu_custom_call.1} parent=11 // pred_check_branch
          %176 = sbr.rel (%p174) target = $region28
        $region27: #{tpu_custom_call.1} parent=11 // pred_region
          _
        $region28: #{tpu_custom_call.1} parent=11 // pred_fallthru
          _
      $region12: #{tpu_custom_call.1} parent=5 // pred_fallthru
        _
      %p177 = scmp.lt.s32.totalorder %s14, 2
      // Predicated region
      $region29: #{tpu_custom_call.1} parent=5 // pred_check
        %p178 = pneg %p177
      $region30: #{tpu_custom_call.1} parent=5 // pred_check_branch
        %180 = sbr.rel (%p178) target = $region32
      $region31: #{tpu_custom_call.1} parent=5 // pred_region
        // Predicated region
        $region33: #{tpu_custom_call.1} parent=31 // pred_check
          %p181 = pneg %p34
        $region34: #{tpu_custom_call.1} parent=31 // pred_check_branch
          %183 = sbr.rel (%p181) target = $region36
        $region35: #{tpu_custom_call.1} parent=31 // pred_region
          %p184 = scmp.lt.s32.totalorder %s14, 1
          %s185 = scalar_select %p184, %s14, 1
          %s186 = smul.addr %s185, 54
          %s187 = smul.addr %s186, 4
          %s188 = scalar_lea.vmem %s0, %s187
        $region36: #{tpu_custom_call.1} parent=31 // pred_fallthru
          _
      $region32: #{tpu_custom_call.1} parent=5 // pred_fallthru
        _
      %p189 = scmp.le.s32.totalorder 1, %s14
      %p190 = scmp.lt.s32.totalorder %s14, 3
      %p191 = pnand %p189, %p190
      %p192 = pneg %p191
      // Predicated region
      $region37: #{tpu_custom_call.1} parent=5 // pred_check
        _
      $region38: #{tpu_custom_call.1} parent=5 // pred_check_branch
        %194 = sbr.rel (%p191) target = $region40
      $region39: #{tpu_custom_call.1} parent=5 // pred_region
        %s195 = ssub.s32 %s14, 1
        %p196 = scmp.lt.s32.totalorder %s19, 1
        %s197 = scalar_select %p196, %s19, 1
        %s198 = smul.addr %s197, 54
        %s199 = smul.addr %s198, 4
        %s200 = scalar_lea.vmem %s0, %s199
        %p201 = pneg %p40
        %p202 = pneg %p37
        %p203 = pneg %p61
        %p204 = pneg %p58
        %p205 = pneg %p82
        %p206 = pneg %p79
        %p207 = pneg %p103
        %p208 = pneg %p100
        %p209 = pneg %p124
        %p210 = pneg %p121
        %p211 = pneg %p150
        %p212 = pneg %p147
        %s213 = sand.u32 %s137, 1
        %s214 = scalar_lea.sflag [#allocation3], %s213
        %s215 = sand.u32 %s137, 1
        %s216 = smul.addr %s215, 4
        %s217 = scalar_lea.vmem [#allocation2], %s216
        %p218 = scmp.lt.s32.totalorder %s19, 1
        %s219 = scalar_select %p218, %s19, 1
        %s220 = smul.addr %s219, 54
        %s221 = smul.addr %s220, 4
        %s222 = scalar_lea.vmem %s0, %s221
        %v224 = vld [vmem:[%s222] sm:$0xf]
        %v225 = vld [vmem:[%s222 + $0x4] sm:$0xf]
        %v226 = vld [vmem:[%s222 + $0xc] sm:$0xf]
        %v227 = vld [vmem:[%s222 + $0x10] sm:$0xf]
        %v228 = vld [vmem:[%s222 + $0x18] sm:$0xf]
        %v229 = vld [vmem:[%s222 + $0x1c] sm:$0xf]
        %v230 = vld [vmem:[%s222 + $0x24] sm:$0xf]
        %v231 = vld [vmem:[%s222 + $0x28] sm:$0xf]
        %v232 = vld [vmem:[%s222 + $0x30] sm:$0xf]
        %v233 = vld [vmem:[%s222 + $0x34] sm:$0xf]
        %v234 = vld [vmem:[%s222 + $0x3c] sm:$0xf]
        %v235 = vld [vmem:[%s222 + $0x40] sm:$0xf]
        %v236 = vld [vmem:[%s222 + $0x48] sm:$0xf]
        %v237 = vld [vmem:[%s222 + $0x4c] sm:$0xf]
        %v238 = vld [vmem:[%s222 + $0x54] sm:$0xf]
        %v239 = vld [vmem:[%s222 + $0x58] sm:$0xf]
        %v240 = vld [vmem:[%s222 + $0x60] sm:$0xf]
        %v241 = vld [vmem:[%s222 + $0x64] sm:$0xf]
        %v242 = vld [vmem:[%s222 + $0x6c] sm:$0xf]
        %v243 = vld [vmem:[%s222 + $0x70] sm:$0xf]
        %v244 = vld [vmem:[%s222 + $0x78] sm:$0xf]
        %v245 = vld [vmem:[%s222 + $0x7c] sm:$0xf]
        %v246 = vld [vmem:[%s222 + $0x84] sm:$0xf]
        %v247 = vld [vmem:[%s222 + $0x88] sm:$0xf]
        %v248 = vld [vmem:[%s222 + $0x90] sm:$0xf]
        %v249 = vld [vmem:[%s222 + $0x94] sm:$0xf]
        %v250 = vld [vmem:[%s222 + $0x9c] sm:$0xf]
        %v251 = vld [vmem:[%s222 + $0xa0] sm:$0xf]
        %v252 = vld [vmem:[%s222 + $0xa8] sm:$0xf]
        %v253 = vld [vmem:[%s222 + $0xac] sm:$0xf]
        %v254 = vld [vmem:[%s222 + $0xb4] sm:$0xf]
        %v255 = vld [vmem:[%s222 + $0xb8] sm:$0xf]
        %v256 = vld [vmem:[%s222 + $0x8] sm:$0x1]
        %v257 = vld [vmem:[%s222 + $0x14] sm:$0x1]
        %v258 = vld [vmem:[%s222 + $0x20] sm:$0x1]
        %v259 = vld [vmem:[%s222 + $0x2c] sm:$0x1]
        %v260 = vld [vmem:[%s222 + $0x38] sm:$0x1]
        %v261 = vld [vmem:[%s222 + $0x44] sm:$0x1]
        %v262 = vld [vmem:[%s222 + $0x50] sm:$0x1]
        %v263 = vld [vmem:[%s222 + $0x5c] sm:$0x1]
        %v264 = vld [vmem:[%s222 + $0x68] sm:$0x1]
        %v265 = vld [vmem:[%s222 + $0x74] sm:$0x1]
        %v266 = vld [vmem:[%s222 + $0x80] sm:$0x1]
        %v267 = vld [vmem:[%s222 + $0x8c] sm:$0x1]
        %v268 = vld [vmem:[%s222 + $0x98] sm:$0x1]
        %v269 = vld [vmem:[%s222 + $0xa4] sm:$0x1]
        %v270 = vld [vmem:[%s222 + $0xb0] sm:$0x1]
        %v271 = vld [vmem:[%s222 + $0xbc] sm:$0x1]
        %v272 = vld [vmem:[%s222] sm:$0xe]
        %v273 = vld [vmem:[%s222 + $0xc] sm:$0xe]
        %v274 = vld [vmem:[%s222 + $0x18] sm:$0xe]
        %v275 = vld [vmem:[%s222 + $0x24] sm:$0xe]
        %v276 = vld [vmem:[%s222 + $0x30] sm:$0xe]
        %v277 = vld [vmem:[%s222 + $0x3c] sm:$0xe]
        %v278 = vld [vmem:[%s222 + $0x48] sm:$0xe]
        %v279 = vld [vmem:[%s222 + $0x54] sm:$0xe]
        %v280 = vld [vmem:[%s222 + $0x60] sm:$0xe]
        %v281 = vld [vmem:[%s222 + $0x6c] sm:$0xe]
        %v282 = vld [vmem:[%s222 + $0x78] sm:$0xe]
        %v283 = vld [vmem:[%s222 + $0x84] sm:$0xe]
        %v284 = vld [vmem:[%s222 + $0x90] sm:$0xe]
        %v285 = vld [vmem:[%s222 + $0x9c] sm:$0xe]
        %v286 = vld [vmem:[%s222 + $0xa8] sm:$0xe]
        %v287 = vld [vmem:[%s222 + $0xb4] sm:$0xe]
        %v320 = vunpack.c.l.b16 %v224
        %v321 = vunpack.c.l.b16 %v225
        %v322 = vunpack.c.l.b16 %v226
        %v323 = vunpack.c.l.b16 %v227
        %v324 = vunpack.c.l.b16 %v228
        %v325 = vunpack.c.l.b16 %v229
        %v326 = vunpack.c.l.b16 %v230
        %v327 = vunpack.c.l.b16 %v231
        %v328 = vunpack.c.l.b16 %v232
        %v329 = vunpack.c.l.b16 %v233
        %v330 = vunpack.c.l.b16 %v234
        %v331 = vunpack.c.l.b16 %v235
        %v332 = vunpack.c.l.b16 %v236
        %v333 = vunpack.c.l.b16 %v237
        %v334 = vunpack.c.l.b16 %v238
        %v335 = vunpack.c.l.b16 %v239
        %v336 = vunpack.c.l.b16 %v240
        %v337 = vunpack.c.l.b16 %v241
        %v338 = vunpack.c.l.b16 %v242
        %v339 = vunpack.c.l.b16 %v243
        %v340 = vunpack.c.l.b16 %v244
        %v341 = vunpack.c.l.b16 %v245
        %v342 = vunpack.c.l.b16 %v246
        %v343 = vunpack.c.l.b16 %v247
        %v344 = vunpack.c.l.b16 %v248
        %v345 = vunpack.c.l.b16 %v249
        %v346 = vunpack.c.l.b16 %v250
        %v347 = vunpack.c.l.b16 %v251
        %v348 = vunpack.c.l.b16 %v252
        %v349 = vunpack.c.l.b16 %v253
        %v350 = vunpack.c.l.b16 %v254
        %v351 = vunpack.c.l.b16 %v255
        %v352 = vpack.c.b16 %v321, %v320
        %v353 = vpack.c.b16 %v323, %v322
        %v354 = vpack.c.b16 %v325, %v324
        %v355 = vpack.c.b16 %v327, %v326
        %v356 = vpack.c.b16 %v329, %v328
        %v357 = vpack.c.b16 %v331, %v330
        %v358 = vpack.c.b16 %v333, %v332
        %v359 = vpack.c.b16 %v335, %v334
        %v360 = vpack.c.b16 %v337, %v336
        %v361 = vpack.c.b16 %v339, %v338
        %v362 = vpack.c.b16 %v341, %v340
        %v363 = vpack.c.b16 %v343, %v342
        %v364 = vpack.c.b16 %v345, %v344
        %v365 = vpack.c.b16 %v347, %v346
        %v366 = vpack.c.b16 %v349, %v348
        %v367 = vpack.c.b16 %v351, %v350
        %v384 = vunpack.c.l.b16 %v256
        %v385 = vunpack.c.l.b16 %v257
        %v386 = vunpack.c.l.b16 %v258
        %v387 = vunpack.c.l.b16 %v259
        %v388 = vunpack.c.l.b16 %v260
        %v389 = vunpack.c.l.b16 %v261
        %v390 = vunpack.c.l.b16 %v262
        %v391 = vunpack.c.l.b16 %v263
        %v392 = vunpack.c.l.b16 %v264
        %v393 = vunpack.c.l.b16 %v265
        %v394 = vunpack.c.l.b16 %v266
        %v395 = vunpack.c.l.b16 %v267
        %v396 = vunpack.c.l.b16 %v268
        %v397 = vunpack.c.l.b16 %v269
        %v398 = vunpack.c.l.b16 %v270
        %v399 = vunpack.c.l.b16 %v271
        %v400 = vpack.c.b16 %v384, %v384
        %v401 = vpack.c.b16 %v385, %v385
        %v402 = vpack.c.b16 %v386, %v386
        %v403 = vpack.c.b16 %v387, %v387
        %v404 = vpack.c.b16 %v388, %v388
        %v405 = vpack.c.b16 %v389, %v389
        %v406 = vpack.c.b16 %v390, %v390
        %v407 = vpack.c.b16 %v391, %v391
        %v408 = vpack.c.b16 %v392, %v392
        %v409 = vpack.c.b16 %v393, %v393
        %v410 = vpack.c.b16 %v394, %v394
        %v411 = vpack.c.b16 %v395, %v395
        %v412 = vpack.c.b16 %v396, %v396
        %v413 = vpack.c.b16 %v397, %v397
        %v414 = vpack.c.b16 %v398, %v398
        %v415 = vpack.c.b16 %v399, %v399
        %vm416 = vsmask.f32 7424
        %v418 = vshrl.u32 %v352, 16
        %v420 = vshll.u32 %v352, 16
        %v422 = vrot.slane %v420, 1
        %v423 = vor.u32 %v418, %v422
        %v425 = vshll.u32 %v400, 16
        %v427 = vrot.slane %v425, 1
        %v428 = vsel %vm416, %v423, %v427
        %v430 = vshrl.u32 %v353, 16
        %v432 = vshll.u32 %v353, 16
        %v434 = vrot.slane %v432, 1
        %v435 = vor.u32 %v430, %v434
        %v437 = vshll.u32 %v401, 16
        %v439 = vrot.slane %v437, 1
        %v440 = vsel %vm416, %v435, %v439
        %v442 = vshrl.u32 %v354, 16
        %v444 = vshll.u32 %v354, 16
        %v446 = vrot.slane %v444, 1
        %v447 = vor.u32 %v442, %v446
        %v449 = vshll.u32 %v402, 16
        %v451 = vrot.slane %v449, 1
        %v452 = vsel %vm416, %v447, %v451
        %v454 = vshrl.u32 %v355, 16
        %v456 = vshll.u32 %v355, 16
        %v458 = vrot.slane %v456, 1
        %v459 = vor.u32 %v454, %v458
        %v461 = vshll.u32 %v403, 16
        %v463 = vrot.slane %v461, 1
        %v464 = vsel %vm416, %v459, %v463
        %v466 = vshrl.u32 %v356, 16
        %v468 = vshll.u32 %v356, 16
        %v470 = vrot.slane %v468, 1
        %v471 = vor.u32 %v466, %v470
        %v473 = vshll.u32 %v404, 16
        %v475 = vrot.slane %v473, 1
        %v476 = vsel %vm416, %v471, %v475
        %v478 = vshrl.u32 %v357, 16
        %v480 = vshll.u32 %v357, 16
        %v482 = vrot.slane %v480, 1
        %v483 = vor.u32 %v478, %v482
        %v485 = vshll.u32 %v405, 16
        %v487 = vrot.slane %v485, 1
        %v488 = vsel %vm416, %v483, %v487
        %v490 = vshrl.u32 %v358, 16
        %v492 = vshll.u32 %v358, 16
        %v494 = vrot.slane %v492, 1
        %v495 = vor.u32 %v490, %v494
        %v497 = vshll.u32 %v406, 16
        %v499 = vrot.slane %v497, 1
        %v500 = vsel %vm416, %v495, %v499
        %v502 = vshrl.u32 %v359, 16
        %v504 = vshll.u32 %v359, 16
        %v506 = vrot.slane %v504, 1
        %v507 = vor.u32 %v502, %v506
        %v509 = vshll.u32 %v407, 16
        %v511 = vrot.slane %v509, 1
        %v512 = vsel %vm416, %v507, %v511
        %v514 = vshrl.u32 %v360, 16
        %v516 = vshll.u32 %v360, 16
        %v518 = vrot.slane %v516, 1
        %v519 = vor.u32 %v514, %v518
        %v521 = vshll.u32 %v408, 16
        %v523 = vrot.slane %v521, 1
        %v524 = vsel %vm416, %v519, %v523
        %v526 = vshrl.u32 %v361, 16
        %v528 = vshll.u32 %v361, 16
        %v530 = vrot.slane %v528, 1
        %v531 = vor.u32 %v526, %v530
        %v533 = vshll.u32 %v409, 16
        %v535 = vrot.slane %v533, 1
        %v536 = vsel %vm416, %v531, %v535
        %v538 = vshrl.u32 %v362, 16
        %v540 = vshll.u32 %v362, 16
        %v542 = vrot.slane %v540, 1
        %v543 = vor.u32 %v538, %v542
        %v545 = vshll.u32 %v410, 16
        %v547 = vrot.slane %v545, 1
        %v548 = vsel %vm416, %v543, %v547
        %v550 = vshrl.u32 %v363, 16
        %v552 = vshll.u32 %v363, 16
        %v554 = vrot.slane %v552, 1
        %v555 = vor.u32 %v550, %v554
        %v557 = vshll.u32 %v411, 16
        %v559 = vrot.slane %v557, 1
        %v560 = vsel %vm416, %v555, %v559
        %v562 = vshrl.u32 %v364, 16
        %v564 = vshll.u32 %v364, 16
        %v566 = vrot.slane %v564, 1
        %v567 = vor.u32 %v562, %v566
        %v569 = vshll.u32 %v412, 16
        %v571 = vrot.slane %v569, 1
        %v572 = vsel %vm416, %v567, %v571
        %v574 = vshrl.u32 %v365, 16
        %v576 = vshll.u32 %v365, 16
        %v578 = vrot.slane %v576, 1
        %v579 = vor.u32 %v574, %v578
        %v581 = vshll.u32 %v413, 16
        %v583 = vrot.slane %v581, 1
        %v584 = vsel %vm416, %v579, %v583
        %v586 = vshrl.u32 %v366, 16
        %v588 = vshll.u32 %v366, 16
        %v590 = vrot.slane %v588, 1
        %v591 = vor.u32 %v586, %v590
        %v593 = vshll.u32 %v414, 16
        %v595 = vrot.slane %v593, 1
        %v596 = vsel %vm416, %v591, %v595
        %v598 = vshrl.u32 %v367, 16
        %v600 = vshll.u32 %v367, 16
        %v602 = vrot.slane %v600, 1
        %v603 = vor.u32 %v598, %v602
        %v605 = vshll.u32 %v415, 16
        %v607 = vrot.slane %v605, 1
        %v608 = vsel %vm416, %v603, %v607
        %609 = vrot.lane.b32.xlu0 %v428, 6
        %v610 = vpop.permute.xlu0 %609
        %611 = vrot.lane.b32.xlu0 %v440, 6
        %v612 = vpop.permute.xlu0 %611
        %613 = vrot.lane.b32.xlu0 %v452, 6
        %v614 = vpop.permute.xlu0 %613
        %615 = vrot.lane.b32.xlu0 %v464, 6
        %v616 = vpop.permute.xlu0 %615
        %617 = vrot.lane.b32.xlu0 %v476, 6
        %v618 = vpop.permute.xlu0 %617
        %619 = vrot.lane.b32.xlu0 %v488, 6
        %v620 = vpop.permute.xlu0 %619
        %621 = vrot.lane.b32.xlu0 %v500, 6
        %v622 = vpop.permute.xlu0 %621
        %623 = vrot.lane.b32.xlu0 %v512, 6
        %v624 = vpop.permute.xlu0 %623
        %625 = vrot.lane.b32.xlu0 %v524, 6
        %v626 = vpop.permute.xlu0 %625
        %627 = vrot.lane.b32.xlu0 %v536, 6
        %v628 = vpop.permute.xlu0 %627
        %629 = vrot.lane.b32.xlu0 %v548, 6
        %v630 = vpop.permute.xlu0 %629
        %631 = vrot.lane.b32.xlu0 %v560, 6
        %v632 = vpop.permute.xlu0 %631
        %633 = vrot.lane.b32.xlu0 %v572, 6
        %v634 = vpop.permute.xlu0 %633
        %635 = vrot.lane.b32.xlu0 %v584, 6
        %v636 = vpop.permute.xlu0 %635
        %637 = vrot.lane.b32.xlu0 %v596, 6
        %v638 = vpop.permute.xlu0 %637
        %639 = vrot.lane.b32.xlu0 %v608, 6
        %v640 = vpop.permute.xlu0 %639
        %v657 = vunpack.c.l.b16 %v272
        %v658 = vunpack.c.l.b16 %v273
        %v659 = vunpack.c.l.b16 %v274
        %v660 = vunpack.c.l.b16 %v275
        %v661 = vunpack.c.l.b16 %v276
        %v662 = vunpack.c.l.b16 %v277
        %v663 = vunpack.c.l.b16 %v278
        %v664 = vunpack.c.l.b16 %v279
        %v665 = vunpack.c.l.b16 %v280
        %v666 = vunpack.c.l.b16 %v281
        %v667 = vunpack.c.l.b16 %v282
        %v668 = vunpack.c.l.b16 %v283
        %v669 = vunpack.c.l.b16 %v284
        %v670 = vunpack.c.l.b16 %v285
        %v671 = vunpack.c.l.b16 %v286
        %v672 = vunpack.c.l.b16 %v287
        %v673 = vpack.c.b16 %v321, %v657
        %v674 = vpack.c.b16 %v323, %v658
        %v675 = vpack.c.b16 %v325, %v659
        %v676 = vpack.c.b16 %v327, %v660
        %v677 = vpack.c.b16 %v329, %v661
        %v678 = vpack.c.b16 %v331, %v662
        %v679 = vpack.c.b16 %v333, %v663
        %v680 = vpack.c.b16 %v335, %v664
        %v681 = vpack.c.b16 %v337, %v665
        %v682 = vpack.c.b16 %v339, %v666
        %v683 = vpack.c.b16 %v341, %v667
        %v684 = vpack.c.b16 %v343, %v668
        %v685 = vpack.c.b16 %v345, %v669
        %v686 = vpack.c.b16 %v347, %v670
        %v687 = vpack.c.b16 %v349, %v671
        %v688 = vpack.c.b16 %v351, %v672
        %vm689 = vcmask 1046528
        %v690 = vrot.slane %v673, 1
        %v691 = vrot.slane %v400, 1
        %v692 = vsel %vm689, %v690, %v691
        %v693 = vrot.slane %v674, 1
        %v694 = vrot.slane %v401, 1
        %v695 = vsel %vm689, %v693, %v694
        %v696 = vrot.slane %v675, 1
        %v697 = vrot.slane %v402, 1
        %v698 = vsel %vm689, %v696, %v697
        %v699 = vrot.slane %v676, 1
        %v700 = vrot.slane %v403, 1
        %v701 = vsel %vm689, %v699, %v700
        %v702 = vrot.slane %v677, 1
        %v703 = vrot.slane %v404, 1
        %v704 = vsel %vm689, %v702, %v703
        %v705 = vrot.slane %v678, 1
        %v706 = vrot.slane %v405, 1
        %v707 = vsel %vm689, %v705, %v706
        %v708 = vrot.slane %v679, 1
        %v709 = vrot.slane %v406, 1
        %v710 = vsel %vm689, %v708, %v709
        %v711 = vrot.slane %v680, 1
        %v712 = vrot.slane %v407, 1
        %v713 = vsel %vm689, %v711, %v712
        %v714 = vrot.slane %v681, 1
        %v715 = vrot.slane %v408, 1
        %v716 = vsel %vm689, %v714, %v715
        %v717 = vrot.slane %v682, 1
        %v718 = vrot.slane %v409, 1
        %v719 = vsel %vm689, %v717, %v718
        %v720 = vrot.slane %v683, 1
        %v721 = vrot.slane %v410, 1
        %v722 = vsel %vm689, %v720, %v721
        %v723 = vrot.slane %v684, 1
        %v724 = vrot.slane %v411, 1
        %v725 = vsel %vm689, %v723, %v724
        %v726 = vrot.slane %v685, 1
        %v727 = vrot.slane %v412, 1
        %v728 = vsel %vm689, %v726, %v727
        %v729 = vrot.slane %v686, 1
        %v730 = vrot.slane %v413, 1
        %v731 = vsel %vm689, %v729, %v730
        %v732 = vrot.slane %v687, 1
        %v733 = vrot.slane %v414, 1
        %v734 = vsel %vm689, %v732, %v733
        %v735 = vrot.slane %v688, 1
        %v736 = vrot.slane %v415, 1
        %v737 = vsel %vm689, %v735, %v736
        %738 = vrot.lane.b32.xlu0 %v692, 12
        %v739 = vpop.permute.xlu0 %738
        %740 = vrot.lane.b32.xlu0 %v695, 12
        %v741 = vpop.permute.xlu0 %740
        %742 = vrot.lane.b32.xlu0 %v698, 12
        %v743 = vpop.permute.xlu0 %742
        %744 = vrot.lane.b32.xlu0 %v701, 12
        %v745 = vpop.permute.xlu0 %744
        %746 = vrot.lane.b32.xlu0 %v704, 12
        %v747 = vpop.permute.xlu0 %746
        %748 = vrot.lane.b32.xlu0 %v707, 12
        %v749 = vpop.permute.xlu0 %748
        %750 = vrot.lane.b32.xlu0 %v710, 12
        %v751 = vpop.permute.xlu0 %750
        %752 = vrot.lane.b32.xlu0 %v713, 12
        %v753 = vpop.permute.xlu0 %752
        %754 = vrot.lane.b32.xlu0 %v716, 12
        %v755 = vpop.permute.xlu0 %754
        %756 = vrot.lane.b32.xlu0 %v719, 12
        %v757 = vpop.permute.xlu0 %756
        %758 = vrot.lane.b32.xlu0 %v722, 12
        %v759 = vpop.permute.xlu0 %758
        %760 = vrot.lane.b32.xlu0 %v725, 12
        %v761 = vpop.permute.xlu0 %760
        %762 = vrot.lane.b32.xlu0 %v728, 12
        %v763 = vpop.permute.xlu0 %762
        %764 = vrot.lane.b32.xlu0 %v731, 12
        %v765 = vpop.permute.xlu0 %764
        %766 = vrot.lane.b32.xlu0 %v734, 12
        %v767 = vpop.permute.xlu0 %766
        %768 = vrot.lane.b32.xlu0 %v737, 12
        %v769 = vpop.permute.xlu0 %768
        %vm770 = vcmask 48128
        %v772 = vsel %vm770, %v352, %v610
        %v774 = vsel %vm770, %v353, %v612
        %v776 = vsel %vm770, %v354, %v614
        %v778 = vsel %vm770, %v355, %v616
        %v780 = vsel %vm770, %v356, %v618
        %v782 = vsel %vm770, %v357, %v620
        %v784 = vsel %vm770, %v358, %v622
        %v786 = vsel %vm770, %v359, %v624
        %v788 = vsel %vm770, %v360, %v626
        %v790 = vsel %vm770, %v361, %v628
        %v792 = vsel %vm770, %v362, %v630
        %v794 = vsel %vm770, %v363, %v632
        %v796 = vsel %vm770, %v364, %v634
        %v798 = vsel %vm770, %v365, %v636
        %v800 = vsel %vm770, %v366, %v638
        %v802 = vsel %vm770, %v367, %v640
        %vm803 = vcmask 97280
        %v805 = vsel %vm803, %v772, %v739
        %v807 = vsel %vm803, %v774, %v741
        %v809 = vsel %vm803, %v776, %v743
        %v811 = vsel %vm803, %v778, %v745
        %v813 = vsel %vm803, %v780, %v747
        %v815 = vsel %vm803, %v782, %v749
        %v817 = vsel %vm803, %v784, %v751
        %v819 = vsel %vm803, %v786, %v753
        %v821 = vsel %vm803, %v788, %v755
        %v823 = vsel %vm803, %v790, %v757
        %v825 = vsel %vm803, %v792, %v759
        %v827 = vsel %vm803, %v794, %v761
        %v829 = vsel %vm803, %v796, %v763
        %v831 = vsel %vm803, %v798, %v765
        %v833 = vsel %vm803, %v800, %v767
        %v835 = vsel %vm803, %v802, %v769
        %v836 = vld [vmem:[%s1] sm:$0xf]
        %v837 = vld [vmem:[%s1 + $0x4] sm:$0xf]
        %v838 = vld [vmem:[%s1 + $0x8] sm:$0x1]
        %s839 = scalar_lea.vmem %s222, 12
        %v840 = vld [vmem:[%s839] sm:$0xf]
        %v841 = vld [vmem:[%s839 + $0x4] sm:$0xf]
        %v842 = vld [vmem:[%s839 + $0xc] sm:$0xf]
        %v843 = vld [vmem:[%s839 + $0x10] sm:$0xf]
        %v844 = vld [vmem:[%s839 + $0x18] sm:$0xf]
        %v845 = vld [vmem:[%s839 + $0x1c] sm:$0xf]
        %v846 = vld [vmem:[%s839 + $0x24] sm:$0xf]
        %v847 = vld [vmem:[%s839 + $0x28] sm:$0xf]
        %v848 = vld [vmem:[%s839 + $0x30] sm:$0xf]
        %v849 = vld [vmem:[%s839 + $0x34] sm:$0xf]
        %v850 = vld [vmem:[%s839 + $0x3c] sm:$0xf]
        %v851 = vld [vmem:[%s839 + $0x40] sm:$0xf]
        %v852 = vld [vmem:[%s839 + $0x48] sm:$0xf]
        %v853 = vld [vmem:[%s839 + $0x4c] sm:$0xf]
        %v854 = vld [vmem:[%s839 + $0x54] sm:$0xf]
        %v855 = vld [vmem:[%s839 + $0x58] sm:$0xf]
        %v856 = vld [vmem:[%s839 + $0x60] sm:$0xf]
        %v857 = vld [vmem:[%s839 + $0x64] sm:$0xf]
        %v858 = vld [vmem:[%s839 + $0x6c] sm:$0xf]
        %v859 = vld [vmem:[%s839 + $0x70] sm:$0xf]
        %v860 = vld [vmem:[%s839 + $0x78] sm:$0xf]
        %v861 = vld [vmem:[%s839 + $0x7c] sm:$0xf]
        %v862 = vld [vmem:[%s839 + $0x84] sm:$0xf]
        %v863 = vld [vmem:[%s839 + $0x88] sm:$0xf]
        %v864 = vld [vmem:[%s839 + $0x90] sm:$0xf]
        %v865 = vld [vmem:[%s839 + $0x94] sm:$0xf]
        %v866 = vld [vmem:[%s839 + $0x9c] sm:$0xf]
        %v867 = vld [vmem:[%s839 + $0xa0] sm:$0xf]
        %v868 = vld [vmem:[%s839 + $0xa8] sm:$0xf]
        %v869 = vld [vmem:[%s839 + $0xac] sm:$0xf]
        %v870 = vld [vmem:[%s839 + $0xb4] sm:$0xf]
        %v871 = vld [vmem:[%s839 + $0xb8] sm:$0xf]
        %v872 = vld [vmem:[%s839 + $0x8] sm:$0x1]
        %v873 = vld [vmem:[%s839 + $0x14] sm:$0x1]
        %v874 = vld [vmem:[%s839 + $0x20] sm:$0x1]
        %v875 = vld [vmem:[%s839 + $0x2c] sm:$0x1]
        %v876 = vld [vmem:[%s839 + $0x38] sm:$0x1]
        %v877 = vld [vmem:[%s839 + $0x44] sm:$0x1]
        %v878 = vld [vmem:[%s839 + $0x50] sm:$0x1]
        %v879 = vld [vmem:[%s839 + $0x5c] sm:$0x1]
        %v880 = vld [vmem:[%s839 + $0x68] sm:$0x1]
        %v881 = vld [vmem:[%s839 + $0x74] sm:$0x1]
        %v882 = vld [vmem:[%s839 + $0x80] sm:$0x1]
        %v883 = vld [vmem:[%s839 + $0x8c] sm:$0x1]
        %v884 = vld [vmem:[%s839 + $0x98] sm:$0x1]
        %v885 = vld [vmem:[%s839 + $0xa4] sm:$0x1]
        %v886 = vld [vmem:[%s839 + $0xb0] sm:$0x1]
        %v887 = vld [vmem:[%s839 + $0xbc] sm:$0x1]
        %v888 = vld [vmem:[%s839] sm:$0xe]
        %v889 = vld [vmem:[%s839 + $0xc] sm:$0xe]
        %v890 = vld [vmem:[%s839 + $0x18] sm:$0xe]
        %v891 = vld [vmem:[%s839 + $0x24] sm:$0xe]
        %v892 = vld [vmem:[%s839 + $0x30] sm:$0xe]
        %v893 = vld [vmem:[%s839 + $0x3c] sm:$0xe]
        %v894 = vld [vmem:[%s839 + $0x48] sm:$0xe]
        %v895 = vld [vmem:[%s839 + $0x54] sm:$0xe]
        %v896 = vld [vmem:[%s839 + $0x60] sm:$0xe]
        %v897 = vld [vmem:[%s839 + $0x6c] sm:$0xe]
        %v898 = vld [vmem:[%s839 + $0x78] sm:$0xe]
        %v899 = vld [vmem:[%s839 + $0x84] sm:$0xe]
        %v900 = vld [vmem:[%s839 + $0x90] sm:$0xe]
        %v901 = vld [vmem:[%s839 + $0x9c] sm:$0xe]
        %v902 = vld [vmem:[%s839 + $0xa8] sm:$0xe]
        %v903 = vld [vmem:[%s839 + $0xb4] sm:$0xe]
        %v936 = vunpack.c.l.b16 %v840
        %v937 = vunpack.c.l.b16 %v841
        %v938 = vunpack.c.l.b16 %v842
        %v939 = vunpack.c.l.b16 %v843
        %v940 = vunpack.c.l.b16 %v844
        %v941 = vunpack.c.l.b16 %v845
        %v942 = vunpack.c.l.b16 %v846
        %v943 = vunpack.c.l.b16 %v847
        %v944 = vunpack.c.l.b16 %v848
        %v945 = vunpack.c.l.b16 %v849
        %v946 = vunpack.c.l.b16 %v850
        %v947 = vunpack.c.l.b16 %v851
        %v948 = vunpack.c.l.b16 %v852
        %v949 = vunpack.c.l.b16 %v853
        %v950 = vunpack.c.l.b16 %v854
        %v951 = vunpack.c.l.b16 %v855
        %v952 = vunpack.c.l.b16 %v856
        %v953 = vunpack.c.l.b16 %v857
        %v954 = vunpack.c.l.b16 %v858
        %v955 = vunpack.c.l.b16 %v859
        %v956 = vunpack.c.l.b16 %v860
        %v957 = vunpack.c.l.b16 %v861
        %v958 = vunpack.c.l.b16 %v862
        %v959 = vunpack.c.l.b16 %v863
        %v960 = vunpack.c.l.b16 %v864
        %v961 = vunpack.c.l.b16 %v865
        %v962 = vunpack.c.l.b16 %v866
        %v963 = vunpack.c.l.b16 %v867
        %v964 = vunpack.c.l.b16 %v868
        %v965 = vunpack.c.l.b16 %v869
        %v966 = vunpack.c.l.b16 %v870
        %v967 = vunpack.c.l.b16 %v871
        %v968 = vpack.c.b16 %v937, %v936
        %v969 = vpack.c.b16 %v939, %v938
        %v970 = vpack.c.b16 %v941, %v940
        %v971 = vpack.c.b16 %v943, %v942
        %v972 = vpack.c.b16 %v945, %v944
        %v973 = vpack.c.b16 %v947, %v946
        %v974 = vpack.c.b16 %v949, %v948
        %v975 = vpack.c.b16 %v951, %v950
        %v976 = vpack.c.b16 %v953, %v952
        %v977 = vpack.c.b16 %v955, %v954
        %v978 = vpack.c.b16 %v957, %v956
        %v979 = vpack.c.b16 %v959, %v958
        %v980 = vpack.c.b16 %v961, %v960
        %v981 = vpack.c.b16 %v963, %v962
        %v982 = vpack.c.b16 %v965, %v964
        %v983 = vpack.c.b16 %v967, %v966
        %v1000 = vunpack.c.l.b16 %v872
        %v1001 = vunpack.c.l.b16 %v873
        %v1002 = vunpack.c.l.b16 %v874
        %v1003 = vunpack.c.l.b16 %v875
        %v1004 = vunpack.c.l.b16 %v876
        %v1005 = vunpack.c.l.b16 %v877
        %v1006 = vunpack.c.l.b16 %v878
        %v1007 = vunpack.c.l.b16 %v879
        %v1008 = vunpack.c.l.b16 %v880
        %v1009 = vunpack.c.l.b16 %v881
        %v1010 = vunpack.c.l.b16 %v882
        %v1011 = vunpack.c.l.b16 %v883
        %v1012 = vunpack.c.l.b16 %v884
        %v1013 = vunpack.c.l.b16 %v885
        %v1014 = vunpack.c.l.b16 %v886
        %v1015 = vunpack.c.l.b16 %v887
        %v1016 = vpack.c.b16 %v1000, %v1000
        %v1017 = vpack.c.b16 %v1001, %v1001
        %v1018 = vpack.c.b16 %v1002, %v1002
        %v1019 = vpack.c.b16 %v1003, %v1003
        %v1020 = vpack.c.b16 %v1004, %v1004
        %v1021 = vpack.c.b16 %v1005, %v1005
        %v1022 = vpack.c.b16 %v1006, %v1006
        %v1023 = vpack.c.b16 %v1007, %v1007
        %v1024 = vpack.c.b16 %v1008, %v1008
        %v1025 = vpack.c.b16 %v1009, %v1009
        %v1026 = vpack.c.b16 %v1010, %v1010
        %v1027 = vpack.c.b16 %v1011, %v1011
        %v1028 = vpack.c.b16 %v1012, %v1012
        %v1029 = vpack.c.b16 %v1013, %v1013
        %v1030 = vpack.c.b16 %v1014, %v1014
        %v1031 = vpack.c.b16 %v1015, %v1015
        %v1033 = vshrl.u32 %v968, 16
        %v1035 = vshll.u32 %v968, 16
        %v1037 = vrot.slane %v1035, 1
        %v1038 = vor.u32 %v1033, %v1037
        %v1040 = vshll.u32 %v1016, 16
        %v1042 = vrot.slane %v1040, 1
        %v1043 = vsel %vm416, %v1038, %v1042
        %v1045 = vshrl.u32 %v969, 16
        %v1047 = vshll.u32 %v969, 16
        %v1049 = vrot.slane %v1047, 1
        %v1050 = vor.u32 %v1045, %v1049
        %v1052 = vshll.u32 %v1017, 16
        %v1054 = vrot.slane %v1052, 1
        %v1055 = vsel %vm416, %v1050, %v1054
        %v1057 = vshrl.u32 %v970, 16
        %v1059 = vshll.u32 %v970, 16
        %v1061 = vrot.slane %v1059, 1
        %v1062 = vor.u32 %v1057, %v1061
        %v1064 = vshll.u32 %v1018, 16
        %v1066 = vrot.slane %v1064, 1
        %v1067 = vsel %vm416, %v1062, %v1066
        %v1069 = vshrl.u32 %v971, 16
        %v1071 = vshll.u32 %v971, 16
        %v1073 = vrot.slane %v1071, 1
        %v1074 = vor.u32 %v1069, %v1073
        %v1076 = vshll.u32 %v1019, 16
        %v1078 = vrot.slane %v1076, 1
        %v1079 = vsel %vm416, %v1074, %v1078
        %v1081 = vshrl.u32 %v972, 16
        %v1083 = vshll.u32 %v972, 16
        %v1085 = vrot.slane %v1083, 1
        %v1086 = vor.u32 %v1081, %v1085
        %v1088 = vshll.u32 %v1020, 16
        %v1090 = vrot.slane %v1088, 1
        %v1091 = vsel %vm416, %v1086, %v1090
        %v1093 = vshrl.u32 %v973, 16
        %v1095 = vshll.u32 %v973, 16
        %v1097 = vrot.slane %v1095, 1
        %v1098 = vor.u32 %v1093, %v1097
        %v1100 = vshll.u32 %v1021, 16
        %v1102 = vrot.slane %v1100, 1
        %v1103 = vsel %vm416, %v1098, %v1102
        %v1105 = vshrl.u32 %v974, 16
        %v1107 = vshll.u32 %v974, 16
        %v1109 = vrot.slane %v1107, 1
        %v1110 = vor.u32 %v1105, %v1109
        %v1112 = vshll.u32 %v1022, 16
        %v1114 = vrot.slane %v1112, 1
        %v1115 = vsel %vm416, %v1110, %v1114
        %v1117 = vshrl.u32 %v975, 16
        %v1119 = vshll.u32 %v975, 16
        %v1121 = vrot.slane %v1119, 1
        %v1122 = vor.u32 %v1117, %v1121
        %v1124 = vshll.u32 %v1023, 16
        %v1126 = vrot.slane %v1124, 1
        %v1127 = vsel %vm416, %v1122, %v1126
        %v1129 = vshrl.u32 %v976, 16
        %v1131 = vshll.u32 %v976, 16
        %v1133 = vrot.slane %v1131, 1
        %v1134 = vor.u32 %v1129, %v1133
        %v1136 = vshll.u32 %v1024, 16
        %v1138 = vrot.slane %v1136, 1
        %v1139 = vsel %vm416, %v1134, %v1138
        %v1141 = vshrl.u32 %v977, 16
        %v1143 = vshll.u32 %v977, 16
        %v1145 = vrot.slane %v1143, 1
        %v1146 = vor.u32 %v1141, %v1145
        %v1148 = vshll.u32 %v1025, 16
        %v1150 = vrot.slane %v1148, 1
        %v1151 = vsel %vm416, %v1146, %v1150
        %v1153 = vshrl.u32 %v978, 16
        %v1155 = vshll.u32 %v978, 16
        %v1157 = vrot.slane %v1155, 1
        %v1158 = vor.u32 %v1153, %v1157
        %v1160 = vshll.u32 %v1026, 16
        %v1162 = vrot.slane %v1160, 1
        %v1163 = vsel %vm416, %v1158, %v1162
        %v1165 = vshrl.u32 %v979, 16
        %v1167 = vshll.u32 %v979, 16
        %v1169 = vrot.slane %v1167, 1
        %v1170 = vor.u32 %v1165, %v1169
        %v1172 = vshll.u32 %v1027, 16
        %v1174 = vrot.slane %v1172, 1
        %v1175 = vsel %vm416, %v1170, %v1174
        %v1177 = vshrl.u32 %v980, 16
        %v1179 = vshll.u32 %v980, 16
        %v1181 = vrot.slane %v1179, 1
        %v1182 = vor.u32 %v1177, %v1181
        %v1184 = vshll.u32 %v1028, 16
        %v1186 = vrot.slane %v1184, 1
        %v1187 = vsel %vm416, %v1182, %v1186
        %v1189 = vshrl.u32 %v981, 16
        %v1191 = vshll.u32 %v981, 16
        %v1193 = vrot.slane %v1191, 1
        %v1194 = vor.u32 %v1189, %v1193
        %v1196 = vshll.u32 %v1029, 16
        %v1198 = vrot.slane %v1196, 1
        %v1199 = vsel %vm416, %v1194, %v1198
        %v1201 = vshrl.u32 %v982, 16
        %v1203 = vshll.u32 %v982, 16
        %v1205 = vrot.slane %v1203, 1
        %v1206 = vor.u32 %v1201, %v1205
        %v1208 = vshll.u32 %v1030, 16
        %v1210 = vrot.slane %v1208, 1
        %v1211 = vsel %vm416, %v1206, %v1210
        %v1213 = vshrl.u32 %v983, 16
        %v1215 = vshll.u32 %v983, 16
        %v1217 = vrot.slane %v1215, 1
        %v1218 = vor.u32 %v1213, %v1217
        %v1220 = vshll.u32 %v1031, 16
        %v1222 = vrot.slane %v1220, 1
        %v1223 = vsel %vm416, %v1218, %v1222
        %1224 = vrot.lane.b32.xlu0 %v1043, 6
        %v1225 = vpop.permute.xlu0 %1224
        %1226 = vrot.lane.b32.xlu0 %v1055, 6
        %v1227 = vpop.permute.xlu0 %1226
        %1228 = vrot.lane.b32.xlu0 %v1067, 6
        %v1229 = vpop.permute.xlu0 %1228
        %1230 = vrot.lane.b32.xlu0 %v1079, 6
        %v1231 = vpop.permute.xlu0 %1230
        %1232 = vrot.lane.b32.xlu0 %v1091, 6
        %v1233 = vpop.permute.xlu0 %1232
        %1234 = vrot.lane.b32.xlu0 %v1103, 6
        %v1235 = vpop.permute.xlu0 %1234
        %1236 = vrot.lane.b32.xlu0 %v1115, 6
        %v1237 = vpop.permute.xlu0 %1236
        %1238 = vrot.lane.b32.xlu0 %v1127, 6
        %v1239 = vpop.permute.xlu0 %1238
        %1240 = vrot.lane.b32.xlu0 %v1139, 6
        %v1241 = vpop.permute.xlu0 %1240
        %1242 = vrot.lane.b32.xlu0 %v1151, 6
        %v1243 = vpop.permute.xlu0 %1242
        %1244 = vrot.lane.b32.xlu0 %v1163, 6
        %v1245 = vpop.permute.xlu0 %1244
        %1246 = vrot.lane.b32.xlu0 %v1175, 6
        %v1247 = vpop.permute.xlu0 %1246
        %1248 = vrot.lane.b32.xlu0 %v1187, 6
        %v1249 = vpop.permute.xlu0 %1248
        %1250 = vrot.lane.b32.xlu0 %v1199, 6
        %v1251 = vpop.permute.xlu0 %1250
        %1252 = vrot.lane.b32.xlu0 %v1211, 6
        %v1253 = vpop.permute.xlu0 %1252
        %1254 = vrot.lane.b32.xlu0 %v1223, 6
        %v1255 = vpop.permute.xlu0 %1254
        %v1272 = vunpack.c.l.b16 %v888
        %v1273 = vunpack.c.l.b16 %v889
        %v1274 = vunpack.c.l.b16 %v890
        %v1275 = vunpack.c.l.b16 %v891
        %v1276 = vunpack.c.l.b16 %v892
        %v1277 = vunpack.c.l.b16 %v893
        %v1278 = vunpack.c.l.b16 %v894
        %v1279 = vunpack.c.l.b16 %v895
        %v1280 = vunpack.c.l.b16 %v896
        %v1281 = vunpack.c.l.b16 %v897
        %v1282 = vunpack.c.l.b16 %v898
        %v1283 = vunpack.c.l.b16 %v899
        %v1284 = vunpack.c.l.b16 %v900
        %v1285 = vunpack.c.l.b16 %v901
        %v1286 = vunpack.c.l.b16 %v902
        %v1287 = vunpack.c.l.b16 %v903
        %v1288 = vpack.c.b16 %v937, %v1272
        %v1289 = vpack.c.b16 %v939, %v1273
        %v1290 = vpack.c.b16 %v941, %v1274
        %v1291 = vpack.c.b16 %v943, %v1275
        %v1292 = vpack.c.b16 %v945, %v1276
        %v1293 = vpack.c.b16 %v947, %v1277
        %v1294 = vpack.c.b16 %v949, %v1278
        %v1295 = vpack.c.b16 %v951, %v1279
        %v1296 = vpack.c.b16 %v953, %v1280
        %v1297 = vpack.c.b16 %v955, %v1281
        %v1298 = vpack.c.b16 %v957, %v1282
        %v1299 = vpack.c.b16 %v959, %v1283
        %v1300 = vpack.c.b16 %v961, %v1284
        %v1301 = vpack.c.b16 %v963, %v1285
        %v1302 = vpack.c.b16 %v965, %v1286
        %v1303 = vpack.c.b16 %v967, %v1287
        %v1304 = vrot.slane %v1288, 1
        %v1305 = vrot.slane %v1016, 1
        %v1306 = vsel %vm689, %v1304, %v1305
        %v1307 = vrot.slane %v1289, 1
        %v1308 = vrot.slane %v1017, 1
        %v1309 = vsel %vm689, %v1307, %v1308
        %v1310 = vrot.slane %v1290, 1
        %v1311 = vrot.slane %v1018, 1
        %v1312 = vsel %vm689, %v1310, %v1311
        %v1313 = vrot.slane %v1291, 1
        %v1314 = vrot.slane %v1019, 1
        %v1315 = vsel %vm689, %v1313, %v1314
        %v1316 = vrot.slane %v1292, 1
        %v1317 = vrot.slane %v1020, 1
        %v1318 = vsel %vm689, %v1316, %v1317
        %v1319 = vrot.slane %v1293, 1
        %v1320 = vrot.slane %v1021, 1
        %v1321 = vsel %vm689, %v1319, %v1320
        %v1322 = vrot.slane %v1294, 1
        %v1323 = vrot.slane %v1022, 1
        %v1324 = vsel %vm689, %v1322, %v1323
        %v1325 = vrot.slane %v1295, 1
        %v1326 = vrot.slane %v1023, 1
        %v1327 = vsel %vm689, %v1325, %v1326
        %v1328 = vrot.slane %v1296, 1
        %v1329 = vrot.slane %v1024, 1
        %v1330 = vsel %vm689, %v1328, %v1329
        %v1331 = vrot.slane %v1297, 1
        %v1332 = vrot.slane %v1025, 1
        %v1333 = vsel %vm689, %v1331, %v1332
        %v1334 = vrot.slane %v1298, 1
        %v1335 = vrot.slane %v1026, 1
        %v1336 = vsel %vm689, %v1334, %v1335
        %v1337 = vrot.slane %v1299, 1
        %v1338 = vrot.slane %v1027, 1
        %v1339 = vsel %vm689, %v1337, %v1338
        %v1340 = vrot.slane %v1300, 1
        %v1341 = vrot.slane %v1028, 1
        %v1342 = vsel %vm689, %v1340, %v1341
        %v1343 = vrot.slane %v1301, 1
        %v1344 = vrot.slane %v1029, 1
        %v1345 = vsel %vm689, %v1343, %v1344
        %v1346 = vrot.slane %v1302, 1
        %v1347 = vrot.slane %v1030, 1
        %v1348 = vsel %vm689, %v1346, %v1347
        %v1349 = vrot.slane %v1303, 1
        %v1350 = vrot.slane %v1031, 1
        %v1351 = vsel %vm689, %v1349, %v1350
        %1352 = vrot.lane.b32.xlu0 %v1306, 12
        %v1353 = vpop.permute.xlu0 %1352
        %1354 = vrot.lane.b32.xlu0 %v1309, 12
        %v1355 = vpop.permute.xlu0 %1354
        %1356 = vrot.lane.b32.xlu0 %v1312, 12
        %v1357 = vpop.permute.xlu0 %1356
        %1358 = vrot.lane.b32.xlu0 %v1315, 12
        %v1359 = vpop.permute.xlu0 %1358
        %1360 = vrot.lane.b32.xlu0 %v1318, 12
        %v1361 = vpop.permute.xlu0 %1360
        %1362 = vrot.lane.b32.xlu0 %v1321, 12
        %v1363 = vpop.permute.xlu0 %1362
        %1364 = vrot.lane.b32.xlu0 %v1324, 12
        %v1365 = vpop.permute.xlu0 %1364
        %1366 = vrot.lane.b32.xlu0 %v1327, 12
        %v1367 = vpop.permute.xlu0 %1366
        %1368 = vrot.lane.b32.xlu0 %v1330, 12
        %v1369 = vpop.permute.xlu0 %1368
        %1370 = vrot.lane.b32.xlu0 %v1333, 12
        %v1371 = vpop.permute.xlu0 %1370
        %1372 = vrot.lane.b32.xlu0 %v1336, 12
        %v1373 = vpop.permute.xlu0 %1372
        %1374 = vrot.lane.b32.xlu0 %v1339, 12
        %v1375 = vpop.permute.xlu0 %1374
        %1376 = vrot.lane.b32.xlu0 %v1342, 12
        %v1377 = vpop.permute.xlu0 %1376
        %1378 = vrot.lane.b32.xlu0 %v1345, 12
        %v1379 = vpop.permute.xlu0 %1378
        %1380 = vrot.lane.b32.xlu0 %v1348, 12
        %v1381 = vpop.permute.xlu0 %1380
        %1382 = vrot.lane.b32.xlu0 %v1351, 12
        %v1383 = vpop.permute.xlu0 %1382
        %v1385 = vsel %vm770, %v968, %v1225
        %v1387 = vsel %vm770, %v969, %v1227
        %v1389 = vsel %vm770, %v970, %v1229
        %v1391 = vsel %vm770, %v971, %v1231
        %v1393 = vsel %vm770, %v972, %v1233
        %v1395 = vsel %vm770, %v973, %v1235
        %v1397 = vsel %vm770, %v974, %v1237
        %v1399 = vsel %vm770, %v975, %v1239
        %v1401 = vsel %vm770, %v976, %v1241
        %v1403 = vsel %vm770, %v977, %v1243
        %v1405 = vsel %vm770, %v978, %v1245
        %v1407 = vsel %vm770, %v979, %v1247
        %v1409 = vsel %vm770, %v980, %v1249
        %v1411 = vsel %vm770, %v981, %v1251
        %v1413 = vsel %vm770, %v982, %v1253
        %v1415 = vsel %vm770, %v983, %v1255
        %v1417 = vsel %vm803, %v1385, %v1353
        %v1419 = vsel %vm803, %v1387, %v1355
        %v1421 = vsel %vm803, %v1389, %v1357
        %v1423 = vsel %vm803, %v1391, %v1359
        %v1425 = vsel %vm803, %v1393, %v1361
        %v1427 = vsel %vm803, %v1395, %v1363
        %v1429 = vsel %vm803, %v1397, %v1365
        %v1431 = vsel %vm803, %v1399, %v1367
        %v1433 = vsel %vm803, %v1401, %v1369
        %v1435 = vsel %vm803, %v1403, %v1371
        %v1437 = vsel %vm803, %v1405, %v1373
        %v1439 = vsel %vm803, %v1407, %v1375
        %v1441 = vsel %vm803, %v1409, %v1377
        %v1443 = vsel %vm803, %v1411, %v1379
        %v1445 = vsel %vm803, %v1413, %v1381
        %v1447 = vsel %vm803, %v1415, %v1383
        %s1448 = scalar_lea.vmem %s1, 12
        %v1449 = vld [vmem:[%s1448] sm:$0xf]
        %v1450 = vld [vmem:[%s1448 + $0x4] sm:$0xf]
        %v1451 = vld [vmem:[%s1448 + $0x8] sm:$0x1]
        %v1455 = vunpack.c.l.b16 %v1449
        %v1456 = vunpack.c.l.b16 %v1450
        %v1457 = vunpack.c.l.b16 %v1451
        %v1458 = vpack.c.b16 %v1456, %v1455
        %v1459 = vpack.c.b16 %v1457, %v1457
        %vm1461 = vcmask 146432
        %v1462 = vsel %vm1461, %v1417, 0
        %v1464 = vsel %vm1461, %v1419, 0
        %v1466 = vsel %vm1461, %v1421, 0
        %v1468 = vsel %vm1461, %v1423, 0
        %v1470 = vsel %vm1461, %v1425, 0
        %v1472 = vsel %vm1461, %v1427, 0
        %v1474 = vsel %vm1461, %v1429, 0
        %v1476 = vsel %vm1461, %v1431, 0
        %v1478 = vsel %vm1461, %v1433, 0
        %v1480 = vsel %vm1461, %v1435, 0
        %v1482 = vsel %vm1461, %v1437, 0
        %v1484 = vsel %vm1461, %v1439, 0
        %v1486 = vsel %vm1461, %v1441, 0
        %v1488 = vsel %vm1461, %v1443, 0
        %v1490 = vsel %vm1461, %v1445, 0
        %v1492 = vsel %vm1461, %v1447, 0
        %vm1494 = vcmask 1040384
        %v1496 = vsel %vm1494, %v1459, 0
        %1498 = vmatprep.subr.bf16.mxu0 0
        %1499 = vmatpush1.bf16.msra.mxu0 %v1458
        %1500 = vmatprep.subr.bf16.mxu0 0
        %1501 = vmatpush1.bf16.msra.mxu0 %v1496
        %1502 = vmatprep.subr.bf16.mxu0 0
        %1503 = vmatpush1.bf16.msra.mxu0 0
        %1504 = vmatprep.subr.bf16.mxu0 0
        %1505 = vmatpush1.bf16.msra.mxu0 0
        %1506 = vmatprep.subr.bf16.mxu0 0
        %1507 = vmatpush1.bf16.msra.mxu0 0
        %1508 = vmatprep.subr.bf16.mxu0 0
        %1509 = vmatpush1.bf16.msra.mxu0 0
        %1510 = vmatprep.subr.bf16.mxu0 0
        %1511 = vmatpush1.bf16.msra.mxu0 0
        %1512 = vmatprep.subr.bf16.mxu0 0
        %1513 = vmatpush1.bf16.msra.mxu0 0
        %1514 = vmatprep.subr.bf16.mxu0 0
        %1515 = vmatpush1.bf16.msra.mxu0 0
        %1516 = vmatprep.subr.bf16.mxu0 0
        %1517 = vmatpush1.bf16.msra.mxu0 0
        %1518 = vmatprep.subr.bf16.mxu0 0
        %1519 = vmatpush1.bf16.msra.mxu0 0
        %1520 = vmatprep.subr.bf16.mxu0 0
        %1521 = vmatpush1.bf16.msra.mxu0 0
        %1522 = vmatprep.subr.bf16.mxu0 0
        %1523 = vmatpush1.bf16.msra.mxu0 0
        %1524 = vmatprep.subr.bf16.mxu0 0
        %1525 = vmatpush1.bf16.msra.mxu0 0
        %1526 = vmatprep.subr.bf16.mxu0 0
        %1527 = vmatpush1.bf16.msra.mxu0 0
        %1528 = vmatprep.subr.bf16.mxu0 0
        %1529 = vmatpush1.bf16.msra.mxu0 0
        %1530 = vmatprep.mubr.bf16.mxu0 0
        %1531 = vmatmul.mubr.bf16.gmra.mrb[0].mxu0 %v1462
        %v1532 = vpop.f32.mrb[0].mxu0
        %v1533 = vadd.f32 0.0, %v1532
        %v1534 = vpop.f32.mrb[0].mxu0
        %v1535 = vpop.f32.mrb[0].mxu0
        %v1536 = vadd.f32 0.0, %v1535
        %v1537 = vpop.f32.mrb[0].mxu0
        %1538 = vmatprep.mubr.bf16.mxu0 0
        %1539 = vmatmul.mubr.bf16.gmra.mrb[0].mxu0 %v1464
        %v1540 = vpop.f32.mrb[0].mxu0
        %v1541 = vadd.f32 0.0, %v1540
        %v1542 = vpop.f32.mrb[0].mxu0
        %v1543 = vpop.f32.mrb[0].mxu0
        %v1544 = vadd.f32 0.0, %v1543
        %v1545 = vpop.f32.mrb[0].mxu0
        %1546 = vmatprep.mubr.bf16.mxu0 0
        %1547 = vmatmul.mubr.bf16.gmra.mrb[0].mxu0 %v1466
        %v1548 = vpop.f32.mrb[0].mxu0
        %v1549 = vadd.f32 0.0, %v1548
        %v1550 = vpop.f32.mrb[0].mxu0
        %v1551 = vpop.f32.mrb[0].mxu0
        %v1552 = vadd.f32 0.0, %v1551
        %v1553 = vpop.f32.mrb[0].mxu0
        %1554 = vmatprep.mubr.bf16.mxu0 0
        %1555 = vmatmul.mubr.bf16.gmra.mrb[0].mxu0 %v1468
        %v1556 = vpop.f32.mrb[0].mxu0
        %v1557 = vadd.f32 0.0, %v1556
        %v1558 = vpop.f32.mrb[0].mxu0
        %v1559 = vpop.f32.mrb[0].mxu0
        %v1560 = vadd.f32 0.0, %v1559
        %v1561 = vpop.f32.mrb[0].mxu0
        %1562 = vmatprep.mubr.bf16.mxu0 0
        %1563 = vmatmul.mubr.bf16.gmra.mrb[0].mxu0 %v1470
        %v1564 = vpop.f32.mrb[0].mxu0
        %v1565 = vadd.f32 0.0, %v1564
        %v1566 = vpop.f32.mrb[0].mxu0
        %v1567 = vpop.f32.mrb[0].mxu0
        %v1568 = vadd.f32 0.0, %v1567
        %v1569 = vpop.f32.mrb[0].mxu0
        %1570 = vmatprep.mubr.bf16.mxu0 0
        %1571 = vmatmul.mubr.bf16.gmra.mrb[0].mxu0 %v1472
        %v1572 = vpop.f32.mrb[0].mxu0
        %v1573 = vadd.f32 0.0, %v1572
        %v1574 = vpop.f32.mrb[0].mxu0
        %v1575 = vpop.f32.mrb[0].mxu0
        %v1576 = vadd.f32 0.0, %v1575
        %v1577 = vpop.f32.mrb[0].mxu0
        %1578 = vmatprep.mubr.bf16.mxu0 0
        %1579 = vmatmul.mubr.bf16.gmra.mrb[0].mxu0 %v1474
        %v1580 = vpop.f32.mrb[0].mxu0
        %v1581 = vadd.f32 0.0, %v1580
        %v1582 = vpop.f32.mrb[0].mxu0
        %v1583 = vpop.f32.mrb[0].mxu0
        %v1584 = vadd.f32 0.0, %v1583
        %v1585 = vpop.f32.mrb[0].mxu0
        %1586 = vmatprep.mubr.bf16.mxu0 0
        %1587 = vmatmul.mubr.bf16.gmra.mrb[0].mxu0 %v1476
        %v1588 = vpop.f32.mrb[0].mxu0
        %v1589 = vadd.f32 0.0, %v1588
        %v1590 = vpop.f32.mrb[0].mxu0
        %v1591 = vpop.f32.mrb[0].mxu0
        %v1592 = vadd.f32 0.0, %v1591
        %v1593 = vpop.f32.mrb[0].mxu0
        %1594 = vmatprep.mubr.bf16.mxu0 0
        %1595 = vmatmul.mubr.bf16.gmra.mrb[0].mxu0 %v1478
        %v1596 = vpop.f32.mrb[0].mxu0
        %v1597 = vadd.f32 0.0, %v1596
        %v1598 = vpop.f32.mrb[0].mxu0
        %v1599 = vpop.f32.mrb[0].mxu0
        %v1600 = vadd.f32 0.0, %v1599
        %v1601 = vpop.f32.mrb[0].mxu0
        %1602 = vmatprep.mubr.bf16.mxu0 0
        %1603 = vmatmul.mubr.bf16.gmra.mrb[0].mxu0 %v1480
        %v1604 = vpop.f32.mrb[0].mxu0
        %v1605 = vadd.f32 0.0, %v1604
        %v1606 = vpop.f32.mrb[0].mxu0
        %v1607 = vpop.f32.mrb[0].mxu0
        %v1608 = vadd.f32 0.0, %v1607
        %v1609 = vpop.f32.mrb[0].mxu0
        %1610 = vmatprep.mubr.bf16.mxu0 0
        %1611 = vmatmul.mubr.bf16.gmra.mrb[0].mxu0 %v1482
        %v1612 = vpop.f32.mrb[0].mxu0
        %v1613 = vadd.f32 0.0, %v1612
        %v1614 = vpop.f32.mrb[0].mxu0
        %v1615 = vpop.f32.mrb[0].mxu0
        %v1616 = vadd.f32 0.0, %v1615
        %v1617 = vpop.f32.mrb[0].mxu0
        %1618 = vmatprep.mubr.bf16.mxu0 0
        %1619 = vmatmul.mubr.bf16.gmra.mrb[0].mxu0 %v1484
        %v1620 = vpop.f32.mrb[0].mxu0
        %v1621 = vadd.f32 0.0, %v1620
        %v1622 = vpop.f32.mrb[0].mxu0
        %v1623 = vpop.f32.mrb[0].mxu0
        %v1624 = vadd.f32 0.0, %v1623
        %v1625 = vpop.f32.mrb[0].mxu0
        %1626 = vmatprep.mubr.bf16.mxu0 0
        %1627 = vmatmul.mubr.bf16.gmra.mrb[0].mxu0 %v1486
        %v1628 = vpop.f32.mrb[0].mxu0
        %v1629 = vadd.f32 0.0, %v1628
        %v1630 = vpop.f32.mrb[0].mxu0
        %v1631 = vpop.f32.mrb[0].mxu0
        %v1632 = vadd.f32 0.0, %v1631
        %v1633 = vpop.f32.mrb[0].mxu0
        %1634 = vmatprep.mubr.bf16.mxu0 0
        %1635 = vmatmul.mubr.bf16.gmra.mrb[0].mxu0 %v1488
        %v1636 = vpop.f32.mrb[0].mxu0
        %v1637 = vadd.f32 0.0, %v1636
        %v1638 = vpop.f32.mrb[0].mxu0
        %v1639 = vpop.f32.mrb[0].mxu0
        %v1640 = vadd.f32 0.0, %v1639
        %v1641 = vpop.f32.mrb[0].mxu0
        %1642 = vmatprep.mubr.bf16.mxu0 0
        %1643 = vmatmul.mubr.bf16.gmra.mrb[0].mxu0 %v1490
        %v1644 = vpop.f32.mrb[0].mxu0
        %v1645 = vadd.f32 0.0, %v1644
        %v1646 = vpop.f32.mrb[0].mxu0
        %v1647 = vpop.f32.mrb[0].mxu0
        %v1648 = vadd.f32 0.0, %v1647
        %v1649 = vpop.f32.mrb[0].mxu0
        %1650 = vmatprep.mubr.bf16.mxu0 0
        %1651 = vmatmul.mubr.bf16.gmra.mrb[0].mxu0 %v1492
        %v1652 = vpop.f32.mrb[0].mxu0
        %v1653 = vadd.f32 0.0, %v1652
        %v1654 = vpop.f32.mrb[0].mxu0
        %v1655 = vpop.f32.mrb[0].mxu0
        %v1656 = vadd.f32 0.0, %v1655
        %v1657 = vpop.f32.mrb[0].mxu0
        %1658 = vdwg.mxu0
        %v1662 = vunpack.c.l.b16 %v836
        %v1663 = vunpack.c.l.b16 %v837
        %v1664 = vunpack.c.l.b16 %v838
        %v1665 = vpack.c.b16 %v1663, %v1662
        %v1666 = vpack.c.b16 %v1664, %v1664
        %v1668 = vsel %vm1461, %v805, 0
        %v1670 = vsel %vm1461, %v807, 0
        %v1672 = vsel %vm1461, %v809, 0
        %v1674 = vsel %vm1461, %v811, 0
        %v1676 = vsel %vm1461, %v813, 0
        %v1678 = vsel %vm1461, %v815, 0
        %v1680 = vsel %vm1461, %v817, 0
        %v1682 = vsel %vm1461, %v819, 0
        %v1684 = vsel %vm1461, %v821, 0
        %v1686 = vsel %vm1461, %v823, 0
        %v1688 = vsel %vm1461, %v825, 0
        %v1690 = vsel %vm1461, %v827, 0
        %v1692 = vsel %vm1461, %v829, 0
        %v1694 = vsel %vm1461, %v831, 0
        %v1696 = vsel %vm1461, %v833, 0
        %v1698 = vsel %vm1461, %v835, 0
        %v1701 = vsel %vm1494, %v1666, 0
        %1703 = vmatprep.subr.bf16.mxu0 0
        %1704 = vmatpush1.bf16.msra.mxu0 %v1665
        %1705 = vmatprep.subr.bf16.mxu0 0
        %1706 = vmatpush1.bf16.msra.mxu0 %v1701
        %1707 = vmatprep.subr.bf16.mxu0 0
        %1708 = vmatpush1.bf16.msra.mxu0 0
        %1709 = vmatprep.subr.bf16.mxu0 0
        %1710 = vmatpush1.bf16.msra.mxu0 0
        %1711 = vmatprep.subr.bf16.mxu0 0
        %1712 = vmatpush1.bf16.msra.mxu0 0
        %1713 = vmatprep.subr.bf16.mxu0 0
        %1714 = vmatpush1.bf16.msra.mxu0 0
        %1715 = vmatprep.subr.bf16.mxu0 0
        %1716 = vmatpush1.bf16.msra.mxu0 0
        %1717 = vmatprep.subr.bf16.mxu0 0
        %1718 = vmatpush1.bf16.msra.mxu0 0
        %1719 = vmatprep.subr.bf16.mxu0 0
        %1720 = vmatpush1.bf16.msra.mxu0 0
        %1721 = vmatprep.subr.bf16.mxu0 0
        %1722 = vmatpush1.bf16.msra.mxu0 0
        %1723 = vmatprep.subr.bf16.mxu0 0
        %1724 = vmatpush1.bf16.msra.mxu0 0
        %1725 = vmatprep.subr.bf16.mxu0 0
        %1726 = vmatpush1.bf16.msra.mxu0 0
        %1727 = vmatprep.subr.bf16.mxu0 0
        %1728 = vmatpush1.bf16.msra.mxu0 0
        %1729 = vmatprep.subr.bf16.mxu0 0
        %1730 = vmatpush1.bf16.msra.mxu0 0
        %1731 = vmatprep.subr.bf16.mxu0 0
        %1732 = vmatpush1.bf16.msra.mxu0 0
        %1733 = vmatprep.subr.bf16.mxu0 0
        %1734 = vmatpush1.bf16.msra.mxu0 0
        %1735 = vmatprep.mubr.bf16.mxu0 0
        %1736 = vmatmul.mubr.bf16.gmra.mrb[0].mxu0 %v1668
        %v1737 = vpop.f32.mrb[0].mxu0
        %v1738 = vadd.f32 %v1533, %v1737
        %v1739 = vpop.f32.mrb[0].mxu0
        %v1740 = vpop.f32.mrb[0].mxu0
        %v1741 = vadd.f32 %v1536, %v1740
        %v1742 = vpop.f32.mrb[0].mxu0
        %1743 = vmatprep.mubr.bf16.mxu0 0
        %1744 = vmatmul.mubr.bf16.gmra.mrb[0].mxu0 %v1670
        %v1745 = vpop.f32.mrb[0].mxu0
        %v1746 = vadd.f32 %v1541, %v1745
        %v1747 = vpop.f32.mrb[0].mxu0
        %v1748 = vpop.f32.mrb[0].mxu0
        %v1749 = vadd.f32 %v1544, %v1748
        %v1750 = vpop.f32.mrb[0].mxu0
        %1751 = vmatprep.mubr.bf16.mxu0 0
        %1752 = vmatmul.mubr.bf16.gmra.mrb[0].mxu0 %v1672
        %v1753 = vpop.f32.mrb[0].mxu0
        %v1754 = vadd.f32 %v1549, %v1753
        %v1755 = vpop.f32.mrb[0].mxu0
        %v1756 = vpop.f32.mrb[0].mxu0
        %v1757 = vadd.f32 %v1552, %v1756
        %v1758 = vpop.f32.mrb[0].mxu0
        %1759 = vmatprep.mubr.bf16.mxu0 0
        %1760 = vmatmul.mubr.bf16.gmra.mrb[0].mxu0 %v1674
        %v1761 = vpop.f32.mrb[0].mxu0
        %v1762 = vadd.f32 %v1557, %v1761
        %v1763 = vpop.f32.mrb[0].mxu0
        %v1764 = vpop.f32.mrb[0].mxu0
        %v1765 = vadd.f32 %v1560, %v1764
        %v1766 = vpop.f32.mrb[0].mxu0
        %1767 = vmatprep.mubr.bf16.mxu0 0
        %1768 = vmatmul.mubr.bf16.gmra.mrb[0].mxu0 %v1676
        %v1769 = vpop.f32.mrb[0].mxu0
        %v1770 = vadd.f32 %v1565, %v1769
        %v1771 = vpop.f32.mrb[0].mxu0
        %v1772 = vpop.f32.mrb[0].mxu0
        %v1773 = vadd.f32 %v1568, %v1772
        %v1774 = vpop.f32.mrb[0].mxu0
        %1775 = vmatprep.mubr.bf16.mxu0 0
        %1776 = vmatmul.mubr.bf16.gmra.mrb[0].mxu0 %v1678
        %v1777 = vpop.f32.mrb[0].mxu0
        %v1778 = vadd.f32 %v1573, %v1777
        %v1779 = vpop.f32.mrb[0].mxu0
        %v1780 = vpop.f32.mrb[0].mxu0
        %v1781 = vadd.f32 %v1576, %v1780
        %v1782 = vpop.f32.mrb[0].mxu0
        %1783 = vmatprep.mubr.bf16.mxu0 0
        %1784 = vmatmul.mubr.bf16.gmra.mrb[0].mxu0 %v1680
        %v1785 = vpop.f32.mrb[0].mxu0
        %v1786 = vadd.f32 %v1581, %v1785
        %v1787 = vpop.f32.mrb[0].mxu0
        %v1788 = vpop.f32.mrb[0].mxu0
        %v1789 = vadd.f32 %v1584, %v1788
        %v1790 = vpop.f32.mrb[0].mxu0
        %1791 = vmatprep.mubr.bf16.mxu0 0
        %1792 = vmatmul.mubr.bf16.gmra.mrb[0].mxu0 %v1682
        %v1793 = vpop.f32.mrb[0].mxu0
        %v1794 = vadd.f32 %v1589, %v1793
        %v1795 = vpop.f32.mrb[0].mxu0
        %v1796 = vpop.f32.mrb[0].mxu0
        %v1797 = vadd.f32 %v1592, %v1796
        %v1798 = vpop.f32.mrb[0].mxu0
        %1799 = vmatprep.mubr.bf16.mxu0 0
        %1800 = vmatmul.mubr.bf16.gmra.mrb[0].mxu0 %v1684
        %v1801 = vpop.f32.mrb[0].mxu0
        %v1802 = vadd.f32 %v1597, %v1801
        %v1803 = vpop.f32.mrb[0].mxu0
        %v1804 = vpop.f32.mrb[0].mxu0
        %v1805 = vadd.f32 %v1600, %v1804
        %v1806 = vpop.f32.mrb[0].mxu0
        %1807 = vmatprep.mubr.bf16.mxu0 0
        %1808 = vmatmul.mubr.bf16.gmra.mrb[0].mxu0 %v1686
        %v1809 = vpop.f32.mrb[0].mxu0
        %v1810 = vadd.f32 %v1605, %v1809
        %v1811 = vpop.f32.mrb[0].mxu0
        %v1812 = vpop.f32.mrb[0].mxu0
        %v1813 = vadd.f32 %v1608, %v1812
        %v1814 = vpop.f32.mrb[0].mxu0
        %1815 = vmatprep.mubr.bf16.mxu0 0
        %1816 = vmatmul.mubr.bf16.gmra.mrb[0].mxu0 %v1688
        %v1817 = vpop.f32.mrb[0].mxu0
        %v1818 = vadd.f32 %v1613, %v1817
        %v1819 = vpop.f32.mrb[0].mxu0
        %v1820 = vpop.f32.mrb[0].mxu0
        %v1821 = vadd.f32 %v1616, %v1820
        %v1822 = vpop.f32.mrb[0].mxu0
        %1823 = vmatprep.mubr.bf16.mxu0 0
        %1824 = vmatmul.mubr.bf16.gmra.mrb[0].mxu0 %v1690
        %v1825 = vpop.f32.mrb[0].mxu0
        %v1826 = vadd.f32 %v1621, %v1825
        %v1827 = vpop.f32.mrb[0].mxu0
        %v1828 = vpop.f32.mrb[0].mxu0
        %v1829 = vadd.f32 %v1624, %v1828
        %v1830 = vpop.f32.mrb[0].mxu0
        %1831 = vmatprep.mubr.bf16.mxu0 0
        %1832 = vmatmul.mubr.bf16.gmra.mrb[0].mxu0 %v1692
        %v1833 = vpop.f32.mrb[0].mxu0
        %v1834 = vadd.f32 %v1629, %v1833
        %v1835 = vpop.f32.mrb[0].mxu0
        %v1836 = vpop.f32.mrb[0].mxu0
        %v1837 = vadd.f32 %v1632, %v1836
        %v1838 = vpop.f32.mrb[0].mxu0
        %1839 = vmatprep.mubr.bf16.mxu0 0
        %1840 = vmatmul.mubr.bf16.gmra.mrb[0].mxu0 %v1694
        %v1841 = vpop.f32.mrb[0].mxu0
        %v1842 = vadd.f32 %v1637, %v1841
        %v1843 = vpop.f32.mrb[0].mxu0
        %v1844 = vpop.f32.mrb[0].mxu0
        %v1845 = vadd.f32 %v1640, %v1844
        %v1846 = vpop.f32.mrb[0].mxu0
        %1847 = vmatprep.mubr.bf16.mxu0 0
        %1848 = vmatmul.mubr.bf16.gmra.mrb[0].mxu0 %v1696
        %v1849 = vpop.f32.mrb[0].mxu0
        %v1850 = vadd.f32 %v1645, %v1849
        %v1851 = vpop.f32.mrb[0].mxu0
        %v1852 = vpop.f32.mrb[0].mxu0
        %v1853 = vadd.f32 %v1648, %v1852
        %v1854 = vpop.f32.mrb[0].mxu0
        %1855 = vmatprep.mubr.bf16.mxu0 0
        %1856 = vmatmul.mubr.bf16.gmra.mrb[0].mxu0 %v1698
        %v1857 = vpop.f32.mrb[0].mxu0
        %v1858 = vadd.f32 %v1653, %v1857
        %v1859 = vpop.f32.mrb[0].mxu0
        %v1860 = vpop.f32.mrb[0].mxu0
        %v1861 = vadd.f32 %v1656, %v1860
        %v1862 = vpop.f32.mrb[0].mxu0
        %1863 = vdwg.mxu0
        %s1864 = scalar_lea.vmem %s222, 24
        %v1865 = vld [vmem:[%s1864] sm:$0xf]
        %v1866 = vld [vmem:[%s1864 + $0x4] sm:$0xf]
        %v1867 = vld [vmem:[%s1864 + $0xc] sm:$0xf]
        %v1868 = vld [vmem:[%s1864 + $0x10] sm:$0xf]
        %v1869 = vld [vmem:[%s1864 + $0x18] sm:$0xf]
        %v1870 = vld [vmem:[%s1864 + $0x1c] sm:$0xf]
        %v1871 = vld [vmem:[%s1864 + $0x24] sm:$0xf]
        %v1872 = vld [vmem:[%s1864 + $0x28] sm:$0xf]
        %v1873 = vld [vmem:[%s1864 + $0x30] sm:$0xf]
        %v1874 = vld [vmem:[%s1864 + $0x34] sm:$0xf]
        %v1875 = vld [vmem:[%s1864 + $0x3c] sm:$0xf]
        %v1876 = vld [vmem:[%s1864 + $0x40] sm:$0xf]
        %v1877 = vld [vmem:[%s1864 + $0x48] sm:$0xf]
        %v1878 = vld [vmem:[%s1864 + $0x4c] sm:$0xf]
        %v1879 = vld [vmem:[%s1864 + $0x54] sm:$0xf]
        %v1880 = vld [vmem:[%s1864 + $0x58] sm:$0xf]
        %v1881 = vld [vmem:[%s1864 + $0x60] sm:$0xf]
        %v1882 = vld [vmem:[%s1864 + $0x64] sm:$0xf]
        %v1883 = vld [vmem:[%s1864 + $0x6c] sm:$0xf]
        %v1884 = vld [vmem:[%s1864 + $0x70] sm:$0xf]
        %v1885 = vld [vmem:[%s1864 + $0x78] sm:$0xf]
        %v1886 = vld [vmem:[%s1864 + $0x7c] sm:$0xf]
        %v1887 = vld [vmem:[%s1864 + $0x84] sm:$0xf]
        %v1888 = vld [vmem:[%s1864 + $0x88] sm:$0xf]
        %v1889 = vld [vmem:[%s1864 + $0x90] sm:$0xf]
        %v1890 = vld [vmem:[%s1864 + $0x94] sm:$0xf]
        %v1891 = vld [vmem:[%s1864 + $0x9c] sm:$0xf]
        %v1892 = vld [vmem:[%s1864 + $0xa0] sm:$0xf]
        %v1893 = vld [vmem:[%s1864 + $0xa8] sm:$0xf]
        %v1894 = vld [vmem:[%s1864 + $0xac] sm:$0xf]
        %v1895 = vld [vmem:[%s1864 + $0xb4] sm:$0xf]
        %v1896 = vld [vmem:[%s1864 + $0xb8] sm:$0xf]
        %v1897 = vld [vmem:[%s1864 + $0x8] sm:$0x1]
        %v1898 = vld [vmem:[%s1864 + $0x14] sm:$0x1]
        %v1899 = vld [vmem:[%s1864 + $0x20] sm:$0x1]
        %v1900 = vld [vmem:[%s1864 + $0x2c] sm:$0x1]
        %v1901 = vld [vmem:[%s1864 + $0x38] sm:$0x1]
        %v1902 = vld [vmem:[%s1864 + $0x44] sm:$0x1]
        %v1903 = vld [vmem:[%s1864 + $0x50] sm:$0x1]
        %v1904 = vld [vmem:[%s1864 + $0x5c] sm:$0x1]
        %v1905 = vld [vmem:[%s1864 + $0x68] sm:$0x1]
        %v1906 = vld [vmem:[%s1864 + $0x74] sm:$0x1]
        %v1907 = vld [vmem:[%s1864 + $0x80] sm:$0x1]
        %v1908 = vld [vmem:[%s1864 + $0x8c] sm:$0x1]
        %v1909 = vld [vmem:[%s1864 + $0x98] sm:$0x1]
        %v1910 = vld [vmem:[%s1864 + $0xa4] sm:$0x1]
        %v1911 = vld [vmem:[%s1864 + $0xb0] sm:$0x1]
        %v1912 = vld [vmem:[%s1864 + $0xbc] sm:$0x1]
        %v1913 = vld [vmem:[%s1864] sm:$0xe]
        %v1914 = vld [vmem:[%s1864 + $0xc] sm:$0xe]
        %v1915 = vld [vmem:[%s1864 + $0x18] sm:$0xe]
        %v1916 = vld [vmem:[%s1864 + $0x24] sm:$0xe]
        %v1917 = vld [vmem:[%s1864 + $0x30] sm:$0xe]
        %v1918 = vld [vmem:[%s1864 + $0x3c] sm:$0xe]
        %v1919 = vld [vmem:[%s1864 + $0x48] sm:$0xe]
        %v1920 = vld [vmem:[%s1864 + $0x54] sm:$0xe]
        %v1921 = vld [vmem:[%s1864 + $0x60] sm:$0xe]
        %v1922 = vld [vmem:[%s1864 + $0x6c] sm:$0xe]
        %v1923 = vld [vmem:[%s1864 + $0x78] sm:$0xe]
        %v1924 = vld [vmem:[%s1864 + $0x84] sm:$0xe]
        %v1925 = vld [vmem:[%s1864 + $0x90] sm:$0xe]
        %v1926 = vld [vmem:[%s1864 + $0x9c] sm:$0xe]
        %v1927 = vld [vmem:[%s1864 + $0xa8] sm:$0xe]
        %v1928 = vld [vmem:[%s1864 + $0xb4] sm:$0xe]
        %v1961 = vunpack.c.l.b16 %v1865
        %v1962 = vunpack.c.l.b16 %v1866
        %v1963 = vunpack.c.l.b16 %v1867
        %v1964 = vunpack.c.l.b16 %v1868
        %v1965 = vunpack.c.l.b16 %v1869
        %v1966 = vunpack.c.l.b16 %v1870
        %v1967 = vunpack.c.l.b16 %v1871
        %v1968 = vunpack.c.l.b16 %v1872
        %v1969 = vunpack.c.l.b16 %v1873
        %v1970 = vunpack.c.l.b16 %v1874
        %v1971 = vunpack.c.l.b16 %v1875
        %v1972 = vunpack.c.l.b16 %v1876
        %v1973 = vunpack.c.l.b16 %v1877
        %v1974 = vunpack.c.l.b16 %v1878
        %v1975 = vunpack.c.l.b16 %v1879
        %v1976 = vunpack.c.l.b16 %v1880
        %v1977 = vunpack.c.l.b16 %v1881
        %v1978 = vunpack.c.l.b16 %v1882
        %v1979 = vunpack.c.l.b16 %v1883
        %v1980 = vunpack.c.l.b16 %v1884
        %v1981 = vunpack.c.l.b16 %v1885
        %v1982 = vunpack.c.l.b16 %v1886
        %v1983 = vunpack.c.l.b16 %v1887
        %v1984 = vunpack.c.l.b16 %v1888
        %v1985 = vunpack.c.l.b16 %v1889
        %v1986 = vunpack.c.l.b16 %v1890
        %v1987 = vunpack.c.l.b16 %v1891
        %v1988 = vunpack.c.l.b16 %v1892
        %v1989 = vunpack.c.l.b16 %v1893
        %v1990 = vunpack.c.l.b16 %v1894
        %v1991 = vunpack.c.l.b16 %v1895
        %v1992 = vunpack.c.l.b16 %v1896
        %v1993 = vpack.c.b16 %v1962, %v1961
        %v1994 = vpack.c.b16 %v1964, %v1963
        %v1995 = vpack.c.b16 %v1966, %v1965
        %v1996 = vpack.c.b16 %v1968, %v1967
        %v1997 = vpack.c.b16 %v1970, %v1969
        %v1998 = vpack.c.b16 %v1972, %v1971
        %v1999 = vpack.c.b16 %v1974, %v1973
        %v2000 = vpack.c.b16 %v1976, %v1975
        %v2001 = vpack.c.b16 %v1978, %v1977
        %v2002 = vpack.c.b16 %v1980, %v1979
        %v2003 = vpack.c.b16 %v1982, %v1981
        %v2004 = vpack.c.b16 %v1984, %v1983
        %v2005 = vpack.c.b16 %v1986, %v1985
        %v2006 = vpack.c.b16 %v1988, %v1987
        %v2007 = vpack.c.b16 %v1990, %v1989
        %v2008 = vpack.c.b16 %v1992, %v1991
        %v2025 = vunpack.c.l.b16 %v1897
        %v2026 = vunpack.c.l.b16 %v1898
        %v2027 = vunpack.c.l.b16 %v1899
        %v2028 = vunpack.c.l.b16 %v1900
        %v2029 = vunpack.c.l.b16 %v1901
        %v2030 = vunpack.c.l.b16 %v1902
        %v2031 = vunpack.c.l.b16 %v1903
        %v2032 = vunpack.c.l.b16 %v1904
        %v2033 = vunpack.c.l.b16 %v1905
        %v2034 = vunpack.c.l.b16 %v1906
        %v2035 = vunpack.c.l.b16 %v1907
        %v2036 = vunpack.c.l.b16 %v1908
        %v2037 = vunpack.c.l.b16 %v1909
        %v2038 = vunpack.c.l.b16 %v1910
        %v2039 = vunpack.c.l.b16 %v1911
        %v2040 = vunpack.c.l.b16 %v1912
        %v2041 = vpack.c.b16 %v2025, %v2025
        %v2042 = vpack.c.b16 %v2026, %v2026
        %v2043 = vpack.c.b16 %v2027, %v2027
        %v2044 = vpack.c.b16 %v2028, %v2028
        %v2045 = vpack.c.b16 %v2029, %v2029
        %v2046 = vpack.c.b16 %v2030, %v2030
        %v2047 = vpack.c.b16 %v2031, %v2031
        %v2048 = vpack.c.b16 %v2032, %v2032
        %v2049 = vpack.c.b16 %v2033, %v2033
        %v2050 = vpack.c.b16 %v2034, %v2034
        %v2051 = vpack.c.b16 %v2035, %v2035
        %v2052 = vpack.c.b16 %v2036, %v2036
        %v2053 = vpack.c.b16 %v2037, %v2037
        %v2054 = vpack.c.b16 %v2038, %v2038
        %v2055 = vpack.c.b16 %v2039, %v2039
        %v2056 = vpack.c.b16 %v2040, %v2040
        %v2058 = vshrl.u32 %v1993, 16
        %v2060 = vshll.u32 %v1993, 16
        %v2062 = vrot.slane %v2060, 1
        %v2063 = vor.u32 %v2058, %v2062
        %v2065 = vshll.u32 %v2041, 16
        %v2067 = vrot.slane %v2065, 1
        %v2068 = vsel %vm416, %v2063, %v2067
        %v2070 = vshrl.u32 %v1994, 16
        %v2072 = vshll.u32 %v1994, 16
        %v2074 = vrot.slane %v2072, 1
        %v2075 = vor.u32 %v2070, %v2074
        %v2077 = vshll.u32 %v2042, 16
        %v2079 = vrot.slane %v2077, 1
        %v2080 = vsel %vm416, %v2075, %v2079
        %v2082 = vshrl.u32 %v1995, 16
        %v2084 = vshll.u32 %v1995, 16
        %v2086 = vrot.slane %v2084, 1
        %v2087 = vor.u32 %v2082, %v2086
        %v2089 = vshll.u32 %v2043, 16
        %v2091 = vrot.slane %v2089, 1
        %v2092 = vsel %vm416, %v2087, %v2091
        %v2094 = vshrl.u32 %v1996, 16
        %v2096 = vshll.u32 %v1996, 16
        %v2098 = vrot.slane %v2096, 1
        %v2099 = vor.u32 %v2094, %v2098
        %v2101 = vshll.u32 %v2044, 16
        %v2103 = vrot.slane %v2101, 1
        %v2104 = vsel %vm416, %v2099, %v2103
        %v2106 = vshrl.u32 %v1997, 16
        %v2108 = vshll.u32 %v1997, 16
        %v2110 = vrot.slane %v2108, 1
        %v2111 = vor.u32 %v2106, %v2110
        %v2113 = vshll.u32 %v2045, 16
        %v2115 = vrot.slane %v2113, 1
        %v2116 = vsel %vm416, %v2111, %v2115
        %v2118 = vshrl.u32 %v1998, 16
        %v2120 = vshll.u32 %v1998, 16
        %v2122 = vrot.slane %v2120, 1
        %v2123 = vor.u32 %v2118, %v2122
        %v2125 = vshll.u32 %v2046, 16
        %v2127 = vrot.slane %v2125, 1
        %v2128 = vsel %vm416, %v2123, %v2127
        %v2130 = vshrl.u32 %v1999, 16
        %v2132 = vshll.u32 %v1999, 16
        %v2134 = vrot.slane %v2132, 1
        %v2135 = vor.u32 %v2130, %v2134
        %v2137 = vshll.u32 %v2047, 16
        %v2139 = vrot.slane %v2137, 1
        %v2140 = vsel %vm416, %v2135, %v2139
        %v2142 = vshrl.u32 %v2000, 16
        %v2144 = vshll.u32 %v2000, 16
        %v2146 = vrot.slane %v2144, 1
        %v2147 = vor.u32 %v2142, %v2146
        %v2149 = vshll.u32 %v2048, 16
        %v2151 = vrot.slane %v2149, 1
        %v2152 = vsel %vm416, %v2147, %v2151
        %v2154 = vshrl.u32 %v2001, 16
        %v2156 = vshll.u32 %v2001, 16
        %v2158 = vrot.slane %v2156, 1
        %v2159 = vor.u32 %v2154, %v2158
        %v2161 = vshll.u32 %v2049, 16
        %v2163 = vrot.slane %v2161, 1
        %v2164 = vsel %vm416, %v2159, %v2163
        %v2166 = vshrl.u32 %v2002, 16
        %v2168 = vshll.u32 %v2002, 16
        %v2170 = vrot.slane %v2168, 1
        %v2171 = vor.u32 %v2166, %v2170
        %v2173 = vshll.u32 %v2050, 16
        %v2175 = vrot.slane %v2173, 1
        %v2176 = vsel %vm416, %v2171, %v2175
        %v2178 = vshrl.u32 %v2003, 16
        %v2180 = vshll.u32 %v2003, 16
        %v2182 = vrot.slane %v2180, 1
        %v2183 = vor.u32 %v2178, %v2182
        %v2185 = vshll.u32 %v2051, 16
        %v2187 = vrot.slane %v2185, 1
        %v2188 = vsel %vm416, %v2183, %v2187
        %v2190 = vshrl.u32 %v2004, 16
        %v2192 = vshll.u32 %v2004, 16
        %v2194 = vrot.slane %v2192, 1
        %v2195 = vor.u32 %v2190, %v2194
        %v2197 = vshll.u32 %v2052, 16
        %v2199 = vrot.slane %v2197, 1
        %v2200 = vsel %vm416, %v2195, %v2199
        %v2202 = vshrl.u32 %v2005, 16
        %v2204 = vshll.u32 %v2005, 16
        %v2206 = vrot.slane %v2204, 1
        %v2207 = vor.u32 %v2202, %v2206
        %v2209 = vshll.u32 %v2053, 16
        %v2211 = vrot.slane %v2209, 1
        %v2212 = vsel %vm416, %v2207, %v2211
        %v2214 = vshrl.u32 %v2006, 16
        %v2216 = vshll.u32 %v2006, 16
        %v2218 = vrot.slane %v2216, 1
        %v2219 = vor.u32 %v2214, %v2218
        %v2221 = vshll.u32 %v2054, 16
        %v2223 = vrot.slane %v2221, 1
        %v2224 = vsel %vm416, %v2219, %v2223
        %v2226 = vshrl.u32 %v2007, 16
        %v2228 = vshll.u32 %v2007, 16
        %v2230 = vrot.slane %v2228, 1
        %v2231 = vor.u32 %v2226, %v2230
        %v2233 = vshll.u32 %v2055, 16
        %v2235 = vrot.slane %v2233, 1
        %v2236 = vsel %vm416, %v2231, %v2235
        %v2238 = vshrl.u32 %v2008, 16
        %v2240 = vshll.u32 %v2008, 16
        %v2242 = vrot.slane %v2240, 1
        %v2243 = vor.u32 %v2238, %v2242
        %v2245 = vshll.u32 %v2056, 16
        %v2247 = vrot.slane %v2245, 1
        %v2248 = vsel %vm416, %v2243, %v2247
        %2249 = vrot.lane.b32.xlu0 %v2068, 6
        %v2250 = vpop.permute.xlu0 %2249
        %2251 = vrot.lane.b32.xlu0 %v2080, 6
        %v2252 = vpop.permute.xlu0 %2251
        %2253 = vrot.lane.b32.xlu0 %v2092, 6
        %v2254 = vpop.permute.xlu0 %2253
        %2255 = vrot.lane.b32.xlu0 %v2104, 6
        %v2256 = vpop.permute.xlu0 %2255
        %2257 = vrot.lane.b32.xlu0 %v2116, 6
        %v2258 = vpop.permute.xlu0 %2257
        %2259 = vrot.lane.b32.xlu0 %v2128, 6
        %v2260 = vpop.permute.xlu0 %2259
        %2261 = vrot.lane.b32.xlu0 %v2140, 6
        %v2262 = vpop.permute.xlu0 %2261
        %2263 = vrot.lane.b32.xlu0 %v2152, 6
        %v2264 = vpop.permute.xlu0 %2263
        %2265 = vrot.lane.b32.xlu0 %v2164, 6
        %v2266 = vpop.permute.xlu0 %2265
        %2267 = vrot.lane.b32.xlu0 %v2176, 6
        %v2268 = vpop.permute.xlu0 %2267
        %2269 = vrot.lane.b32.xlu0 %v2188, 6
        %v2270 = vpop.permute.xlu0 %2269
        %2271 = vrot.lane.b32.xlu0 %v2200, 6
        %v2272 = vpop.permute.xlu0 %2271
        %2273 = vrot.lane.b32.xlu0 %v2212, 6
        %v2274 = vpop.permute.xlu0 %2273
        %2275 = vrot.lane.b32.xlu0 %v2224, 6
        %v2276 = vpop.permute.xlu0 %2275
        %2277 = vrot.lane.b32.xlu0 %v2236, 6
        %v2278 = vpop.permute.xlu0 %2277
        %2279 = vrot.lane.b32.xlu0 %v2248, 6
        %v2280 = vpop.permute.xlu0 %2279
        %v2297 = vunpack.c.l.b16 %v1913
        %v2298 = vunpack.c.l.b16 %v1914
        %v2299 = vunpack.c.l.b16 %v1915
        %v2300 = vunpack.c.l.b16 %v1916
        %v2301 = vunpack.c.l.b16 %v1917
        %v2302 = vunpack.c.l.b16 %v1918
        %v2303 = vunpack.c.l.b16 %v1919
        %v2304 = vunpack.c.l.b16 %v1920
        %v2305 = vunpack.c.l.b16 %v1921
        %v2306 = vunpack.c.l.b16 %v1922
        %v2307 = vunpack.c.l.b16 %v1923
        %v2308 = vunpack.c.l.b16 %v1924
        %v2309 = vunpack.c.l.b16 %v1925
        %v2310 = vunpack.c.l.b16 %v1926
        %v2311 = vunpack.c.l.b16 %v1927
        %v2312 = vunpack.c.l.b16 %v1928
        %v2313 = vpack.c.b16 %v1962, %v2297
        %v2314 = vpack.c.b16 %v1964, %v2298
        %v2315 = vpack.c.b16 %v1966, %v2299
        %v2316 = vpack.c.b16 %v1968, %v2300
        %v2317 = vpack.c.b16 %v1970, %v2301
        %v2318 = vpack.c.b16 %v1972, %v2302
        %v2319 = vpack.c.b16 %v1974, %v2303
        %v2320 = vpack.c.b16 %v1976, %v2304
        %v2321 = vpack.c.b16 %v1978, %v2305
        %v2322 = vpack.c.b16 %v1980, %v2306
        %v2323 = vpack.c.b16 %v1982, %v2307
        %v2324 = vpack.c.b16 %v1984, %v2308
        %v2325 = vpack.c.b16 %v1986, %v2309
        %v2326 = vpack.c.b16 %v1988, %v2310
        %v2327 = vpack.c.b16 %v1990, %v2311
        %v2328 = vpack.c.b16 %v1992, %v2312
        %v2329 = vrot.slane %v2313, 1
        %v2330 = vrot.slane %v2041, 1
        %v2331 = vsel %vm689, %v2329, %v2330
        %v2332 = vrot.slane %v2314, 1
        %v2333 = vrot.slane %v2042, 1
        %v2334 = vsel %vm689, %v2332, %v2333
        %v2335 = vrot.slane %v2315, 1
        %v2336 = vrot.slane %v2043, 1
        %v2337 = vsel %vm689, %v2335, %v2336
        %v2338 = vrot.slane %v2316, 1
        %v2339 = vrot.slane %v2044, 1
        %v2340 = vsel %vm689, %v2338, %v2339
        %v2341 = vrot.slane %v2317, 1
        %v2342 = vrot.slane %v2045, 1
        %v2343 = vsel %vm689, %v2341, %v2342
        %v2344 = vrot.slane %v2318, 1
        %v2345 = vrot.slane %v2046, 1
        %v2346 = vsel %vm689, %v2344, %v2345
        %v2347 = vrot.slane %v2319, 1
        %v2348 = vrot.slane %v2047, 1
        %v2349 = vsel %vm689, %v2347, %v2348
        %v2350 = vrot.slane %v2320, 1
        %v2351 = vrot.slane %v2048, 1
        %v2352 = vsel %vm689, %v2350, %v2351
        %v2353 = vrot.slane %v2321, 1
        %v2354 = vrot.slane %v2049, 1
        %v2355 = vsel %vm689, %v2353, %v2354
        %v2356 = vrot.slane %v2322, 1
        %v2357 = vrot.slane %v2050, 1
        %v2358 = vsel %vm689, %v2356, %v2357
        %v2359 = vrot.slane %v2323, 1
        %v2360 = vrot.slane %v2051, 1
        %v2361 = vsel %vm689, %v2359, %v2360
        %v2362 = vrot.slane %v2324, 1
        %v2363 = vrot.slane %v2052, 1
        %v2364 = vsel %vm689, %v2362, %v2363
        %v2365 = vrot.slane %v2325, 1
        %v2366 = vrot.slane %v2053, 1
        %v2367 = vsel %vm689, %v2365, %v2366
        %v2368 = vrot.slane %v2326, 1
        %v2369 = vrot.slane %v2054, 1
        %v2370 = vsel %vm689, %v2368, %v2369
        %v2371 = vrot.slane %v2327, 1
        %v2372 = vrot.slane %v2055, 1
        %v2373 = vsel %vm689, %v2371, %v2372
        %v2374 = vrot.slane %v2328, 1
        %v2375 = vrot.slane %v2056, 1
        %v2376 = vsel %vm689, %v2374, %v2375
        %2377 = vrot.lane.b32.xlu0 %v2331, 12
        %v2378 = vpop.permute.xlu0 %2377
        %2379 = vrot.lane.b32.xlu0 %v2334, 12
        %v2380 = vpop.permute.xlu0 %2379
        %2381 = vrot.lane.b32.xlu0 %v2337, 12
        %v2382 = vpop.permute.xlu0 %2381
        %2383 = vrot.lane.b32.xlu0 %v2340, 12
        %v2384 = vpop.permute.xlu0 %2383
        %2385 = vrot.lane.b32.xlu0 %v2343, 12
        %v2386 = vpop.permute.xlu0 %2385
        %2387 = vrot.lane.b32.xlu0 %v2346, 12
        %v2388 = vpop.permute.xlu0 %2387
        %2389 = vrot.lane.b32.xlu0 %v2349, 12
        %v2390 = vpop.permute.xlu0 %2389
        %2391 = vrot.lane.b32.xlu0 %v2352, 12
        %v2392 = vpop.permute.xlu0 %2391
        %2393 = vrot.lane.b32.xlu0 %v2355, 12
        %v2394 = vpop.permute.xlu0 %2393
        %2395 = vrot.lane.b32.xlu0 %v2358, 12
        %v2396 = vpop.permute.xlu0 %2395
        %2397 = vrot.lane.b32.xlu0 %v2361, 12
        %v2398 = vpop.permute.xlu0 %2397
        %2399 = vrot.lane.b32.xlu0 %v2364, 12
        %v2400 = vpop.permute.xlu0 %2399
        %2401 = vrot.lane.b32.xlu0 %v2367, 12
        %v2402 = vpop.permute.xlu0 %2401
        %2403 = vrot.lane.b32.xlu0 %v2370, 12
        %v2404 = vpop.permute.xlu0 %2403
        %2405 = vrot.lane.b32.xlu0 %v2373, 12
        %v2406 = vpop.permute.xlu0 %2405
        %2407 = vrot.lane.b32.xlu0 %v2376, 12
        %v2408 = vpop.permute.xlu0 %2407
        %v2410 = vsel %vm770, %v1993, %v2250
        %v2412 = vsel %vm770, %v1994, %v2252
        %v2414 = vsel %vm770, %v1995, %v2254
        %v2416 = vsel %vm770, %v1996, %v2256
        %v2418 = vsel %vm770, %v1997, %v2258
        %v2420 = vsel %vm770, %v1998, %v2260
        %v2422 = vsel %vm770, %v1999, %v2262
        %v2424 = vsel %vm770, %v2000, %v2264
        %v2426 = vsel %vm770, %v2001, %v2266
        %v2428 = vsel %vm770, %v2002, %v2268
        %v2430 = vsel %vm770, %v2003, %v2270
        %v2432 = vsel %vm770, %v2004, %v2272
        %v2434 = vsel %vm770, %v2005, %v2274
        %v2436 = vsel %vm770, %v2006, %v2276
        %v2438 = vsel %vm770, %v2007, %v2278
        %v2440 = vsel %vm770, %v2008, %v2280
        %v2442 = vsel %vm803, %v2410, %v2378
        %v2444 = vsel %vm803, %v2412, %v2380
        %v2446 = vsel %vm803, %v2414, %v2382
        %v2448 = vsel %vm803, %v2416, %v2384
        %v2450 = vsel %vm803, %v2418, %v2386
        %v2452 = vsel %vm803, %v2420, %v2388
        %v2454 = vsel %vm803, %v2422, %v2390
        %v2456 = vsel %vm803, %v2424, %v2392
        %v2458 = vsel %vm803, %v2426, %v2394
        %v2460 = vsel %vm803, %v2428, %v2396
        %v2462 = vsel %vm803, %v2430, %v2398
        %v2464 = vsel %vm803, %v2432, %v2400
        %v2466 = vsel %vm803, %v2434, %v2402
        %v2468 = vsel %vm803, %v2436, %v2404
        %v2470 = vsel %vm803, %v2438, %v2406
        %v2472 = vsel %vm803, %v2440, %v2408
        %s2473 = scalar_lea.vmem %s1, 24
        %v2474 = vld [vmem:[%s2473] sm:$0xf]
        %v2475 = vld [vmem:[%s2473 + $0x4] sm:$0xf]
        %v2476 = vld [vmem:[%s2473 + $0x8] sm:$0x1]
        %v2480 = vunpack.c.l.b16 %v2474
        %v2481 = vunpack.c.l.b16 %v2475
        %v2482 = vunpack.c.l.b16 %v2476
        %v2483 = vpack.c.b16 %v2481, %v2480
        %v2484 = vpack.c.b16 %v2482, %v2482
        %v2486 = vsel %vm1461, %v2442, 0
        %v2488 = vsel %vm1461, %v2444, 0
        %v2490 = vsel %vm1461, %v2446, 0
        %v2492 = vsel %vm1461, %v2448, 0
        %v2494 = vsel %vm1461, %v2450, 0
        %v2496 = vsel %vm1461, %v2452, 0
        %v2498 = vsel %vm1461, %v2454, 0
        %v2500 = vsel %vm1461, %v2456, 0
        %v2502 = vsel %vm1461, %v2458, 0
        %v2504 = vsel %vm1461, %v2460, 0
        %v2506 = vsel %vm1461, %v2462, 0
        %v2508 = vsel %vm1461, %v2464, 0
        %v2510 = vsel %vm1461, %v2466, 0
        %v2512 = vsel %vm1461, %v2468, 0
        %v2514 = vsel %vm1461, %v2470, 0
        %v2516 = vsel %vm1461, %v2472, 0
        %v2519 = vsel %vm1494, %v2484, 0
        %2521 = vmatprep.subr.bf16.mxu0 0
        %2522 = vmatpush1.bf16.msra.mxu0 %v2483
        %2523 = vmatprep.subr.bf16.mxu0 0
        %2524 = vmatpush1.bf16.msra.mxu0 %v2519
        %2525 = vmatprep.subr.bf16.mxu0 0
        %2526 = vmatpush1.bf16.msra.mxu0 0
        %2527 = vmatprep.subr.bf16.mxu0 0
        %2528 = vmatpush1.bf16.msra.mxu0 0
        %2529 = vmatprep.subr.bf16.mxu0 0
        %2530 = vmatpush1.bf16.msra.mxu0 0
        %2531 = vmatprep.subr.bf16.mxu0 0
        %2532 = vmatpush1.bf16.msra.mxu0 0
        %2533 = vmatprep.subr.bf16.mxu0 0
        %2534 = vmatpush1.bf16.msra.mxu0 0
        %2535 = vmatprep.subr.bf16.mxu0 0
        %2536 = vmatpush1.bf16.msra.mxu0 0
        %2537 = vmatprep.subr.bf16.mxu0 0
        %2538 = vmatpush1.bf16.msra.mxu0 0
        %2539 = vmatprep.subr.bf16.mxu0 0
        %2540 = vmatpush1.bf16.msra.mxu0 0
        %2541 = vmatprep.subr.bf16.mxu0 0
        %2542 = vmatpush1.bf16.msra.mxu0 0
        %2543 = vmatprep.subr.bf16.mxu0 0
        %2544 = vmatpush1.bf16.msra.mxu0 0
        %2545 = vmatprep.subr.bf16.mxu0 0
        %2546 = vmatpush1.bf16.msra.mxu0 0
        %2547 = vmatprep.subr.bf16.mxu0 0
        %2548 = vmatpush1.bf16.msra.mxu0 0
        %2549 = vmatprep.subr.bf16.mxu0 0
        %2550 = vmatpush1.bf16.msra.mxu0 0
        %2551 = vmatprep.subr.bf16.mxu0 0
        %2552 = vmatpush1.bf16.msra.mxu0 0
        %2553 = vmatprep.mubr.bf16.mxu0 0
        %2554 = vmatmul.mubr.bf16.gmra.mrb[0].mxu0 %v2486
        %v2555 = vpop.f32.mrb[0].mxu0
        %v2556 = vadd.f32 0.0, %v2555
        %v2557 = vpop.f32.mrb[0].mxu0
        %v2558 = vpop.f32.mrb[0].mxu0
        %v2559 = vadd.f32 0.0, %v2558
        %v2560 = vpop.f32.mrb[0].mxu0
        %2561 = vmatprep.mubr.bf16.mxu0 0
        %2562 = vmatmul.mubr.bf16.gmra.mrb[0].mxu0 %v2488
        %v2563 = vpop.f32.mrb[0].mxu0
        %v2564 = vadd.f32 0.0, %v2563
        %v2565 = vpop.f32.mrb[0].mxu0
        %v2566 = vpop.f32.mrb[0].mxu0
        %v2567 = vadd.f32 0.0, %v2566
        %v2568 = vpop.f32.mrb[0].mxu0
        %2569 = vmatprep.mubr.bf16.mxu0 0
        %2570 = vmatmul.mubr.bf16.gmra.mrb[0].mxu0 %v2490
        %v2571 = vpop.f32.mrb[0].mxu0
        %v2572 = vadd.f32 0.0, %v2571
        %v2573 = vpop.f32.mrb[0].mxu0
        %v2574 = vpop.f32.mrb[0].mxu0
        %v2575 = vadd.f32 0.0, %v2574
        %v2576 = vpop.f32.mrb[0].mxu0
        %2577 = vmatprep.mubr.bf16.mxu0 0
        %2578 = vmatmul.mubr.bf16.gmra.mrb[0].mxu0 %v2492
        %v2579 = vpop.f32.mrb[0].mxu0
        %v2580 = vadd.f32 0.0, %v2579
        %v2581 = vpop.f32.mrb[0].mxu0
        %v2582 = vpop.f32.mrb[0].mxu0
        %v2583 = vadd.f32 0.0, %v2582
        %v2584 = vpop.f32.mrb[0].mxu0
        %2585 = vmatprep.mubr.bf16.mxu0 0
        %2586 = vmatmul.mubr.bf16.gmra.mrb[0].mxu0 %v2494
        %v2587 = vpop.f32.mrb[0].mxu0
        %v2588 = vadd.f32 0.0, %v2587
        %v2589 = vpop.f32.mrb[0].mxu0
        %v2590 = vpop.f32.mrb[0].mxu0
        %v2591 = vadd.f32 0.0, %v2590
        %v2592 = vpop.f32.mrb[0].mxu0
        %2593 = vmatprep.mubr.bf16.mxu0 0
        %2594 = vmatmul.mubr.bf16.gmra.mrb[0].mxu0 %v2496
        %v2595 = vpop.f32.mrb[0].mxu0
        %v2596 = vadd.f32 0.0, %v2595
        %v2597 = vpop.f32.mrb[0].mxu0
        %v2598 = vpop.f32.mrb[0].mxu0
        %v2599 = vadd.f32 0.0, %v2598
        %v2600 = vpop.f32.mrb[0].mxu0
        %2601 = vmatprep.mubr.bf16.mxu0 0
        %2602 = vmatmul.mubr.bf16.gmra.mrb[0].mxu0 %v2498
        %v2603 = vpop.f32.mrb[0].mxu0
        %v2604 = vadd.f32 0.0, %v2603
        %v2605 = vpop.f32.mrb[0].mxu0
        %v2606 = vpop.f32.mrb[0].mxu0
        %v2607 = vadd.f32 0.0, %v2606
        %v2608 = vpop.f32.mrb[0].mxu0
        %2609 = vmatprep.mubr.bf16.mxu0 0
        %2610 = vmatmul.mubr.bf16.gmra.mrb[0].mxu0 %v2500
        %v2611 = vpop.f32.mrb[0].mxu0
        %v2612 = vadd.f32 0.0, %v2611
        %v2613 = vpop.f32.mrb[0].mxu0
        %v2614 = vpop.f32.mrb[0].mxu0
        %v2615 = vadd.f32 0.0, %v2614
        %v2616 = vpop.f32.mrb[0].mxu0
        %2617 = vmatprep.mubr.bf16.mxu0 0
        %2618 = vmatmul.mubr.bf16.gmra.mrb[0].mxu0 %v2502
        %v2619 = vpop.f32.mrb[0].mxu0
        %v2620 = vadd.f32 0.0, %v2619
        %v2621 = vpop.f32.mrb[0].mxu0
        %v2622 = vpop.f32.mrb[0].mxu0
        %v2623 = vadd.f32 0.0, %v2622
        %v2624 = vpop.f32.mrb[0].mxu0
        %2625 = vmatprep.mubr.bf16.mxu0 0
        %2626 = vmatmul.mubr.bf16.gmra.mrb[0].mxu0 %v2504
        %v2627 = vpop.f32.mrb[0].mxu0
        %v2628 = vadd.f32 0.0, %v2627
        %v2629 = vpop.f32.mrb[0].mxu0
        %v2630 = vpop.f32.mrb[0].mxu0
        %v2631 = vadd.f32 0.0, %v2630
        %v2632 = vpop.f32.mrb[0].mxu0
        %2633 = vmatprep.mubr.bf16.mxu0 0
        %2634 = vmatmul.mubr.bf16.gmra.mrb[0].mxu0 %v2506
        %v2635 = vpop.f32.mrb[0].mxu0
        %v2636 = vadd.f32 0.0, %v2635
        %v2637 = vpop.f32.mrb[0].mxu0
        %v2638 = vpop.f32.mrb[0].mxu0
        %v2639 = vadd.f32 0.0, %v2638
        %v2640 = vpop.f32.mrb[0].mxu0
        %2641 = vmatprep.mubr.bf16.mxu0 0
        %2642 = vmatmul.mubr.bf16.gmra.mrb[0].mxu0 %v2508
        %v2643 = vpop.f32.mrb[0].mxu0
        %v2644 = vadd.f32 0.0, %v2643
        %v2645 = vpop.f32.mrb[0].mxu0
        %v2646 = vpop.f32.mrb[0].mxu0
        %v2647 = vadd.f32 0.0, %v2646
        %v2648 = vpop.f32.mrb[0].mxu0
        %2649 = vmatprep.mubr.bf16.mxu0 0
        %2650 = vmatmul.mubr.bf16.gmra.mrb[0].mxu0 %v2510
        %v2651 = vpop.f32.mrb[0].mxu0
        %v2652 = vadd.f32 0.0, %v2651
        %v2653 = vpop.f32.mrb[0].mxu0
        %v2654 = vpop.f32.mrb[0].mxu0
        %v2655 = vadd.f32 0.0, %v2654
        %v2656 = vpop.f32.mrb[0].mxu0
        %2657 = vmatprep.mubr.bf16.mxu0 0
        %2658 = vmatmul.mubr.bf16.gmra.mrb[0].mxu0 %v2512
        %v2659 = vpop.f32.mrb[0].mxu0
        %v2660 = vadd.f32 0.0, %v2659
        %v2661 = vpop.f32.mrb[0].mxu0
        %v2662 = vpop.f32.mrb[0].mxu0
        %v2663 = vadd.f32 0.0, %v2662
        %v2664 = vpop.f32.mrb[0].mxu0
        %2665 = vmatprep.mubr.bf16.mxu0 0
        %2666 = vmatmul.mubr.bf16.gmra.mrb[0].mxu0 %v2514
        %v2667 = vpop.f32.mrb[0].mxu0
        %v2668 = vadd.f32 0.0, %v2667
        %v2669 = vpop.f32.mrb[0].mxu0
        %v2670 = vpop.f32.mrb[0].mxu0
        %v2671 = vadd.f32 0.0, %v2670
        %v2672 = vpop.f32.mrb[0].mxu0
        %2673 = vmatprep.mubr.bf16.mxu0 0
        %2674 = vmatmul.mubr.bf16.gmra.mrb[0].mxu0 %v2516
        %v2675 = vpop.f32.mrb[0].mxu0
        %v2676 = vadd.f32 0.0, %v2675
        %v2677 = vpop.f32.mrb[0].mxu0
        %v2678 = vpop.f32.mrb[0].mxu0
        %v2679 = vadd.f32 0.0, %v2678
        %v2680 = vpop.f32.mrb[0].mxu0
        %2681 = vdwg.mxu0
        %v2682 = vadd.f32 %v1738, %v2556
        %v2683 = vadd.f32 %v1741, %v2559
        %v2684 = vadd.f32 %v1746, %v2564
        %v2685 = vadd.f32 %v1749, %v2567
        %v2686 = vadd.f32 %v1754, %v2572
        %v2687 = vadd.f32 %v1757, %v2575
        %v2688 = vadd.f32 %v1762, %v2580
        %v2689 = vadd.f32 %v1765, %v2583
        %v2690 = vadd.f32 %v1770, %v2588
        %v2691 = vadd.f32 %v1773, %v2591
        %v2692 = vadd.f32 %v1778, %v2596
        %v2693 = vadd.f32 %v1781, %v2599
        %v2694 = vadd.f32 %v1786, %v2604
        %v2695 = vadd.f32 %v1789, %v2607
        %v2696 = vadd.f32 %v1794, %v2612
        %v2697 = vadd.f32 %v1797, %v2615
        %v2698 = vadd.f32 %v1802, %v2620
        %v2699 = vadd.f32 %v1805, %v2623
        %v2700 = vadd.f32 %v1810, %v2628
        %v2701 = vadd.f32 %v1813, %v2631
        %v2702 = vadd.f32 %v1818, %v2636
        %v2703 = vadd.f32 %v1821, %v2639
        %v2704 = vadd.f32 %v1826, %v2644
        %v2705 = vadd.f32 %v1829, %v2647
        %v2706 = vadd.f32 %v1834, %v2652
        %v2707 = vadd.f32 %v1837, %v2655
        %v2708 = vadd.f32 %v1842, %v2660
        %v2709 = vadd.f32 %v1845, %v2663
        %v2710 = vadd.f32 %v1850, %v2668
        %v2711 = vadd.f32 %v1853, %v2671
        %v2712 = vadd.f32 %v1858, %v2676
        %v2713 = vadd.f32 %v1861, %v2679
        %v2714 = vld [vmem:[%s2] sm:$0x1]
        %v2716 = vlaneseq
        %v2717 = vshrl.u32 %v2716, 7
        %v2718 = vsub.s32 0, %v2717
        %v2719 = vrot.slane %v2714, %v2718
        %v2721 = vadd.f32 %v2682, %v2719
        %v2722 = vadd.f32 %v2683, %v2719
        %v2723 = vadd.f32 %v2684, %v2719
        %v2724 = vadd.f32 %v2685, %v2719
        %v2725 = vadd.f32 %v2686, %v2719
        %v2726 = vadd.f32 %v2687, %v2719
        %v2727 = vadd.f32 %v2688, %v2719
        %v2728 = vadd.f32 %v2689, %v2719
        %v2729 = vadd.f32 %v2690, %v2719
        %v2730 = vadd.f32 %v2691, %v2719
        %v2731 = vadd.f32 %v2692, %v2719
        %v2732 = vadd.f32 %v2693, %v2719
        %v2733 = vadd.f32 %v2694, %v2719
        %v2734 = vadd.f32 %v2695, %v2719
        %v2735 = vadd.f32 %v2696, %v2719
        %v2736 = vadd.f32 %v2697, %v2719
        %v2737 = vadd.f32 %v2698, %v2719
        %v2738 = vadd.f32 %v2699, %v2719
        %v2739 = vadd.f32 %v2700, %v2719
        %v2740 = vadd.f32 %v2701, %v2719
        %v2741 = vadd.f32 %v2702, %v2719
        %v2742 = vadd.f32 %v2703, %v2719
        %v2743 = vadd.f32 %v2704, %v2719
        %v2744 = vadd.f32 %v2705, %v2719
        %v2745 = vadd.f32 %v2706, %v2719
        %v2746 = vadd.f32 %v2707, %v2719
        %v2747 = vadd.f32 %v2708, %v2719
        %v2748 = vadd.f32 %v2709, %v2719
        %v2749 = vadd.f32 %v2710, %v2719
        %v2750 = vadd.f32 %v2711, %v2719
        %v2751 = vadd.f32 %v2712, %v2719
        %v2752 = vadd.f32 %v2713, %v2719
        %v2753 = vmax.f32 %v2721, 0.0
        %v2754 = vmax.f32 %v2722, 0.0
        %v2755 = vmax.f32 %v2723, 0.0
        %v2756 = vmax.f32 %v2724, 0.0
        %v2757 = vmax.f32 %v2725, 0.0
        %v2758 = vmax.f32 %v2726, 0.0
        %v2759 = vmax.f32 %v2727, 0.0
        %v2760 = vmax.f32 %v2728, 0.0
        %v2761 = vmax.f32 %v2729, 0.0
        %v2762 = vmax.f32 %v2730, 0.0
        %v2763 = vmax.f32 %v2731, 0.0
        %v2764 = vmax.f32 %v2732, 0.0
        %v2765 = vmax.f32 %v2733, 0.0
        %v2766 = vmax.f32 %v2734, 0.0
        %v2767 = vmax.f32 %v2735, 0.0
        %v2768 = vmax.f32 %v2736, 0.0
        %v2769 = vmax.f32 %v2737, 0.0
        %v2770 = vmax.f32 %v2738, 0.0
        %v2771 = vmax.f32 %v2739, 0.0
        %v2772 = vmax.f32 %v2740, 0.0
        %v2773 = vmax.f32 %v2741, 0.0
        %v2774 = vmax.f32 %v2742, 0.0
        %v2775 = vmax.f32 %v2743, 0.0
        %v2776 = vmax.f32 %v2744, 0.0
        %v2777 = vmax.f32 %v2745, 0.0
        %v2778 = vmax.f32 %v2746, 0.0
        %v2779 = vmax.f32 %v2747, 0.0
        %v2780 = vmax.f32 %v2748, 0.0
        %v2781 = vmax.f32 %v2749, 0.0
        %v2782 = vmax.f32 %v2750, 0.0
        %v2783 = vmax.f32 %v2751, 0.0
        %v2784 = vmax.f32 %v2752, 0.0
        %v2817 = vcombine.high %v2753, %v2753
        %v2819 = vunpack.c.l.s4 1983009808
        %v2820 = vunpack.c.0.s8 %v2819
        %v2821 = vlaneseq
        %v2822 = vshrl.u32 %v2821, 7
        %v2823 = vsub.s32 %v2820, %v2822
        %v2824 = vrot.slane %v2753, %v2823
        %v2826 = vunpack.c.l.s4 1983009808
        %v2827 = vunpack.c.0.s8 %v2826
        %v2828 = vlaneseq
        %v2829 = vshrl.u32 %v2828, 7
        %v2830 = vsub.s32 %v2827, %v2829
        %v2831 = vrot.slane %v2817, %v2830
        %v2832 = vcombine.high %v2824, %v2824
        %v2833 = vcombine.high %v2831, %v2831
        %v2834 = vcombine.high %v2754, %v2754
        %v2836 = vunpack.c.l.s4 1983009808
        %v2837 = vunpack.c.0.s8 %v2836
        %v2838 = vlaneseq
        %v2839 = vshrl.u32 %v2838, 7
        %v2840 = vsub.s32 %v2837, %v2839
        %v2841 = vrot.slane %v2754, %v2840
        %v2843 = vunpack.c.l.s4 1983009808
        %v2844 = vunpack.c.0.s8 %v2843
        %v2845 = vlaneseq
        %v2846 = vshrl.u32 %v2845, 7
        %v2847 = vsub.s32 %v2844, %v2846
        %v2848 = vrot.slane %v2834, %v2847
        %v2849 = vcombine.high %v2841, %v2841
        %v2850 = vcombine.high %v2848, %v2848
        %v2851 = vcombine.high %v2755, %v2755
        %v2853 = vunpack.c.l.s4 1983009808
        %v2854 = vunpack.c.0.s8 %v2853
        %v2855 = vlaneseq
        %v2856 = vshrl.u32 %v2855, 7
        %v2857 = vsub.s32 %v2854, %v2856
        %v2858 = vrot.slane %v2755, %v2857
        %v2860 = vunpack.c.l.s4 1983009808
        %v2861 = vunpack.c.0.s8 %v2860
        %v2862 = vlaneseq
        %v2863 = vshrl.u32 %v2862, 7
        %v2864 = vsub.s32 %v2861, %v2863
        %v2865 = vrot.slane %v2851, %v2864
        %v2866 = vcombine.high %v2858, %v2858
        %v2867 = vcombine.high %v2865, %v2865
        %v2868 = vcombine.high %v2756, %v2756
        %v2870 = vunpack.c.l.s4 1983009808
        %v2871 = vunpack.c.0.s8 %v2870
        %v2872 = vlaneseq
        %v2873 = vshrl.u32 %v2872, 7
        %v2874 = vsub.s32 %v2871, %v2873
        %v2875 = vrot.slane %v2756, %v2874
        %v2877 = vunpack.c.l.s4 1983009808
        %v2878 = vunpack.c.0.s8 %v2877
        %v2879 = vlaneseq
        %v2880 = vshrl.u32 %v2879, 7
        %v2881 = vsub.s32 %v2878, %v2880
        %v2882 = vrot.slane %v2868, %v2881
        %v2883 = vcombine.high %v2875, %v2875
        %v2884 = vcombine.high %v2882, %v2882
        %v2885 = vcombine.high %v2757, %v2757
        %v2887 = vunpack.c.l.s4 1983009808
        %v2888 = vunpack.c.0.s8 %v2887
        %v2889 = vlaneseq
        %v2890 = vshrl.u32 %v2889, 7
        %v2891 = vsub.s32 %v2888, %v2890
        %v2892 = vrot.slane %v2757, %v2891
        %v2894 = vunpack.c.l.s4 1983009808
        %v2895 = vunpack.c.0.s8 %v2894
        %v2896 = vlaneseq
        %v2897 = vshrl.u32 %v2896, 7
        %v2898 = vsub.s32 %v2895, %v2897
        %v2899 = vrot.slane %v2885, %v2898
        %v2900 = vcombine.high %v2892, %v2892
        %v2901 = vcombine.high %v2899, %v2899
        %v2902 = vcombine.high %v2758, %v2758
        %v2904 = vunpack.c.l.s4 1983009808
        %v2905 = vunpack.c.0.s8 %v2904
        %v2906 = vlaneseq
        %v2907 = vshrl.u32 %v2906, 7
        %v2908 = vsub.s32 %v2905, %v2907
        %v2909 = vrot.slane %v2758, %v2908
        %v2911 = vunpack.c.l.s4 1983009808
        %v2912 = vunpack.c.0.s8 %v2911
        %v2913 = vlaneseq
        %v2914 = vshrl.u32 %v2913, 7
        %v2915 = vsub.s32 %v2912, %v2914
        %v2916 = vrot.slane %v2902, %v2915
        %v2917 = vcombine.high %v2909, %v2909
        %v2918 = vcombine.high %v2916, %v2916
        %v2919 = vcombine.high %v2759, %v2759
        %v2921 = vunpack.c.l.s4 1983009808
        %v2922 = vunpack.c.0.s8 %v2921
        %v2923 = vlaneseq
        %v2924 = vshrl.u32 %v2923, 7
        %v2925 = vsub.s32 %v2922, %v2924
        %v2926 = vrot.slane %v2759, %v2925
        %v2928 = vunpack.c.l.s4 1983009808
        %v2929 = vunpack.c.0.s8 %v2928
        %v2930 = vlaneseq
        %v2931 = vshrl.u32 %v2930, 7
        %v2932 = vsub.s32 %v2929, %v2931
        %v2933 = vrot.slane %v2919, %v2932
        %v2934 = vcombine.high %v2926, %v2926
        %v2935 = vcombine.high %v2933, %v2933
        %v2936 = vcombine.high %v2760, %v2760
        %v2938 = vunpack.c.l.s4 1983009808
        %v2939 = vunpack.c.0.s8 %v2938
        %v2940 = vlaneseq
        %v2941 = vshrl.u32 %v2940, 7
        %v2942 = vsub.s32 %v2939, %v2941
        %v2943 = vrot.slane %v2760, %v2942
        %v2945 = vunpack.c.l.s4 1983009808
        %v2946 = vunpack.c.0.s8 %v2945
        %v2947 = vlaneseq
        %v2948 = vshrl.u32 %v2947, 7
        %v2949 = vsub.s32 %v2946, %v2948
        %v2950 = vrot.slane %v2936, %v2949
        %v2951 = vcombine.high %v2943, %v2943
        %v2952 = vcombine.high %v2950, %v2950
        %v2953 = vcombine.high %v2761, %v2761
        %v2955 = vunpack.c.l.s4 1983009808
        %v2956 = vunpack.c.0.s8 %v2955
        %v2957 = vlaneseq
        %v2958 = vshrl.u32 %v2957, 7
        %v2959 = vsub.s32 %v2956, %v2958
        %v2960 = vrot.slane %v2761, %v2959
        %v2962 = vunpack.c.l.s4 1983009808
        %v2963 = vunpack.c.0.s8 %v2962
        %v2964 = vlaneseq
        %v2965 = vshrl.u32 %v2964, 7
        %v2966 = vsub.s32 %v2963, %v2965
        %v2967 = vrot.slane %v2953, %v2966
        %v2968 = vcombine.high %v2960, %v2960
        %v2969 = vcombine.high %v2967, %v2967
        %v2970 = vcombine.high %v2762, %v2762
        %v2972 = vunpack.c.l.s4 1983009808
        %v2973 = vunpack.c.0.s8 %v2972
        %v2974 = vlaneseq
        %v2975 = vshrl.u32 %v2974, 7
        %v2976 = vsub.s32 %v2973, %v2975
        %v2977 = vrot.slane %v2762, %v2976
        %v2979 = vunpack.c.l.s4 1983009808
        %v2980 = vunpack.c.0.s8 %v2979
        %v2981 = vlaneseq
        %v2982 = vshrl.u32 %v2981, 7
        %v2983 = vsub.s32 %v2980, %v2982
        %v2984 = vrot.slane %v2970, %v2983
        %v2985 = vcombine.high %v2977, %v2977
        %v2986 = vcombine.high %v2984, %v2984
        %v2987 = vcombine.high %v2763, %v2763
        %v2989 = vunpack.c.l.s4 1983009808
        %v2990 = vunpack.c.0.s8 %v2989
        %v2991 = vlaneseq
        %v2992 = vshrl.u32 %v2991, 7
        %v2993 = vsub.s32 %v2990, %v2992
        %v2994 = vrot.slane %v2763, %v2993
        %v2996 = vunpack.c.l.s4 1983009808
        %v2997 = vunpack.c.0.s8 %v2996
        %v2998 = vlaneseq
        %v2999 = vshrl.u32 %v2998, 7
        %v3000 = vsub.s32 %v2997, %v2999
        %v3001 = vrot.slane %v2987, %v3000
        %v3002 = vcombine.high %v2994, %v2994
        %v3003 = vcombine.high %v3001, %v3001
        %v3004 = vcombine.high %v2764, %v2764
        %v3006 = vunpack.c.l.s4 1983009808
        %v3007 = vunpack.c.0.s8 %v3006
        %v3008 = vlaneseq
        %v3009 = vshrl.u32 %v3008, 7
        %v3010 = vsub.s32 %v3007, %v3009
        %v3011 = vrot.slane %v2764, %v3010
        %v3013 = vunpack.c.l.s4 1983009808
        %v3014 = vunpack.c.0.s8 %v3013
        %v3015 = vlaneseq
        %v3016 = vshrl.u32 %v3015, 7
        %v3017 = vsub.s32 %v3014, %v3016
        %v3018 = vrot.slane %v3004, %v3017
        %v3019 = vcombine.high %v3011, %v3011
        %v3020 = vcombine.high %v3018, %v3018
        %v3021 = vcombine.high %v2765, %v2765
        %v3023 = vunpack.c.l.s4 1983009808
        %v3024 = vunpack.c.0.s8 %v3023
        %v3025 = vlaneseq
        %v3026 = vshrl.u32 %v3025, 7
        %v3027 = vsub.s32 %v3024, %v3026
        %v3028 = vrot.slane %v2765, %v3027
        %v3030 = vunpack.c.l.s4 1983009808
        %v3031 = vunpack.c.0.s8 %v3030
        %v3032 = vlaneseq
        %v3033 = vshrl.u32 %v3032, 7
        %v3034 = vsub.s32 %v3031, %v3033
        %v3035 = vrot.slane %v3021, %v3034
        %v3036 = vcombine.high %v3028, %v3028
        %v3037 = vcombine.high %v3035, %v3035
        %v3038 = vcombine.high %v2766, %v2766
        %v3040 = vunpack.c.l.s4 1983009808
        %v3041 = vunpack.c.0.s8 %v3040
        %v3042 = vlaneseq
        %v3043 = vshrl.u32 %v3042, 7
        %v3044 = vsub.s32 %v3041, %v3043
        %v3045 = vrot.slane %v2766, %v3044
        %v3047 = vunpack.c.l.s4 1983009808
        %v3048 = vunpack.c.0.s8 %v3047
        %v3049 = vlaneseq
        %v3050 = vshrl.u32 %v3049, 7
        %v3051 = vsub.s32 %v3048, %v3050
        %v3052 = vrot.slane %v3038, %v3051
        %v3053 = vcombine.high %v3045, %v3045
        %v3054 = vcombine.high %v3052, %v3052
        %v3055 = vcombine.high %v2767, %v2767
        %v3057 = vunpack.c.l.s4 1983009808
        %v3058 = vunpack.c.0.s8 %v3057
        %v3059 = vlaneseq
        %v3060 = vshrl.u32 %v3059, 7
        %v3061 = vsub.s32 %v3058, %v3060
        %v3062 = vrot.slane %v2767, %v3061
        %v3064 = vunpack.c.l.s4 1983009808
        %v3065 = vunpack.c.0.s8 %v3064
        %v3066 = vlaneseq
        %v3067 = vshrl.u32 %v3066, 7
        %v3068 = vsub.s32 %v3065, %v3067
        %v3069 = vrot.slane %v3055, %v3068
        %v3070 = vcombine.high %v3062, %v3062
        %v3071 = vcombine.high %v3069, %v3069
        %v3072 = vcombine.high %v2768, %v2768
        %v3074 = vunpack.c.l.s4 1983009808
        %v3075 = vunpack.c.0.s8 %v3074
        %v3076 = vlaneseq
        %v3077 = vshrl.u32 %v3076, 7
        %v3078 = vsub.s32 %v3075, %v3077
        %v3079 = vrot.slane %v2768, %v3078
        %v3081 = vunpack.c.l.s4 1983009808
        %v3082 = vunpack.c.0.s8 %v3081
        %v3083 = vlaneseq
        %v3084 = vshrl.u32 %v3083, 7
        %v3085 = vsub.s32 %v3082, %v3084
        %v3086 = vrot.slane %v3072, %v3085
        %v3087 = vcombine.high %v3079, %v3079
        %v3088 = vcombine.high %v3086, %v3086
        %v3089 = vcombine.high %v2769, %v2769
        %v3091 = vunpack.c.l.s4 1983009808
        %v3092 = vunpack.c.0.s8 %v3091
        %v3093 = vlaneseq
        %v3094 = vshrl.u32 %v3093, 7
        %v3095 = vsub.s32 %v3092, %v3094
        %v3096 = vrot.slane %v2769, %v3095
        %v3098 = vunpack.c.l.s4 1983009808
        %v3099 = vunpack.c.0.s8 %v3098
        %v3100 = vlaneseq
        %v3101 = vshrl.u32 %v3100, 7
        %v3102 = vsub.s32 %v3099, %v3101
        %v3103 = vrot.slane %v3089, %v3102
        %v3104 = vcombine.high %v3096, %v3096
        %v3105 = vcombine.high %v3103, %v3103
        %v3106 = vcombine.high %v2770, %v2770
        %v3108 = vunpack.c.l.s4 1983009808
        %v3109 = vunpack.c.0.s8 %v3108
        %v3110 = vlaneseq
        %v3111 = vshrl.u32 %v3110, 7
        %v3112 = vsub.s32 %v3109, %v3111
        %v3113 = vrot.slane %v2770, %v3112
        %v3115 = vunpack.c.l.s4 1983009808
        %v3116 = vunpack.c.0.s8 %v3115
        %v3117 = vlaneseq
        %v3118 = vshrl.u32 %v3117, 7
        %v3119 = vsub.s32 %v3116, %v3118
        %v3120 = vrot.slane %v3106, %v3119
        %v3121 = vcombine.high %v3113, %v3113
        %v3122 = vcombine.high %v3120, %v3120
        %v3123 = vcombine.high %v2771, %v2771
        %v3125 = vunpack.c.l.s4 1983009808
        %v3126 = vunpack.c.0.s8 %v3125
        %v3127 = vlaneseq
        %v3128 = vshrl.u32 %v3127, 7
        %v3129 = vsub.s32 %v3126, %v3128
        %v3130 = vrot.slane %v2771, %v3129
        %v3132 = vunpack.c.l.s4 1983009808
        %v3133 = vunpack.c.0.s8 %v3132
        %v3134 = vlaneseq
        %v3135 = vshrl.u32 %v3134, 7
        %v3136 = vsub.s32 %v3133, %v3135
        %v3137 = vrot.slane %v3123, %v3136
        %v3138 = vcombine.high %v3130, %v3130
        %v3139 = vcombine.high %v3137, %v3137
        %v3140 = vcombine.high %v2772, %v2772
        %v3142 = vunpack.c.l.s4 1983009808
        %v3143 = vunpack.c.0.s8 %v3142
        %v3144 = vlaneseq
        %v3145 = vshrl.u32 %v3144, 7
        %v3146 = vsub.s32 %v3143, %v3145
        %v3147 = vrot.slane %v2772, %v3146
        %v3149 = vunpack.c.l.s4 1983009808
        %v3150 = vunpack.c.0.s8 %v3149
        %v3151 = vlaneseq
        %v3152 = vshrl.u32 %v3151, 7
        %v3153 = vsub.s32 %v3150, %v3152
        %v3154 = vrot.slane %v3140, %v3153
        %v3155 = vcombine.high %v3147, %v3147
        %v3156 = vcombine.high %v3154, %v3154
        %v3157 = vcombine.high %v2773, %v2773
        %v3159 = vunpack.c.l.s4 1983009808
        %v3160 = vunpack.c.0.s8 %v3159
        %v3161 = vlaneseq
        %v3162 = vshrl.u32 %v3161, 7
        %v3163 = vsub.s32 %v3160, %v3162
        %v3164 = vrot.slane %v2773, %v3163
        %v3166 = vunpack.c.l.s4 1983009808
        %v3167 = vunpack.c.0.s8 %v3166
        %v3168 = vlaneseq
        %v3169 = vshrl.u32 %v3168, 7
        %v3170 = vsub.s32 %v3167, %v3169
        %v3171 = vrot.slane %v3157, %v3170
        %v3172 = vcombine.high %v3164, %v3164
        %v3173 = vcombine.high %v3171, %v3171
        %v3174 = vcombine.high %v2774, %v2774
        %v3176 = vunpack.c.l.s4 1983009808
        %v3177 = vunpack.c.0.s8 %v3176
        %v3178 = vlaneseq
        %v3179 = vshrl.u32 %v3178, 7
        %v3180 = vsub.s32 %v3177, %v3179
        %v3181 = vrot.slane %v2774, %v3180
        %v3183 = vunpack.c.l.s4 1983009808
        %v3184 = vunpack.c.0.s8 %v3183
        %v3185 = vlaneseq
        %v3186 = vshrl.u32 %v3185, 7
        %v3187 = vsub.s32 %v3184, %v3186
        %v3188 = vrot.slane %v3174, %v3187
        %v3189 = vcombine.high %v3181, %v3181
        %v3190 = vcombine.high %v3188, %v3188
        %v3191 = vcombine.high %v2775, %v2775
        %v3193 = vunpack.c.l.s4 1983009808
        %v3194 = vunpack.c.0.s8 %v3193
        %v3195 = vlaneseq
        %v3196 = vshrl.u32 %v3195, 7
        %v3197 = vsub.s32 %v3194, %v3196
        %v3198 = vrot.slane %v2775, %v3197
        %v3200 = vunpack.c.l.s4 1983009808
        %v3201 = vunpack.c.0.s8 %v3200
        %v3202 = vlaneseq
        %v3203 = vshrl.u32 %v3202, 7
        %v3204 = vsub.s32 %v3201, %v3203
        %v3205 = vrot.slane %v3191, %v3204
        %v3206 = vcombine.high %v3198, %v3198
        %v3207 = vcombine.high %v3205, %v3205
        %v3208 = vcombine.high %v2776, %v2776
        %v3210 = vunpack.c.l.s4 1983009808
        %v3211 = vunpack.c.0.s8 %v3210
        %v3212 = vlaneseq
        %v3213 = vshrl.u32 %v3212, 7
        %v3214 = vsub.s32 %v3211, %v3213
        %v3215 = vrot.slane %v2776, %v3214
        %v3217 = vunpack.c.l.s4 1983009808
        %v3218 = vunpack.c.0.s8 %v3217
        %v3219 = vlaneseq
        %v3220 = vshrl.u32 %v3219, 7
        %v3221 = vsub.s32 %v3218, %v3220
        %v3222 = vrot.slane %v3208, %v3221
        %v3223 = vcombine.high %v3215, %v3215
        %v3224 = vcombine.high %v3222, %v3222
        %v3225 = vcombine.high %v2777, %v2777
        %v3227 = vunpack.c.l.s4 1983009808
        %v3228 = vunpack.c.0.s8 %v3227
        %v3229 = vlaneseq
        %v3230 = vshrl.u32 %v3229, 7
        %v3231 = vsub.s32 %v3228, %v3230
        %v3232 = vrot.slane %v2777, %v3231
        %v3234 = vunpack.c.l.s4 1983009808
        %v3235 = vunpack.c.0.s8 %v3234
        %v3236 = vlaneseq
        %v3237 = vshrl.u32 %v3236, 7
        %v3238 = vsub.s32 %v3235, %v3237
        %v3239 = vrot.slane %v3225, %v3238
        %v3240 = vcombine.high %v3232, %v3232
        %v3241 = vcombine.high %v3239, %v3239
        %v3242 = vcombine.high %v2778, %v2778
        %v3244 = vunpack.c.l.s4 1983009808
        %v3245 = vunpack.c.0.s8 %v3244
        %v3246 = vlaneseq
        %v3247 = vshrl.u32 %v3246, 7
        %v3248 = vsub.s32 %v3245, %v3247
        %v3249 = vrot.slane %v2778, %v3248
        %v3251 = vunpack.c.l.s4 1983009808
        %v3252 = vunpack.c.0.s8 %v3251
        %v3253 = vlaneseq
        %v3254 = vshrl.u32 %v3253, 7
        %v3255 = vsub.s32 %v3252, %v3254
        %v3256 = vrot.slane %v3242, %v3255
        %v3257 = vcombine.high %v3249, %v3249
        %v3258 = vcombine.high %v3256, %v3256
        %v3259 = vcombine.high %v2779, %v2779
        %v3261 = vunpack.c.l.s4 1983009808
        %v3262 = vunpack.c.0.s8 %v3261
        %v3263 = vlaneseq
        %v3264 = vshrl.u32 %v3263, 7
        %v3265 = vsub.s32 %v3262, %v3264
        %v3266 = vrot.slane %v2779, %v3265
        %v3268 = vunpack.c.l.s4 1983009808
        %v3269 = vunpack.c.0.s8 %v3268
        %v3270 = vlaneseq
        %v3271 = vshrl.u32 %v3270, 7
        %v3272 = vsub.s32 %v3269, %v3271
        %v3273 = vrot.slane %v3259, %v3272
        %v3274 = vcombine.high %v3266, %v3266
        %v3275 = vcombine.high %v3273, %v3273
        %v3276 = vcombine.high %v2780, %v2780
        %v3278 = vunpack.c.l.s4 1983009808
        %v3279 = vunpack.c.0.s8 %v3278
        %v3280 = vlaneseq
        %v3281 = vshrl.u32 %v3280, 7
        %v3282 = vsub.s32 %v3279, %v3281
        %v3283 = vrot.slane %v2780, %v3282
        %v3285 = vunpack.c.l.s4 1983009808
        %v3286 = vunpack.c.0.s8 %v3285
        %v3287 = vlaneseq
        %v3288 = vshrl.u32 %v3287, 7
        %v3289 = vsub.s32 %v3286, %v3288
        %v3290 = vrot.slane %v3276, %v3289
        %v3291 = vcombine.high %v3283, %v3283
        %v3292 = vcombine.high %v3290, %v3290
        %v3293 = vcombine.high %v2781, %v2781
        %v3295 = vunpack.c.l.s4 1983009808
        %v3296 = vunpack.c.0.s8 %v3295
        %v3297 = vlaneseq
        %v3298 = vshrl.u32 %v3297, 7
        %v3299 = vsub.s32 %v3296, %v3298
        %v3300 = vrot.slane %v2781, %v3299
        %v3302 = vunpack.c.l.s4 1983009808
        %v3303 = vunpack.c.0.s8 %v3302
        %v3304 = vlaneseq
        %v3305 = vshrl.u32 %v3304, 7
        %v3306 = vsub.s32 %v3303, %v3305
        %v3307 = vrot.slane %v3293, %v3306
        %v3308 = vcombine.high %v3300, %v3300
        %v3309 = vcombine.high %v3307, %v3307
        %v3310 = vcombine.high %v2782, %v2782
        %v3312 = vunpack.c.l.s4 1983009808
        %v3313 = vunpack.c.0.s8 %v3312
        %v3314 = vlaneseq
        %v3315 = vshrl.u32 %v3314, 7
        %v3316 = vsub.s32 %v3313, %v3315
        %v3317 = vrot.slane %v2782, %v3316
        %v3319 = vunpack.c.l.s4 1983009808
        %v3320 = vunpack.c.0.s8 %v3319
        %v3321 = vlaneseq
        %v3322 = vshrl.u32 %v3321, 7
        %v3323 = vsub.s32 %v3320, %v3322
        %v3324 = vrot.slane %v3310, %v3323
        %v3325 = vcombine.high %v3317, %v3317
        %v3326 = vcombine.high %v3324, %v3324
        %v3327 = vcombine.high %v2783, %v2783
        %v3329 = vunpack.c.l.s4 1983009808
        %v3330 = vunpack.c.0.s8 %v3329
        %v3331 = vlaneseq
        %v3332 = vshrl.u32 %v3331, 7
        %v3333 = vsub.s32 %v3330, %v3332
        %v3334 = vrot.slane %v2783, %v3333
        %v3336 = vunpack.c.l.s4 1983009808
        %v3337 = vunpack.c.0.s8 %v3336
        %v3338 = vlaneseq
        %v3339 = vshrl.u32 %v3338, 7
        %v3340 = vsub.s32 %v3337, %v3339
        %v3341 = vrot.slane %v3327, %v3340
        %v3342 = vcombine.high %v3334, %v3334
        %v3343 = vcombine.high %v3341, %v3341
        %v3344 = vcombine.high %v2784, %v2784
        %v3346 = vunpack.c.l.s4 1983009808
        %v3347 = vunpack.c.0.s8 %v3346
        %v3348 = vlaneseq
        %v3349 = vshrl.u32 %v3348, 7
        %v3350 = vsub.s32 %v3347, %v3349
        %v3351 = vrot.slane %v2784, %v3350
        %v3353 = vunpack.c.l.s4 1983009808
        %v3354 = vunpack.c.0.s8 %v3353
        %v3355 = vlaneseq
        %v3356 = vshrl.u32 %v3355, 7
        %v3357 = vsub.s32 %v3354, %v3356
        %v3358 = vrot.slane %v3344, %v3357
        %v3359 = vcombine.high %v3351, %v3351
        %v3360 = vcombine.high %v3358, %v3358
        %v3489 = vrot.slane %v2824, 7
        %v3490 = vrot.slane %v3489, 2
        %v3491 = vrot.slane %v2832, 7
        %v3492 = vrot.slane %v3491, 2
        %v3493 = vrot.slane %v2831, 7
        %v3494 = vrot.slane %v3493, 2
        %v3495 = vrot.slane %v2833, 7
        %v3496 = vrot.slane %v3495, 2
        %v3497 = vrot.slane %v2841, 7
        %v3498 = vrot.slane %v3497, 2
        %v3499 = vrot.slane %v2849, 7
        %v3500 = vrot.slane %v3499, 2
        %v3501 = vrot.slane %v2848, 7
        %v3502 = vrot.slane %v3501, 2
        %v3503 = vrot.slane %v2850, 7
        %v3504 = vrot.slane %v3503, 2
        %v3505 = vrot.slane %v2892, 7
        %v3506 = vrot.slane %v3505, 2
        %v3507 = vrot.slane %v2900, 7
        %v3508 = vrot.slane %v3507, 2
        %v3509 = vrot.slane %v2899, 7
        %v3510 = vrot.slane %v3509, 2
        %v3511 = vrot.slane %v2901, 7
        %v3512 = vrot.slane %v3511, 2
        %v3513 = vrot.slane %v2909, 7
        %v3514 = vrot.slane %v3513, 2
        %v3515 = vrot.slane %v2917, 7
        %v3516 = vrot.slane %v3515, 2
        %v3517 = vrot.slane %v2916, 7
        %v3518 = vrot.slane %v3517, 2
        %v3519 = vrot.slane %v2918, 7
        %v3520 = vrot.slane %v3519, 2
        %v3521 = vrot.slane %v2960, 7
        %v3522 = vrot.slane %v3521, 2
        %v3523 = vrot.slane %v2968, 7
        %v3524 = vrot.slane %v3523, 2
        %v3525 = vrot.slane %v2967, 7
        %v3526 = vrot.slane %v3525, 2
        %v3527 = vrot.slane %v2969, 7
        %v3528 = vrot.slane %v3527, 2
        %v3529 = vrot.slane %v2977, 7
        %v3530 = vrot.slane %v3529, 2
        %v3531 = vrot.slane %v2985, 7
        %v3532 = vrot.slane %v3531, 2
        %v3533 = vrot.slane %v2984, 7
        %v3534 = vrot.slane %v3533, 2
        %v3535 = vrot.slane %v2986, 7
        %v3536 = vrot.slane %v3535, 2
        %v3537 = vrot.slane %v3028, 7
        %v3538 = vrot.slane %v3537, 2
        %v3539 = vrot.slane %v3036, 7
        %v3540 = vrot.slane %v3539, 2
        %v3541 = vrot.slane %v3035, 7
        %v3542 = vrot.slane %v3541, 2
        %v3543 = vrot.slane %v3037, 7
        %v3544 = vrot.slane %v3543, 2
        %v3545 = vrot.slane %v3045, 7
        %v3546 = vrot.slane %v3545, 2
        %v3547 = vrot.slane %v3053, 7
        %v3548 = vrot.slane %v3547, 2
        %v3549 = vrot.slane %v3052, 7
        %v3550 = vrot.slane %v3549, 2
        %v3551 = vrot.slane %v3054, 7
        %v3552 = vrot.slane %v3551, 2
        %v3553 = vrot.slane %v3096, 7
        %v3554 = vrot.slane %v3553, 2
        %v3555 = vrot.slane %v3104, 7
        %v3556 = vrot.slane %v3555, 2
        %v3557 = vrot.slane %v3103, 7
        %v3558 = vrot.slane %v3557, 2
        %v3559 = vrot.slane %v3105, 7
        %v3560 = vrot.slane %v3559, 2
        %v3561 = vrot.slane %v3113, 7
        %v3562 = vrot.slane %v3561, 2
        %v3563 = vrot.slane %v3121, 7
        %v3564 = vrot.slane %v3563, 2
        %v3565 = vrot.slane %v3120, 7
        %v3566 = vrot.slane %v3565, 2
        %v3567 = vrot.slane %v3122, 7
        %v3568 = vrot.slane %v3567, 2
        %v3569 = vrot.slane %v3164, 7
        %v3570 = vrot.slane %v3569, 2
        %v3571 = vrot.slane %v3172, 7
        %v3572 = vrot.slane %v3571, 2
        %v3573 = vrot.slane %v3171, 7
        %v3574 = vrot.slane %v3573, 2
        %v3575 = vrot.slane %v3173, 7
        %v3576 = vrot.slane %v3575, 2
        %v3577 = vrot.slane %v3181, 7
        %v3578 = vrot.slane %v3577, 2
        %v3579 = vrot.slane %v3189, 7
        %v3580 = vrot.slane %v3579, 2
        %v3581 = vrot.slane %v3188, 7
        %v3582 = vrot.slane %v3581, 2
        %v3583 = vrot.slane %v3190, 7
        %v3584 = vrot.slane %v3583, 2
        %v3585 = vrot.slane %v3232, 7
        %v3586 = vrot.slane %v3585, 2
        %v3587 = vrot.slane %v3240, 7
        %v3588 = vrot.slane %v3587, 2
        %v3589 = vrot.slane %v3239, 7
        %v3590 = vrot.slane %v3589, 2
        %v3591 = vrot.slane %v3241, 7
        %v3592 = vrot.slane %v3591, 2
        %v3593 = vrot.slane %v3249, 7
        %v3594 = vrot.slane %v3593, 2
        %v3595 = vrot.slane %v3257, 7
        %v3596 = vrot.slane %v3595, 2
        %v3597 = vrot.slane %v3256, 7
        %v3598 = vrot.slane %v3597, 2
        %v3599 = vrot.slane %v3258, 7
        %v3600 = vrot.slane %v3599, 2
        %v3601 = vrot.slane %v3300, 7
        %v3602 = vrot.slane %v3601, 2
        %v3603 = vrot.slane %v3308, 7
        %v3604 = vrot.slane %v3603, 2
        %v3605 = vrot.slane %v3307, 7
        %v3606 = vrot.slane %v3605, 2
        %v3607 = vrot.slane %v3309, 7
        %v3608 = vrot.slane %v3607, 2
        %v3609 = vrot.slane %v3317, 7
        %v3610 = vrot.slane %v3609, 2
        %v3611 = vrot.slane %v3325, 7
        %v3612 = vrot.slane %v3611, 2
        %v3613 = vrot.slane %v3324, 7
        %v3614 = vrot.slane %v3613, 2
        %v3615 = vrot.slane %v3326, 7
        %v3616 = vrot.slane %v3615, 2
        %v3681 = vmax.f32 %v2824, %v3490
        %v3682 = vmax.f32 %v2832, %v3492
        %v3683 = vmax.f32 %v2831, %v3494
        %v3684 = vmax.f32 %v2833, %v3496
        %v3685 = vmax.f32 %v2841, %v3498
        %v3686 = vmax.f32 %v2849, %v3500
        %v3687 = vmax.f32 %v2848, %v3502
        %v3688 = vmax.f32 %v2850, %v3504
        %v3689 = vmax.f32 %v2892, %v3506
        %v3690 = vmax.f32 %v2900, %v3508
        %v3691 = vmax.f32 %v2899, %v3510
        %v3692 = vmax.f32 %v2901, %v3512
        %v3693 = vmax.f32 %v2909, %v3514
        %v3694 = vmax.f32 %v2917, %v3516
        %v3695 = vmax.f32 %v2916, %v3518
        %v3696 = vmax.f32 %v2918, %v3520
        %v3697 = vmax.f32 %v2960, %v3522
        %v3698 = vmax.f32 %v2968, %v3524
        %v3699 = vmax.f32 %v2967, %v3526
        %v3700 = vmax.f32 %v2969, %v3528
        %v3701 = vmax.f32 %v2977, %v3530
        %v3702 = vmax.f32 %v2985, %v3532
        %v3703 = vmax.f32 %v2984, %v3534
        %v3704 = vmax.f32 %v2986, %v3536
        %v3705 = vmax.f32 %v3028, %v3538
        %v3706 = vmax.f32 %v3036, %v3540
        %v3707 = vmax.f32 %v3035, %v3542
        %v3708 = vmax.f32 %v3037, %v3544
        %v3709 = vmax.f32 %v3045, %v3546
        %v3710 = vmax.f32 %v3053, %v3548
        %v3711 = vmax.f32 %v3052, %v3550
        %v3712 = vmax.f32 %v3054, %v3552
        %v3713 = vmax.f32 %v3096, %v3554
        %v3714 = vmax.f32 %v3104, %v3556
        %v3715 = vmax.f32 %v3103, %v3558
        %v3716 = vmax.f32 %v3105, %v3560
        %v3717 = vmax.f32 %v3113, %v3562
        %v3718 = vmax.f32 %v3121, %v3564
        %v3719 = vmax.f32 %v3120, %v3566
        %v3720 = vmax.f32 %v3122, %v3568
        %v3721 = vmax.f32 %v3164, %v3570
        %v3722 = vmax.f32 %v3172, %v3572
        %v3723 = vmax.f32 %v3171, %v3574
        %v3724 = vmax.f32 %v3173, %v3576
        %v3725 = vmax.f32 %v3181, %v3578
        %v3726 = vmax.f32 %v3189, %v3580
        %v3727 = vmax.f32 %v3188, %v3582
        %v3728 = vmax.f32 %v3190, %v3584
        %v3729 = vmax.f32 %v3232, %v3586
        %v3730 = vmax.f32 %v3240, %v3588
        %v3731 = vmax.f32 %v3239, %v3590
        %v3732 = vmax.f32 %v3241, %v3592
        %v3733 = vmax.f32 %v3249, %v3594
        %v3734 = vmax.f32 %v3257, %v3596
        %v3735 = vmax.f32 %v3256, %v3598
        %v3736 = vmax.f32 %v3258, %v3600
        %v3737 = vmax.f32 %v3300, %v3602
        %v3738 = vmax.f32 %v3308, %v3604
        %v3739 = vmax.f32 %v3307, %v3606
        %v3740 = vmax.f32 %v3309, %v3608
        %v3741 = vmax.f32 %v3317, %v3610
        %v3742 = vmax.f32 %v3325, %v3612
        %v3743 = vmax.f32 %v3324, %v3614
        %v3744 = vmax.f32 %v3326, %v3616
        %v3745 = vrot.slane %v2858, 7
        %v3746 = vrot.slane %v3745, 2
        %v3747 = vrot.slane %v2866, 7
        %v3748 = vrot.slane %v3747, 2
        %v3749 = vrot.slane %v2865, 7
        %v3750 = vrot.slane %v3749, 2
        %v3751 = vrot.slane %v2867, 7
        %v3752 = vrot.slane %v3751, 2
        %v3753 = vrot.slane %v2875, 7
        %v3754 = vrot.slane %v3753, 2
        %v3755 = vrot.slane %v2883, 7
        %v3756 = vrot.slane %v3755, 2
        %v3757 = vrot.slane %v2882, 7
        %v3758 = vrot.slane %v3757, 2
        %v3759 = vrot.slane %v2884, 7
        %v3760 = vrot.slane %v3759, 2
        %v3761 = vrot.slane %v2926, 7
        %v3762 = vrot.slane %v3761, 2
        %v3763 = vrot.slane %v2934, 7
        %v3764 = vrot.slane %v3763, 2
        %v3765 = vrot.slane %v2933, 7
        %v3766 = vrot.slane %v3765, 2
        %v3767 = vrot.slane %v2935, 7
        %v3768 = vrot.slane %v3767, 2
        %v3769 = vrot.slane %v2943, 7
        %v3770 = vrot.slane %v3769, 2
        %v3771 = vrot.slane %v2951, 7
        %v3772 = vrot.slane %v3771, 2
        %v3773 = vrot.slane %v2950, 7
        %v3774 = vrot.slane %v3773, 2
        %v3775 = vrot.slane %v2952, 7
        %v3776 = vrot.slane %v3775, 2
        %v3777 = vrot.slane %v2994, 7
        %v3778 = vrot.slane %v3777, 2
        %v3779 = vrot.slane %v3002, 7
        %v3780 = vrot.slane %v3779, 2
        %v3781 = vrot.slane %v3001, 7
        %v3782 = vrot.slane %v3781, 2
        %v3783 = vrot.slane %v3003, 7
        %v3784 = vrot.slane %v3783, 2
        %v3785 = vrot.slane %v3011, 7
        %v3786 = vrot.slane %v3785, 2
        %v3787 = vrot.slane %v3019, 7
        %v3788 = vrot.slane %v3787, 2
        %v3789 = vrot.slane %v3018, 7
        %v3790 = vrot.slane %v3789, 2
        %v3791 = vrot.slane %v3020, 7
        %v3792 = vrot.slane %v3791, 2
        %v3793 = vrot.slane %v3062, 7
        %v3794 = vrot.slane %v3793, 2
        %v3795 = vrot.slane %v3070, 7
        %v3796 = vrot.slane %v3795, 2
        %v3797 = vrot.slane %v3069, 7
        %v3798 = vrot.slane %v3797, 2
        %v3799 = vrot.slane %v3071, 7
        %v3800 = vrot.slane %v3799, 2
        %v3801 = vrot.slane %v3079, 7
        %v3802 = vrot.slane %v3801, 2
        %v3803 = vrot.slane %v3087, 7
        %v3804 = vrot.slane %v3803, 2
        %v3805 = vrot.slane %v3086, 7
        %v3806 = vrot.slane %v3805, 2
        %v3807 = vrot.slane %v3088, 7
        %v3808 = vrot.slane %v3807, 2
        %v3809 = vrot.slane %v3130, 7
        %v3810 = vrot.slane %v3809, 2
        %v3811 = vrot.slane %v3138, 7
        %v3812 = vrot.slane %v3811, 2
        %v3813 = vrot.slane %v3137, 7
        %v3814 = vrot.slane %v3813, 2
        %v3815 = vrot.slane %v3139, 7
        %v3816 = vrot.slane %v3815, 2
        %v3817 = vrot.slane %v3147, 7
        %v3818 = vrot.slane %v3817, 2
        %v3819 = vrot.slane %v3155, 7
        %v3820 = vrot.slane %v3819, 2
        %v3821 = vrot.slane %v3154, 7
        %v3822 = vrot.slane %v3821, 2
        %v3823 = vrot.slane %v3156, 7
        %v3824 = vrot.slane %v3823, 2
        %v3825 = vrot.slane %v3198, 7
        %v3826 = vrot.slane %v3825, 2
        %v3827 = vrot.slane %v3206, 7
        %v3828 = vrot.slane %v3827, 2
        %v3829 = vrot.slane %v3205, 7
        %v3830 = vrot.slane %v3829, 2
        %v3831 = vrot.slane %v3207, 7
        %v3832 = vrot.slane %v3831, 2
        %v3833 = vrot.slane %v3215, 7
        %v3834 = vrot.slane %v3833, 2
        %v3835 = vrot.slane %v3223, 7
        %v3836 = vrot.slane %v3835, 2
        %v3837 = vrot.slane %v3222, 7
        %v3838 = vrot.slane %v3837, 2
        %v3839 = vrot.slane %v3224, 7
        %v3840 = vrot.slane %v3839, 2
        %v3841 = vrot.slane %v3266, 7
        %v3842 = vrot.slane %v3841, 2
        %v3843 = vrot.slane %v3274, 7
        %v3844 = vrot.slane %v3843, 2
        %v3845 = vrot.slane %v3273, 7
        %v3846 = vrot.slane %v3845, 2
        %v3847 = vrot.slane %v3275, 7
        %v3848 = vrot.slane %v3847, 2
        %v3849 = vrot.slane %v3283, 7
        %v3850 = vrot.slane %v3849, 2
        %v3851 = vrot.slane %v3291, 7
        %v3852 = vrot.slane %v3851, 2
        %v3853 = vrot.slane %v3290, 7
        %v3854 = vrot.slane %v3853, 2
        %v3855 = vrot.slane %v3292, 7
        %v3856 = vrot.slane %v3855, 2
        %v3857 = vrot.slane %v3334, 7
        %v3858 = vrot.slane %v3857, 2
        %v3859 = vrot.slane %v3342, 7
        %v3860 = vrot.slane %v3859, 2
        %v3861 = vrot.slane %v3341, 7
        %v3862 = vrot.slane %v3861, 2
        %v3863 = vrot.slane %v3343, 7
        %v3864 = vrot.slane %v3863, 2
        %v3865 = vrot.slane %v3351, 7
        %v3866 = vrot.slane %v3865, 2
        %v3867 = vrot.slane %v3359, 7
        %v3868 = vrot.slane %v3867, 2
        %v3869 = vrot.slane %v3358, 7
        %v3870 = vrot.slane %v3869, 2
        %v3871 = vrot.slane %v3360, 7
        %v3872 = vrot.slane %v3871, 2
        %v3937 = vmax.f32 %v2858, %v3746
        %v3938 = vmax.f32 %v2866, %v3748
        %v3939 = vmax.f32 %v2865, %v3750
        %v3940 = vmax.f32 %v2867, %v3752
        %v3941 = vmax.f32 %v2875, %v3754
        %v3942 = vmax.f32 %v2883, %v3756
        %v3943 = vmax.f32 %v2882, %v3758
        %v3944 = vmax.f32 %v2884, %v3760
        %v3945 = vmax.f32 %v2926, %v3762
        %v3946 = vmax.f32 %v2934, %v3764
        %v3947 = vmax.f32 %v2933, %v3766
        %v3948 = vmax.f32 %v2935, %v3768
        %v3949 = vmax.f32 %v2943, %v3770
        %v3950 = vmax.f32 %v2951, %v3772
        %v3951 = vmax.f32 %v2950, %v3774
        %v3952 = vmax.f32 %v2952, %v3776
        %v3953 = vmax.f32 %v2994, %v3778
        %v3954 = vmax.f32 %v3002, %v3780
        %v3955 = vmax.f32 %v3001, %v3782
        %v3956 = vmax.f32 %v3003, %v3784
        %v3957 = vmax.f32 %v3011, %v3786
        %v3958 = vmax.f32 %v3019, %v3788
        %v3959 = vmax.f32 %v3018, %v3790
        %v3960 = vmax.f32 %v3020, %v3792
        %v3961 = vmax.f32 %v3062, %v3794
        %v3962 = vmax.f32 %v3070, %v3796
        %v3963 = vmax.f32 %v3069, %v3798
        %v3964 = vmax.f32 %v3071, %v3800
        %v3965 = vmax.f32 %v3079, %v3802
        %v3966 = vmax.f32 %v3087, %v3804
        %v3967 = vmax.f32 %v3086, %v3806
        %v3968 = vmax.f32 %v3088, %v3808
        %v3969 = vmax.f32 %v3130, %v3810
        %v3970 = vmax.f32 %v3138, %v3812
        %v3971 = vmax.f32 %v3137, %v3814
        %v3972 = vmax.f32 %v3139, %v3816
        %v3973 = vmax.f32 %v3147, %v3818
        %v3974 = vmax.f32 %v3155, %v3820
        %v3975 = vmax.f32 %v3154, %v3822
        %v3976 = vmax.f32 %v3156, %v3824
        %v3977 = vmax.f32 %v3198, %v3826
        %v3978 = vmax.f32 %v3206, %v3828
        %v3979 = vmax.f32 %v3205, %v3830
        %v3980 = vmax.f32 %v3207, %v3832
        %v3981 = vmax.f32 %v3215, %v3834
        %v3982 = vmax.f32 %v3223, %v3836
        %v3983 = vmax.f32 %v3222, %v3838
        %v3984 = vmax.f32 %v3224, %v3840
        %v3985 = vmax.f32 %v3266, %v3842
        %v3986 = vmax.f32 %v3274, %v3844
        %v3987 = vmax.f32 %v3273, %v3846
        %v3988 = vmax.f32 %v3275, %v3848
        %v3989 = vmax.f32 %v3283, %v3850
        %v3990 = vmax.f32 %v3291, %v3852
        %v3991 = vmax.f32 %v3290, %v3854
        %v3992 = vmax.f32 %v3292, %v3856
        %v3993 = vmax.f32 %v3334, %v3858
        %v3994 = vmax.f32 %v3342, %v3860
        %v3995 = vmax.f32 %v3341, %v3862
        %v3996 = vmax.f32 %v3343, %v3864
        %v3997 = vmax.f32 %v3351, %v3866
        %v3998 = vmax.f32 %v3359, %v3868
        %v3999 = vmax.f32 %v3358, %v3870
        %v4000 = vmax.f32 %v3360, %v3872
        %v4001 = vmax.f32 %v3681, %v3937
        %v4002 = vmax.f32 %v3682, %v3938
        %v4003 = vmax.f32 %v3683, %v3939
        %v4004 = vmax.f32 %v3684, %v3940
        %v4005 = vmax.f32 %v3685, %v3941
        %v4006 = vmax.f32 %v3686, %v3942
        %v4007 = vmax.f32 %v3687, %v3943
        %v4008 = vmax.f32 %v3688, %v3944
        %v4009 = vmax.f32 %v3689, %v3945
        %v4010 = vmax.f32 %v3690, %v3946
        %v4011 = vmax.f32 %v3691, %v3947
        %v4012 = vmax.f32 %v3692, %v3948
        %v4013 = vmax.f32 %v3693, %v3949
        %v4014 = vmax.f32 %v3694, %v3950
        %v4015 = vmax.f32 %v3695, %v3951
        %v4016 = vmax.f32 %v3696, %v3952
        %v4017 = vmax.f32 %v3697, %v3953
        %v4018 = vmax.f32 %v3698, %v3954
        %v4019 = vmax.f32 %v3699, %v3955
        %v4020 = vmax.f32 %v3700, %v3956
        %v4021 = vmax.f32 %v3701, %v3957
        %v4022 = vmax.f32 %v3702, %v3958
        %v4023 = vmax.f32 %v3703, %v3959
        %v4024 = vmax.f32 %v3704, %v3960
        %v4025 = vmax.f32 %v3705, %v3961
        %v4026 = vmax.f32 %v3706, %v3962
        %v4027 = vmax.f32 %v3707, %v3963
        %v4028 = vmax.f32 %v3708, %v3964
        %v4029 = vmax.f32 %v3709, %v3965
        %v4030 = vmax.f32 %v3710, %v3966
        %v4031 = vmax.f32 %v3711, %v3967
        %v4032 = vmax.f32 %v3712, %v3968
        %v4033 = vmax.f32 %v3713, %v3969
        %v4034 = vmax.f32 %v3714, %v3970
        %v4035 = vmax.f32 %v3715, %v3971
        %v4036 = vmax.f32 %v3716, %v3972
        %v4037 = vmax.f32 %v3717, %v3973
        %v4038 = vmax.f32 %v3718, %v3974
        %v4039 = vmax.f32 %v3719, %v3975
        %v4040 = vmax.f32 %v3720, %v3976
        %v4041 = vmax.f32 %v3721, %v3977
        %v4042 = vmax.f32 %v3722, %v3978
        %v4043 = vmax.f32 %v3723, %v3979
        %v4044 = vmax.f32 %v3724, %v3980
        %v4045 = vmax.f32 %v3725, %v3981
        %v4046 = vmax.f32 %v3726, %v3982
        %v4047 = vmax.f32 %v3727, %v3983
        %v4048 = vmax.f32 %v3728, %v3984
        %v4049 = vmax.f32 %v3729, %v3985
        %v4050 = vmax.f32 %v3730, %v3986
        %v4051 = vmax.f32 %v3731, %v3987
        %v4052 = vmax.f32 %v3732, %v3988
        %v4053 = vmax.f32 %v3733, %v3989
        %v4054 = vmax.f32 %v3734, %v3990
        %v4055 = vmax.f32 %v3735, %v3991
        %v4056 = vmax.f32 %v3736, %v3992
        %v4057 = vmax.f32 %v3737, %v3993
        %v4058 = vmax.f32 %v3738, %v3994
        %v4059 = vmax.f32 %v3739, %v3995
        %v4060 = vmax.f32 %v3740, %v3996
        %v4061 = vmax.f32 %v3741, %v3997
        %v4062 = vmax.f32 %v3742, %v3998
        %v4063 = vmax.f32 %v3743, %v3999
        %v4064 = vmax.f32 %v3744, %v4000
        %v4065 = vpack.c.bf16 %v4001, %v4001
        %v4066 = vpack.c.bf16 %v4002, %v4002
        %v4067 = vpack.c.bf16 %v4003, %v4003
        %v4068 = vpack.c.bf16 %v4004, %v4004
        %v4069 = vpack.c.bf16 %v4005, %v4005
        %v4070 = vpack.c.bf16 %v4006, %v4006
        %v4071 = vpack.c.bf16 %v4007, %v4007
        %v4072 = vpack.c.bf16 %v4008, %v4008
        %v4073 = vpack.c.bf16 %v4009, %v4009
        %v4074 = vpack.c.bf16 %v4010, %v4010
        %v4075 = vpack.c.bf16 %v4011, %v4011
        %v4076 = vpack.c.bf16 %v4012, %v4012
        %v4077 = vpack.c.bf16 %v4013, %v4013
        %v4078 = vpack.c.bf16 %v4014, %v4014
        %v4079 = vpack.c.bf16 %v4015, %v4015
        %v4080 = vpack.c.bf16 %v4016, %v4016
        %v4081 = vpack.c.bf16 %v4017, %v4017
        %v4082 = vpack.c.bf16 %v4018, %v4018
        %v4083 = vpack.c.bf16 %v4019, %v4019
        %v4084 = vpack.c.bf16 %v4020, %v4020
        %v4085 = vpack.c.bf16 %v4021, %v4021
        %v4086 = vpack.c.bf16 %v4022, %v4022
        %v4087 = vpack.c.bf16 %v4023, %v4023
        %v4088 = vpack.c.bf16 %v4024, %v4024
        %v4089 = vpack.c.bf16 %v4025, %v4025
        %v4090 = vpack.c.bf16 %v4026, %v4026
        %v4091 = vpack.c.bf16 %v4027, %v4027
        %v4092 = vpack.c.bf16 %v4028, %v4028
        %v4093 = vpack.c.bf16 %v4029, %v4029
        %v4094 = vpack.c.bf16 %v4030, %v4030
        %v4095 = vpack.c.bf16 %v4031, %v4031
        %v4096 = vpack.c.bf16 %v4032, %v4032
        %v4097 = vpack.c.bf16 %v4033, %v4033
        %v4098 = vpack.c.bf16 %v4034, %v4034
        %v4099 = vpack.c.bf16 %v4035, %v4035
        %v4100 = vpack.c.bf16 %v4036, %v4036
        %v4101 = vpack.c.bf16 %v4037, %v4037
        %v4102 = vpack.c.bf16 %v4038, %v4038
        %v4103 = vpack.c.bf16 %v4039, %v4039
        %v4104 = vpack.c.bf16 %v4040, %v4040
        %v4105 = vpack.c.bf16 %v4041, %v4041
        %v4106 = vpack.c.bf16 %v4042, %v4042
        %v4107 = vpack.c.bf16 %v4043, %v4043
        %v4108 = vpack.c.bf16 %v4044, %v4044
        %v4109 = vpack.c.bf16 %v4045, %v4045
        %v4110 = vpack.c.bf16 %v4046, %v4046
        %v4111 = vpack.c.bf16 %v4047, %v4047
        %v4112 = vpack.c.bf16 %v4048, %v4048
        %v4113 = vpack.c.bf16 %v4049, %v4049
        %v4114 = vpack.c.bf16 %v4050, %v4050
        %v4115 = vpack.c.bf16 %v4051, %v4051
        %v4116 = vpack.c.bf16 %v4052, %v4052
        %v4117 = vpack.c.bf16 %v4053, %v4053
        %v4118 = vpack.c.bf16 %v4054, %v4054
        %v4119 = vpack.c.bf16 %v4055, %v4055
        %v4120 = vpack.c.bf16 %v4056, %v4056
        %v4121 = vpack.c.bf16 %v4057, %v4057
        %v4122 = vpack.c.bf16 %v4058, %v4058
        %v4123 = vpack.c.bf16 %v4059, %v4059
        %v4124 = vpack.c.bf16 %v4060, %v4060
        %v4125 = vpack.c.bf16 %v4061, %v4061
        %v4126 = vpack.c.bf16 %v4062, %v4062
        %v4127 = vpack.c.bf16 %v4063, %v4063
        %v4128 = vpack.c.bf16 %v4064, %v4064
        %v4193 = vunpack.c.l.b16 %v4065
        %v4194 = vunpack.c.l.b16 %v4066
        %v4195 = vunpack.c.l.b16 %v4067
        %v4196 = vunpack.c.l.b16 %v4068
        %v4197 = vunpack.c.l.b16 %v4069
        %v4198 = vunpack.c.l.b16 %v4070
        %v4199 = vunpack.c.l.b16 %v4071
        %v4200 = vunpack.c.l.b16 %v4072
        %v4201 = vunpack.c.l.b16 %v4073
        %v4202 = vunpack.c.l.b16 %v4074
        %v4203 = vunpack.c.l.b16 %v4075
        %v4204 = vunpack.c.l.b16 %v4076
        %v4205 = vunpack.c.l.b16 %v4077
        %v4206 = vunpack.c.l.b16 %v4078
        %v4207 = vunpack.c.l.b16 %v4079
        %v4208 = vunpack.c.l.b16 %v4080
        %v4209 = vunpack.c.l.b16 %v4081
        %v4210 = vunpack.c.l.b16 %v4082
        %v4211 = vunpack.c.l.b16 %v4083
        %v4212 = vunpack.c.l.b16 %v4084
        %v4213 = vunpack.c.l.b16 %v4085
        %v4214 = vunpack.c.l.b16 %v4086
        %v4215 = vunpack.c.l.b16 %v4087
        %v4216 = vunpack.c.l.b16 %v4088
        %v4217 = vunpack.c.l.b16 %v4089
        %v4218 = vunpack.c.l.b16 %v4090
        %v4219 = vunpack.c.l.b16 %v4091
        %v4220 = vunpack.c.l.b16 %v4092
        %v4221 = vunpack.c.l.b16 %v4093
        %v4222 = vunpack.c.l.b16 %v4094
        %v4223 = vunpack.c.l.b16 %v4095
        %v4224 = vunpack.c.l.b16 %v4096
        %v4225 = vunpack.c.l.b16 %v4097
        %v4226 = vunpack.c.l.b16 %v4098
        %v4227 = vunpack.c.l.b16 %v4099
        %v4228 = vunpack.c.l.b16 %v4100
        %v4229 = vunpack.c.l.b16 %v4101
        %v4230 = vunpack.c.l.b16 %v4102
        %v4231 = vunpack.c.l.b16 %v4103
        %v4232 = vunpack.c.l.b16 %v4104
        %v4233 = vunpack.c.l.b16 %v4105
        %v4234 = vunpack.c.l.b16 %v4106
        %v4235 = vunpack.c.l.b16 %v4107
        %v4236 = vunpack.c.l.b16 %v4108
        %v4237 = vunpack.c.l.b16 %v4109
        %v4238 = vunpack.c.l.b16 %v4110
        %v4239 = vunpack.c.l.b16 %v4111
        %v4240 = vunpack.c.l.b16 %v4112
        %v4241 = vunpack.c.l.b16 %v4113
        %v4242 = vunpack.c.l.b16 %v4114
        %v4243 = vunpack.c.l.b16 %v4115
        %v4244 = vunpack.c.l.b16 %v4116
        %v4245 = vunpack.c.l.b16 %v4117
        %v4246 = vunpack.c.l.b16 %v4118
        %v4247 = vunpack.c.l.b16 %v4119
        %v4248 = vunpack.c.l.b16 %v4120
        %v4249 = vunpack.c.l.b16 %v4121
        %v4250 = vunpack.c.l.b16 %v4122
        %v4251 = vunpack.c.l.b16 %v4123
        %v4252 = vunpack.c.l.b16 %v4124
        %v4253 = vunpack.c.l.b16 %v4125
        %v4254 = vunpack.c.l.b16 %v4126
        %v4255 = vunpack.c.l.b16 %v4127
        %v4256 = vunpack.c.l.b16 %v4128
        %v4257 = vrot.slane %v4193, 7
        %v4258 = vrot.slane %v4194, 6
        %vm4259 = vcmask 1042434
        %v4260 = vsel %vm4259, %v4258, %v4257
        %v4261 = vrot.slane %v4195, 5
        %vm4262 = vcmask 1043459
        %v4263 = vsel %vm4262, %v4261, %v4260
        %v4264 = vrot.slane %v4196, 4
        %vm4265 = vcmask 1044484
        %v4266 = vsel %vm4265, %v4264, %v4263
        %v4267 = vrot.slane %v4197, 3
        %vm4268 = vcmask 1045509
        %v4269 = vsel %vm4268, %v4267, %v4266
        %v4270 = vrot.slane %v4198, 2
        %vm4271 = vcmask 1046534
        %v4272 = vsel %vm4271, %v4270, %v4269
        %v4273 = vrot.slane %v4199, 1
        %vm4274 = vcmask 1047559
        %v4275 = vsel %vm4274, %v4273, %v4272
        %v4276 = vrot.slane %v4201, 7
        %v4277 = vrot.slane %v4202, 6
        %v4278 = vsel %vm4259, %v4277, %v4276
        %v4279 = vrot.slane %v4203, 5
        %v4280 = vsel %vm4262, %v4279, %v4278
        %v4281 = vrot.slane %v4204, 4
        %v4282 = vsel %vm4265, %v4281, %v4280
        %v4283 = vrot.slane %v4205, 3
        %v4284 = vsel %vm4268, %v4283, %v4282
        %v4285 = vrot.slane %v4206, 2
        %v4286 = vsel %vm4271, %v4285, %v4284
        %v4287 = vrot.slane %v4207, 1
        %v4288 = vsel %vm4274, %v4287, %v4286
        %v4289 = vrot.slane %v4209, 7
        %v4290 = vrot.slane %v4210, 6
        %v4291 = vsel %vm4259, %v4290, %v4289
        %v4292 = vrot.slane %v4211, 5
        %v4293 = vsel %vm4262, %v4292, %v4291
        %v4294 = vrot.slane %v4212, 4
        %v4295 = vsel %vm4265, %v4294, %v4293
        %v4296 = vrot.slane %v4213, 3
        %v4297 = vsel %vm4268, %v4296, %v4295
        %v4298 = vrot.slane %v4214, 2
        %v4299 = vsel %vm4271, %v4298, %v4297
        %v4300 = vrot.slane %v4215, 1
        %v4301 = vsel %vm4274, %v4300, %v4299
        %v4302 = vrot.slane %v4217, 7
        %v4303 = vrot.slane %v4218, 6
        %v4304 = vsel %vm4259, %v4303, %v4302
        %v4305 = vrot.slane %v4219, 5
        %v4306 = vsel %vm4262, %v4305, %v4304
        %v4307 = vrot.slane %v4220, 4
        %v4308 = vsel %vm4265, %v4307, %v4306
        %v4309 = vrot.slane %v4221, 3
        %v4310 = vsel %vm4268, %v4309, %v4308
        %v4311 = vrot.slane %v4222, 2
        %v4312 = vsel %vm4271, %v4311, %v4310
        %v4313 = vrot.slane %v4223, 1
        %v4314 = vsel %vm4274, %v4313, %v4312
        %v4315 = vrot.slane %v4225, 7
        %v4316 = vrot.slane %v4226, 6
        %v4317 = vsel %vm4259, %v4316, %v4315
        %v4318 = vrot.slane %v4227, 5
        %v4319 = vsel %vm4262, %v4318, %v4317
        %v4320 = vrot.slane %v4228, 4
        %v4321 = vsel %vm4265, %v4320, %v4319
        %v4322 = vrot.slane %v4229, 3
        %v4323 = vsel %vm4268, %v4322, %v4321
        %v4324 = vrot.slane %v4230, 2
        %v4325 = vsel %vm4271, %v4324, %v4323
        %v4326 = vrot.slane %v4231, 1
        %v4327 = vsel %vm4274, %v4326, %v4325
        %v4328 = vrot.slane %v4233, 7
        %v4329 = vrot.slane %v4234, 6
        %v4330 = vsel %vm4259, %v4329, %v4328
        %v4331 = vrot.slane %v4235, 5
        %v4332 = vsel %vm4262, %v4331, %v4330
        %v4333 = vrot.slane %v4236, 4
        %v4334 = vsel %vm4265, %v4333, %v4332
        %v4335 = vrot.slane %v4237, 3
        %v4336 = vsel %vm4268, %v4335, %v4334
        %v4337 = vrot.slane %v4238, 2
        %v4338 = vsel %vm4271, %v4337, %v4336
        %v4339 = vrot.slane %v4239, 1
        %v4340 = vsel %vm4274, %v4339, %v4338
        %v4341 = vrot.slane %v4241, 7
        %v4342 = vrot.slane %v4242, 6
        %v4343 = vsel %vm4259, %v4342, %v4341
        %v4344 = vrot.slane %v4243, 5
        %v4345 = vsel %vm4262, %v4344, %v4343
        %v4346 = vrot.slane %v4244, 4
        %v4347 = vsel %vm4265, %v4346, %v4345
        %v4348 = vrot.slane %v4245, 3
        %v4349 = vsel %vm4268, %v4348, %v4347
        %v4350 = vrot.slane %v4246, 2
        %v4351 = vsel %vm4271, %v4350, %v4349
        %v4352 = vrot.slane %v4247, 1
        %v4353 = vsel %vm4274, %v4352, %v4351
        %v4354 = vrot.slane %v4249, 7
        %v4355 = vrot.slane %v4250, 6
        %v4356 = vsel %vm4259, %v4355, %v4354
        %v4357 = vrot.slane %v4251, 5
        %v4358 = vsel %vm4262, %v4357, %v4356
        %v4359 = vrot.slane %v4252, 4
        %v4360 = vsel %vm4265, %v4359, %v4358
        %v4361 = vrot.slane %v4253, 3
        %v4362 = vsel %vm4268, %v4361, %v4360
        %v4363 = vrot.slane %v4254, 2
        %v4364 = vsel %vm4271, %v4363, %v4362
        %v4365 = vrot.slane %v4255, 1
        %v4366 = vsel %vm4274, %v4365, %v4364
        %v4367 = vpack.c.b16 %v4200, %v4275
        %v4368 = vpack.c.b16 %v4208, %v4288
        %v4369 = vpack.c.b16 %v4216, %v4301
        %v4370 = vpack.c.b16 %v4224, %v4314
        %v4371 = vpack.c.b16 %v4232, %v4327
        %v4372 = vpack.c.b16 %v4240, %v4340
        %v4373 = vpack.c.b16 %v4248, %v4353
        %v4374 = vpack.c.b16 %v4256, %v4366
        %vm4383 = vcmask 1040384
        %vm4384 = vsmask.f32 256
        %vm4385 = vmand %vm4383, %vm4384
        %v4386 = vsel %vm4385, 0, %v4367
        %v4387 = vsel %vm4385, 0, %v4368
        %v4388 = vsel %vm4385, 0, %v4369
        %v4389 = vsel %vm4385, 0, %v4370
        %v4390 = vsel %vm4385, 0, %v4371
        %v4391 = vsel %vm4385, 0, %v4372
        %v4392 = vsel %vm4385, 0, %v4373
        %v4393 = vsel %vm4385, 0, %v4374
        %vm4394 = vcmask 1044480
        %vm4395 = vsmask.f32 4352
        %vm4396 = vmand %vm4394, %vm4395
        %v4397 = vsel %vm4396, %v4386, 0
        %v4398 = vsel %vm4396, %v4387, 0
        %v4399 = vsel %vm4396, %v4388, 0
        %v4400 = vsel %vm4396, %v4389, 0
        %v4401 = vsel %vm4396, %v4390, 0
        %v4402 = vsel %vm4396, %v4391, 0
        %v4403 = vsel %vm4396, %v4392, 0
        %v4404 = vsel %vm4396, %v4393, 0
        %v4406 = vshrl.u32 0, 16
        %v4408 = vshll.u32 0, 16
        %v4410 = vrot.slane %v4408, 1
        %v4411 = vor.u32 %v4406, %v4410
        %v4413 = vshrl.u32 %v4397, 16
        %v4415 = vshll.u32 %v4397, 16
        %v4417 = vrot.slane %v4415, 1
        %v4418 = vor.u32 %v4413, %v4417
        %v4420 = vshrl.u32 %v4398, 16
        %v4422 = vshll.u32 %v4398, 16
        %v4424 = vrot.slane %v4422, 1
        %v4425 = vor.u32 %v4420, %v4424
        %v4427 = vshrl.u32 %v4399, 16
        %v4429 = vshll.u32 %v4399, 16
        %v4431 = vrot.slane %v4429, 1
        %v4432 = vor.u32 %v4427, %v4431
        %v4434 = vshrl.u32 %v4400, 16
        %v4436 = vshll.u32 %v4400, 16
        %v4438 = vrot.slane %v4436, 1
        %v4439 = vor.u32 %v4434, %v4438
        %v4441 = vshrl.u32 %v4401, 16
        %v4443 = vshll.u32 %v4401, 16
        %v4445 = vrot.slane %v4443, 1
        %v4446 = vor.u32 %v4441, %v4445
        %v4448 = vshrl.u32 %v4402, 16
        %v4450 = vshll.u32 %v4402, 16
        %v4452 = vrot.slane %v4450, 1
        %v4453 = vor.u32 %v4448, %v4452
        %v4455 = vshrl.u32 %v4403, 16
        %v4457 = vshll.u32 %v4403, 16
        %v4459 = vrot.slane %v4457, 1
        %v4460 = vor.u32 %v4455, %v4459
        %4461 = vrot.lane.b32.xlu0 %v4411, 32
        %v4462 = vpop.permute.xlu0 %4461
        %4463 = vrot.lane.b32.xlu0 %v4418, 32
        %v4464 = vpop.permute.xlu0 %4463
        %4465 = vrot.lane.b32.xlu0 %v4425, 32
        %v4466 = vpop.permute.xlu0 %4465
        %4467 = vrot.lane.b32.xlu0 %v4432, 32
        %v4468 = vpop.permute.xlu0 %4467
        %4469 = vrot.lane.b32.xlu0 %v4439, 32
        %v4470 = vpop.permute.xlu0 %4469
        %4471 = vrot.lane.b32.xlu0 %v4446, 32
        %v4472 = vpop.permute.xlu0 %4471
        %4473 = vrot.lane.b32.xlu0 %v4453, 32
        %v4474 = vpop.permute.xlu0 %4473
        %4475 = vrot.lane.b32.xlu0 %v4460, 32
        %v4476 = vpop.permute.xlu0 %4475
        %v4485 = vrot.slane 0, 1
        %v4486 = vrot.slane %v4397, 1
        %v4487 = vrot.slane %v4398, 1
        %v4488 = vrot.slane %v4399, 1
        %v4489 = vrot.slane %v4400, 1
        %v4490 = vrot.slane %v4401, 1
        %v4491 = vrot.slane %v4402, 1
        %v4492 = vrot.slane %v4403, 1
        %4493 = vrot.lane.b32.xlu0 %v4485, 64
        %v4494 = vpop.permute.xlu0 %4493
        %4495 = vrot.lane.b32.xlu0 %v4486, 64
        %v4496 = vpop.permute.xlu0 %4495
        %4497 = vrot.lane.b32.xlu0 %v4487, 64
        %v4498 = vpop.permute.xlu0 %4497
        %4499 = vrot.lane.b32.xlu0 %v4488, 64
        %v4500 = vpop.permute.xlu0 %4499
        %4501 = vrot.lane.b32.xlu0 %v4489, 64
        %v4502 = vpop.permute.xlu0 %4501
        %4503 = vrot.lane.b32.xlu0 %v4490, 64
        %v4504 = vpop.permute.xlu0 %4503
        %4505 = vrot.lane.b32.xlu0 %v4491, 64
        %v4506 = vpop.permute.xlu0 %4505
        %4507 = vrot.lane.b32.xlu0 %v4492, 64
        %v4508 = vpop.permute.xlu0 %4507
        %vm4509 = vcmask 261120
        %v4511 = vsel %vm4509, 0, %v4462
        %v4513 = vsel %vm4509, %v4397, %v4464
        %v4515 = vsel %vm4509, %v4398, %v4466
        %v4517 = vsel %vm4509, %v4399, %v4468
        %v4519 = vsel %vm4509, %v4400, %v4470
        %v4521 = vsel %vm4509, %v4401, %v4472
        %v4523 = vsel %vm4509, %v4402, %v4474
        %v4525 = vsel %vm4509, %v4403, %v4476
        %vm4526 = vcmask 523264
        %v4528 = vsel %vm4526, %v4511, %v4494
        %v4530 = vsel %vm4526, %v4513, %v4496
        %v4532 = vsel %vm4526, %v4515, %v4498
        %v4534 = vsel %vm4526, %v4517, %v4500
        %v4536 = vsel %vm4526, %v4519, %v4502
        %v4538 = vsel %vm4526, %v4521, %v4504
        %v4540 = vsel %vm4526, %v4523, %v4506
        %v4542 = vsel %vm4526, %v4525, %v4508
        %v4543 = vld [vmem:[%s3] sm:$0xf]
        %v4544 = vld [vmem:[%s3 + $0x4] sm:$0xf]
        %v4545 = vld [vmem:[%s3 + $0x8] sm:$0xf]
        %v4546 = vld [vmem:[%s3 + $0xc] sm:$0xf]
        %v4547 = vld [vmem:[%s3 + $0x10] sm:$0xf]
        %v4548 = vld [vmem:[%s3 + $0x14] sm:$0xf]
        %v4549 = vld [vmem:[%s3 + $0x18] sm:$0xf]
        %v4550 = vld [vmem:[%s3 + $0x1c] sm:$0xf]
        %v4551 = vld [vmem:[%s3 + $0x20] sm:$0xf]
        %v4552 = vld [vmem:[%s3 + $0x24] sm:$0xf]
        %v4553 = vld [vmem:[%s3 + $0x28] sm:$0xf]
        %v4554 = vld [vmem:[%s3 + $0x2c] sm:$0xf]
        %v4556 = vshrl.u32 %v4404, 16
        %v4558 = vshll.u32 %v4404, 16
        %v4560 = vrot.slane %v4558, 1
        %v4561 = vor.u32 %v4556, %v4560
        %4562 = vrot.lane.b32.xlu0 %v4561, 32
        %v4563 = vpop.permute.xlu0 %4562
        %v4565 = vrot.slane %v4404, 1
        %4566 = vrot.lane.b32.xlu0 %v4565, 64
        %v4567 = vpop.permute.xlu0 %4566
        %v4569 = vsel %vm4509, %v4404, %v4563
        %v4571 = vsel %vm4526, %v4569, %v4567
        %s4572 = scalar_lea.vmem %s3, 48
        %v4573 = vld [vmem:[%s4572] sm:$0xf]
        %v4574 = vld [vmem:[%s4572 + $0x4] sm:$0xf]
        %v4575 = vld [vmem:[%s4572 + $0x8] sm:$0xf]
        %v4576 = vld [vmem:[%s4572 + $0xc] sm:$0xf]
        %v4577 = vld [vmem:[%s4572 + $0x10] sm:$0xf]
        %v4578 = vld [vmem:[%s4572 + $0x14] sm:$0xf]
        %v4579 = vld [vmem:[%s4572 + $0x18] sm:$0xf]
        %v4580 = vld [vmem:[%s4572 + $0x1c] sm:$0xf]
        %v4581 = vld [vmem:[%s4572 + $0x20] sm:$0xf]
        %v4582 = vld [vmem:[%s4572 + $0x24] sm:$0xf]
        %v4583 = vld [vmem:[%s4572 + $0x28] sm:$0xf]
        %v4584 = vld [vmem:[%s4572 + $0x2c] sm:$0xf]
        %v4593 = vunpack.c.l.b16 %v4530
        %v4594 = vunpack.c.l.b16 %v4532
        %v4595 = vunpack.c.l.b16 %v4534
        %v4596 = vunpack.c.l.b16 %v4536
        %v4597 = vunpack.c.l.b16 %v4538
        %v4598 = vunpack.c.l.b16 %v4540
        %v4599 = vunpack.c.l.b16 %v4542
        %v4600 = vunpack.c.l.b16 %v4571
        %v4601 = vpack.c.b16 %v4594, %v4593
        %v4602 = vpack.c.b16 %v4596, %v4595
        %v4603 = vpack.c.b16 %v4598, %v4597
        %v4604 = vpack.c.b16 %v4600, %v4599
        %v4617 = vunpack.c.l.b16 %v4573
        %v4618 = vunpack.c.l.b16 %v4574
        %v4619 = vunpack.c.l.b16 %v4575
        %v4620 = vunpack.c.l.b16 %v4576
        %v4621 = vunpack.c.l.b16 %v4577
        %v4622 = vunpack.c.l.b16 %v4578
        %v4623 = vunpack.c.l.b16 %v4579
        %v4624 = vunpack.c.l.b16 %v4580
        %v4625 = vunpack.c.l.b16 %v4581
        %v4626 = vunpack.c.l.b16 %v4582
        %v4627 = vunpack.c.l.b16 %v4583
        %v4628 = vunpack.c.l.b16 %v4584
        %v4629 = vpack.c.b16 %v4618, %v4617
        %v4630 = vpack.c.b16 %v4620, %v4619
        %v4631 = vpack.c.b16 %v4622, %v4621
        %v4632 = vpack.c.b16 %v4624, %v4623
        %v4633 = vpack.c.b16 %v4626, %v4625
        %v4634 = vpack.c.b16 %v4628, %v4627
        %vm4641 = vcmask 785408
        %v4643 = vsel %vm4641, %v4601, 0
        %v4646 = vsel %vm4641, %v4602, 0
        %v4649 = vsel %vm4641, %v4603, 0
        %v4652 = vsel %vm4641, %v4604, 0
        %4654 = vmatprep.subr.bf16.mxu0 0
        %4655 = vmatpush1.bf16.msra.mxu0 %v4629
        %4656 = vmatprep.subr.bf16.mxu0 0
        %4657 = vmatpush1.bf16.msra.mxu0 %v4630
        %4658 = vmatprep.subr.bf16.mxu0 0
        %4659 = vmatpush1.bf16.msra.mxu0 %v4631
        %4660 = vmatprep.subr.bf16.mxu0 0
        %4661 = vmatpush1.bf16.msra.mxu0 %v4632
        %4662 = vmatprep.subr.bf16.mxu0 0
        %4663 = vmatpush1.bf16.msra.mxu0 %v4633
        %4664 = vmatprep.subr.bf16.mxu0 0
        %4665 = vmatpush1.bf16.msra.mxu0 %v4634
        %4666 = vmatprep.subr.bf16.mxu0 0
        %4667 = vmatpush1.bf16.msra.mxu0 0
        %4668 = vmatprep.subr.bf16.mxu0 0
        %4669 = vmatpush1.bf16.msra.mxu0 0
        %4670 = vmatprep.subr.bf16.mxu0 0
        %4671 = vmatpush1.bf16.msra.mxu0 0
        %4672 = vmatprep.subr.bf16.mxu0 0
        %4673 = vmatpush1.bf16.msra.mxu0 0
        %4674 = vmatprep.subr.bf16.mxu0 0
        %4675 = vmatpush1.bf16.msra.mxu0 0
        %4676 = vmatprep.subr.bf16.mxu0 0
        %4677 = vmatpush1.bf16.msra.mxu0 0
        %4678 = vmatprep.subr.bf16.mxu0 0
        %4679 = vmatpush1.bf16.msra.mxu0 0
        %4680 = vmatprep.subr.bf16.mxu0 0
        %4681 = vmatpush1.bf16.msra.mxu0 0
        %4682 = vmatprep.subr.bf16.mxu0 0
        %4683 = vmatpush1.bf16.msra.mxu0 0
        %4684 = vmatprep.subr.bf16.mxu0 0
        %4685 = vmatpush1.bf16.msra.mxu0 0
        %4686 = vmatprep.mubr.bf16.mxu0 0
        %4687 = vmatmul.mubr.bf16.gmra.mrb[0].mxu0 %v4643
        %v4688 = vpop.f32.mrb[0].mxu0
        %v4689 = vadd.f32 0.0, %v4688
        %v4690 = vpop.f32.mrb[0].mxu0
        %v4691 = vpop.f32.mrb[0].mxu0
        %v4692 = vadd.f32 0.0, %v4691
        %v4693 = vpop.f32.mrb[0].mxu0
        %4694 = vmatprep.mubr.bf16.mxu0 0
        %4695 = vmatmul.mubr.bf16.gmra.mrb[0].mxu0 %v4646
        %v4696 = vpop.f32.mrb[0].mxu0
        %v4697 = vadd.f32 0.0, %v4696
        %v4698 = vpop.f32.mrb[0].mxu0
        %v4699 = vpop.f32.mrb[0].mxu0
        %v4700 = vadd.f32 0.0, %v4699
        %v4701 = vpop.f32.mrb[0].mxu0
        %4702 = vmatprep.mubr.bf16.mxu0 0
        %4703 = vmatmul.mubr.bf16.gmra.mrb[0].mxu0 %v4649
        %v4704 = vpop.f32.mrb[0].mxu0
        %v4705 = vadd.f32 0.0, %v4704
        %v4706 = vpop.f32.mrb[0].mxu0
        %v4707 = vpop.f32.mrb[0].mxu0
        %v4708 = vadd.f32 0.0, %v4707
        %v4709 = vpop.f32.mrb[0].mxu0
        %4710 = vmatprep.mubr.bf16.mxu0 0
        %4711 = vmatmul.mubr.bf16.gmra.mrb[0].mxu0 %v4652
        %v4712 = vpop.f32.mrb[0].mxu0
        %v4713 = vadd.f32 0.0, %v4712
        %v4714 = vpop.f32.mrb[0].mxu0
        %v4715 = vpop.f32.mrb[0].mxu0
        %v4716 = vadd.f32 0.0, %v4715
        %v4717 = vpop.f32.mrb[0].mxu0
        %4718 = vdwg.mxu0
        %v4720 = vunpack.c.l.b16 %v4528
        %v4721 = vpack.c.b16 %v4593, %v4720
        %v4722 = vpack.c.b16 %v4595, %v4594
        %v4723 = vpack.c.b16 %v4597, %v4596
        %v4724 = vpack.c.b16 %v4599, %v4598
        %v4737 = vunpack.c.l.b16 %v4543
        %v4738 = vunpack.c.l.b16 %v4544
        %v4739 = vunpack.c.l.b16 %v4545
        %v4740 = vunpack.c.l.b16 %v4546
        %v4741 = vunpack.c.l.b16 %v4547
        %v4742 = vunpack.c.l.b16 %v4548
        %v4743 = vunpack.c.l.b16 %v4549
        %v4744 = vunpack.c.l.b16 %v4550
        %v4745 = vunpack.c.l.b16 %v4551
        %v4746 = vunpack.c.l.b16 %v4552
        %v4747 = vunpack.c.l.b16 %v4553
        %v4748 = vunpack.c.l.b16 %v4554
        %v4749 = vpack.c.b16 %v4738, %v4737
        %v4750 = vpack.c.b16 %v4740, %v4739
        %v4751 = vpack.c.b16 %v4742, %v4741
        %v4752 = vpack.c.b16 %v4744, %v4743
        %v4753 = vpack.c.b16 %v4746, %v4745
        %v4754 = vpack.c.b16 %v4748, %v4747
        %v4762 = vsel %vm4641, %v4721, 0
        %v4765 = vsel %vm4641, %v4722, 0
        %v4768 = vsel %vm4641, %v4723, 0
        %v4771 = vsel %vm4641, %v4724, 0
        %4773 = vmatprep.subr.bf16.mxu0 0
        %4774 = vmatpush1.bf16.msra.mxu0 %v4749
        %4775 = vmatprep.subr.bf16.mxu0 0
        %4776 = vmatpush1.bf16.msra.mxu0 %v4750
        %4777 = vmatprep.subr.bf16.mxu0 0
        %4778 = vmatpush1.bf16.msra.mxu0 %v4751
        %4779 = vmatprep.subr.bf16.mxu0 0
        %4780 = vmatpush1.bf16.msra.mxu0 %v4752
        %4781 = vmatprep.subr.bf16.mxu0 0
        %4782 = vmatpush1.bf16.msra.mxu0 %v4753
        %4783 = vmatprep.subr.bf16.mxu0 0
        %4784 = vmatpush1.bf16.msra.mxu0 %v4754
        %4785 = vmatprep.subr.bf16.mxu0 0
        %4786 = vmatpush1.bf16.msra.mxu0 0
        %4787 = vmatprep.subr.bf16.mxu0 0
        %4788 = vmatpush1.bf16.msra.mxu0 0
        %4789 = vmatprep.subr.bf16.mxu0 0
        %4790 = vmatpush1.bf16.msra.mxu0 0
        %4791 = vmatprep.subr.bf16.mxu0 0
        %4792 = vmatpush1.bf16.msra.mxu0 0
        %4793 = vmatprep.subr.bf16.mxu0 0
        %4794 = vmatpush1.bf16.msra.mxu0 0
        %4795 = vmatprep.subr.bf16.mxu0 0
        %4796 = vmatpush1.bf16.msra.mxu0 0
        %4797 = vmatprep.subr.bf16.mxu0 0
        %4798 = vmatpush1.bf16.msra.mxu0 0
        %4799 = vmatprep.subr.bf16.mxu0 0
        %4800 = vmatpush1.bf16.msra.mxu0 0
        %4801 = vmatprep.subr.bf16.mxu0 0
        %4802 = vmatpush1.bf16.msra.mxu0 0
        %4803 = vmatprep.subr.bf16.mxu0 0
        %4804 = vmatpush1.bf16.msra.mxu0 0
        %4805 = vmatprep.mubr.bf16.mxu0 0
        %4806 = vmatmul.mubr.bf16.gmra.mrb[0].mxu0 %v4762
        %v4807 = vpop.f32.mrb[0].mxu0
        %v4808 = vadd.f32 %v4689, %v4807
        %v4809 = vpop.f32.mrb[0].mxu0
        %v4810 = vpop.f32.mrb[0].mxu0
        %v4811 = vadd.f32 %v4692, %v4810
        %v4812 = vpop.f32.mrb[0].mxu0
        %4813 = vmatprep.mubr.bf16.mxu0 0
        %4814 = vmatmul.mubr.bf16.gmra.mrb[0].mxu0 %v4765
        %v4815 = vpop.f32.mrb[0].mxu0
        %v4816 = vadd.f32 %v4697, %v4815
        %v4817 = vpop.f32.mrb[0].mxu0
        %v4818 = vpop.f32.mrb[0].mxu0
        %v4819 = vadd.f32 %v4700, %v4818
        %v4820 = vpop.f32.mrb[0].mxu0
        %4821 = vmatprep.mubr.bf16.mxu0 0
        %4822 = vmatmul.mubr.bf16.gmra.mrb[0].mxu0 %v4768
        %v4823 = vpop.f32.mrb[0].mxu0
        %v4824 = vadd.f32 %v4705, %v4823
        %v4825 = vpop.f32.mrb[0].mxu0
        %v4826 = vpop.f32.mrb[0].mxu0
        %v4827 = vadd.f32 %v4708, %v4826
        %v4828 = vpop.f32.mrb[0].mxu0
        %4829 = vmatprep.mubr.bf16.mxu0 0
        %4830 = vmatmul.mubr.bf16.gmra.mrb[0].mxu0 %v4771
        %v4831 = vpop.f32.mrb[0].mxu0
        %v4832 = vadd.f32 %v4713, %v4831
        %v4833 = vpop.f32.mrb[0].mxu0
        %v4834 = vpop.f32.mrb[0].mxu0
        %v4835 = vadd.f32 %v4716, %v4834
        %v4836 = vpop.f32.mrb[0].mxu0
        %4837 = vdwg.mxu0
        %s4838 = scalar_lea.vmem %s3, 96
        %v4839 = vld [vmem:[%s4838] sm:$0xf]
        %v4840 = vld [vmem:[%s4838 + $0x4] sm:$0xf]
        %v4841 = vld [vmem:[%s4838 + $0x8] sm:$0xf]
        %v4842 = vld [vmem:[%s4838 + $0xc] sm:$0xf]
        %v4843 = vld [vmem:[%s4838 + $0x10] sm:$0xf]
        %v4844 = vld [vmem:[%s4838 + $0x14] sm:$0xf]
        %v4845 = vld [vmem:[%s4838 + $0x18] sm:$0xf]
        %v4846 = vld [vmem:[%s4838 + $0x1c] sm:$0xf]
        %v4847 = vld [vmem:[%s4838 + $0x20] sm:$0xf]
        %v4848 = vld [vmem:[%s4838 + $0x24] sm:$0xf]
        %v4849 = vld [vmem:[%s4838 + $0x28] sm:$0xf]
        %v4850 = vld [vmem:[%s4838 + $0x2c] sm:$0xf]
        %v4851 = vpack.c.b16 %v4720, %v4600
        %v4864 = vunpack.c.l.b16 %v4839
        %v4865 = vunpack.c.l.b16 %v4840
        %v4866 = vunpack.c.l.b16 %v4841
        %v4867 = vunpack.c.l.b16 %v4842
        %v4868 = vunpack.c.l.b16 %v4843
        %v4869 = vunpack.c.l.b16 %v4844
        %v4870 = vunpack.c.l.b16 %v4845
        %v4871 = vunpack.c.l.b16 %v4846
        %v4872 = vunpack.c.l.b16 %v4847
        %v4873 = vunpack.c.l.b16 %v4848
        %v4874 = vunpack.c.l.b16 %v4849
        %v4875 = vunpack.c.l.b16 %v4850
        %v4876 = vpack.c.b16 %v4865, %v4864
        %v4877 = vpack.c.b16 %v4867, %v4866
        %v4878 = vpack.c.b16 %v4869, %v4868
        %v4879 = vpack.c.b16 %v4871, %v4870
        %v4880 = vpack.c.b16 %v4873, %v4872
        %v4881 = vpack.c.b16 %v4875, %v4874
        %v4889 = vsel %vm4641, %v4851, 0
        %4891 = vmatprep.subr.bf16.mxu0 0
        %4892 = vmatpush1.bf16.msra.mxu0 %v4876
        %4893 = vmatprep.subr.bf16.mxu0 0
        %4894 = vmatpush1.bf16.msra.mxu0 %v4877
        %4895 = vmatprep.subr.bf16.mxu0 0
        %4896 = vmatpush1.bf16.msra.mxu0 %v4878
        %4897 = vmatprep.subr.bf16.mxu0 0
        %4898 = vmatpush1.bf16.msra.mxu0 %v4879
        %4899 = vmatprep.subr.bf16.mxu0 0
        %4900 = vmatpush1.bf16.msra.mxu0 %v4880
        %4901 = vmatprep.subr.bf16.mxu0 0
        %4902 = vmatpush1.bf16.msra.mxu0 %v4881
        %4903 = vmatprep.subr.bf16.mxu0 0
        %4904 = vmatpush1.bf16.msra.mxu0 0
        %4905 = vmatprep.subr.bf16.mxu0 0
        %4906 = vmatpush1.bf16.msra.mxu0 0
        %4907 = vmatprep.subr.bf16.mxu0 0
        %4908 = vmatpush1.bf16.msra.mxu0 0
        %4909 = vmatprep.subr.bf16.mxu0 0
        %4910 = vmatpush1.bf16.msra.mxu0 0
        %4911 = vmatprep.subr.bf16.mxu0 0
        %4912 = vmatpush1.bf16.msra.mxu0 0
        %4913 = vmatprep.subr.bf16.mxu0 0
        %4914 = vmatpush1.bf16.msra.mxu0 0
        %4915 = vmatprep.subr.bf16.mxu0 0
        %4916 = vmatpush1.bf16.msra.mxu0 0
        %4917 = vmatprep.subr.bf16.mxu0 0
        %4918 = vmatpush1.bf16.msra.mxu0 0
        %4919 = vmatprep.subr.bf16.mxu0 0
        %4920 = vmatpush1.bf16.msra.mxu0 0
        %4921 = vmatprep.subr.bf16.mxu0 0
        %4922 = vmatpush1.bf16.msra.mxu0 0
        %4923 = vmatprep.mubr.bf16.mxu0 0
        %4924 = vmatmul.mubr.bf16.gmra.mrb[0].mxu0 %v4765
        %v4925 = vpop.f32.mrb[0].mxu0
        %v4926 = vadd.f32 0.0, %v4925
        %v4927 = vpop.f32.mrb[0].mxu0
        %v4928 = vpop.f32.mrb[0].mxu0
        %v4929 = vadd.f32 0.0, %v4928
        %v4930 = vpop.f32.mrb[0].mxu0
        %4931 = vmatprep.mubr.bf16.mxu0 0
        %4932 = vmatmul.mubr.bf16.gmra.mrb[0].mxu0 %v4768
        %v4933 = vpop.f32.mrb[0].mxu0
        %v4934 = vadd.f32 0.0, %v4933
        %v4935 = vpop.f32.mrb[0].mxu0
        %v4936 = vpop.f32.mrb[0].mxu0
        %v4937 = vadd.f32 0.0, %v4936
        %v4938 = vpop.f32.mrb[0].mxu0
        %4939 = vmatprep.mubr.bf16.mxu0 0
        %4940 = vmatmul.mubr.bf16.gmra.mrb[0].mxu0 %v4771
        %v4941 = vpop.f32.mrb[0].mxu0
        %v4942 = vadd.f32 0.0, %v4941
        %v4943 = vpop.f32.mrb[0].mxu0
        %v4944 = vpop.f32.mrb[0].mxu0
        %v4945 = vadd.f32 0.0, %v4944
        %v4946 = vpop.f32.mrb[0].mxu0
        %4947 = vmatprep.mubr.bf16.mxu0 0
        %4948 = vmatmul.mubr.bf16.gmra.mrb[0].mxu0 %v4889
        %v4949 = vpop.f32.mrb[0].mxu0
        %v4950 = vadd.f32 0.0, %v4949
        %v4951 = vpop.f32.mrb[0].mxu0
        %v4952 = vpop.f32.mrb[0].mxu0
        %v4953 = vadd.f32 0.0, %v4952
        %v4954 = vpop.f32.mrb[0].mxu0
        %4955 = vdwg.mxu0
        %v4956 = vadd.f32 %v4808, %v4926
        %v4957 = vadd.f32 %v4811, %v4929
        %v4958 = vadd.f32 %v4816, %v4934
        %v4959 = vadd.f32 %v4819, %v4937
        %v4960 = vadd.f32 %v4824, %v4942
        %v4961 = vadd.f32 %v4827, %v4945
        %v4962 = vadd.f32 %v4832, %v4950
        %v4963 = vadd.f32 %v4835, %v4953
        %v4964 = vld [vmem:[%s4] sm:$0x1]
        %v4966 = vlaneseq
        %v4967 = vshrl.u32 %v4966, 7
        %v4968 = vsub.s32 0, %v4967
        %v4969 = vrot.slane %v4964, %v4968
        %v4971 = vadd.f32 %v4956, %v4969
        %v4972 = vadd.f32 %v4957, %v4969
        %v4973 = vadd.f32 %v4958, %v4969
        %v4974 = vadd.f32 %v4959, %v4969
        %v4975 = vadd.f32 %v4960, %v4969
        %v4976 = vadd.f32 %v4961, %v4969
        %v4977 = vadd.f32 %v4962, %v4969
        %v4978 = vadd.f32 %v4963, %v4969
        %v4979 = vmax.f32 %v4971, 0.0
        %v4980 = vmax.f32 %v4972, 0.0
        %v4981 = vmax.f32 %v4973, 0.0
        %v4982 = vmax.f32 %v4974, 0.0
        %v4983 = vmax.f32 %v4975, 0.0
        %v4984 = vmax.f32 %v4976, 0.0
        %v4985 = vmax.f32 %v4977, 0.0
        %v4986 = vmax.f32 %v4978, 0.0
        %v4995 = vcombine.high %v4979, %v4979
        %v4997 = vunpack.c.l.s4 1983009808
        %v4998 = vunpack.c.0.s8 %v4997
        %v4999 = vlaneseq
        %v5000 = vshrl.u32 %v4999, 7
        %v5001 = vsub.s32 %v4998, %v5000
        %v5002 = vrot.slane %v4979, %v5001
        %v5004 = vunpack.c.l.s4 1983009808
        %v5005 = vunpack.c.0.s8 %v5004
        %v5006 = vlaneseq
        %v5007 = vshrl.u32 %v5006, 7
        %v5008 = vsub.s32 %v5005, %v5007
        %v5009 = vrot.slane %v4995, %v5008
        %v5010 = vcombine.high %v5002, %v5002
        %v5011 = vcombine.high %v5009, %v5009
        %v5012 = vcombine.high %v4980, %v4980
        %v5014 = vunpack.c.l.s4 1983009808
        %v5015 = vunpack.c.0.s8 %v5014
        %v5016 = vlaneseq
        %v5017 = vshrl.u32 %v5016, 7
        %v5018 = vsub.s32 %v5015, %v5017
        %v5019 = vrot.slane %v4980, %v5018
        %v5021 = vunpack.c.l.s4 1983009808
        %v5022 = vunpack.c.0.s8 %v5021
        %v5023 = vlaneseq
        %v5024 = vshrl.u32 %v5023, 7
        %v5025 = vsub.s32 %v5022, %v5024
        %v5026 = vrot.slane %v5012, %v5025
        %v5027 = vcombine.high %v5019, %v5019
        %v5028 = vcombine.high %v5026, %v5026
        %v5029 = vcombine.high %v4981, %v4981
        %v5031 = vunpack.c.l.s4 1983009808
        %v5032 = vunpack.c.0.s8 %v5031
        %v5033 = vlaneseq
        %v5034 = vshrl.u32 %v5033, 7
        %v5035 = vsub.s32 %v5032, %v5034
        %v5036 = vrot.slane %v4981, %v5035
        %v5038 = vunpack.c.l.s4 1983009808
        %v5039 = vunpack.c.0.s8 %v5038
        %v5040 = vlaneseq
        %v5041 = vshrl.u32 %v5040, 7
        %v5042 = vsub.s32 %v5039, %v5041
        %v5043 = vrot.slane %v5029, %v5042
        %v5044 = vcombine.high %v5036, %v5036
        %v5045 = vcombine.high %v5043, %v5043
        %v5046 = vcombine.high %v4982, %v4982
        %v5048 = vunpack.c.l.s4 1983009808
        %v5049 = vunpack.c.0.s8 %v5048
        %v5050 = vlaneseq
        %v5051 = vshrl.u32 %v5050, 7
        %v5052 = vsub.s32 %v5049, %v5051
        %v5053 = vrot.slane %v4982, %v5052
        %v5055 = vunpack.c.l.s4 1983009808
        %v5056 = vunpack.c.0.s8 %v5055
        %v5057 = vlaneseq
        %v5058 = vshrl.u32 %v5057, 7
        %v5059 = vsub.s32 %v5056, %v5058
        %v5060 = vrot.slane %v5046, %v5059
        %v5061 = vcombine.high %v5053, %v5053
        %v5062 = vcombine.high %v5060, %v5060
        %v5063 = vcombine.high %v4983, %v4983
        %v5065 = vunpack.c.l.s4 1983009808
        %v5066 = vunpack.c.0.s8 %v5065
        %v5067 = vlaneseq
        %v5068 = vshrl.u32 %v5067, 7
        %v5069 = vsub.s32 %v5066, %v5068
        %v5070 = vrot.slane %v4983, %v5069
        %v5072 = vunpack.c.l.s4 1983009808
        %v5073 = vunpack.c.0.s8 %v5072
        %v5074 = vlaneseq
        %v5075 = vshrl.u32 %v5074, 7
        %v5076 = vsub.s32 %v5073, %v5075
        %v5077 = vrot.slane %v5063, %v5076
        %v5078 = vcombine.high %v5070, %v5070
        %v5079 = vcombine.high %v5077, %v5077
        %v5080 = vcombine.high %v4984, %v4984
        %v5082 = vunpack.c.l.s4 1983009808
        %v5083 = vunpack.c.0.s8 %v5082
        %v5084 = vlaneseq
        %v5085 = vshrl.u32 %v5084, 7
        %v5086 = vsub.s32 %v5083, %v5085
        %v5087 = vrot.slane %v4984, %v5086
        %v5089 = vunpack.c.l.s4 1983009808
        %v5090 = vunpack.c.0.s8 %v5089
        %v5091 = vlaneseq
        %v5092 = vshrl.u32 %v5091, 7
        %v5093 = vsub.s32 %v5090, %v5092
        %v5094 = vrot.slane %v5080, %v5093
        %v5095 = vcombine.high %v5087, %v5087
        %v5096 = vcombine.high %v5094, %v5094
        %v5097 = vcombine.high %v4985, %v4985
        %v5099 = vunpack.c.l.s4 1983009808
        %v5100 = vunpack.c.0.s8 %v5099
        %v5101 = vlaneseq
        %v5102 = vshrl.u32 %v5101, 7
        %v5103 = vsub.s32 %v5100, %v5102
        %v5104 = vrot.slane %v4985, %v5103
        %v5106 = vunpack.c.l.s4 1983009808
        %v5107 = vunpack.c.0.s8 %v5106
        %v5108 = vlaneseq
        %v5109 = vshrl.u32 %v5108, 7
        %v5110 = vsub.s32 %v5107, %v5109
        %v5111 = vrot.slane %v5097, %v5110
        %v5112 = vcombine.high %v5104, %v5104
        %v5113 = vcombine.high %v5111, %v5111
        %v5114 = vcombine.high %v4986, %v4986
        %v5116 = vunpack.c.l.s4 1983009808
        %v5117 = vunpack.c.0.s8 %v5116
        %v5118 = vlaneseq
        %v5119 = vshrl.u32 %v5118, 7
        %v5120 = vsub.s32 %v5117, %v5119
        %v5121 = vrot.slane %v4986, %v5120
        %v5123 = vunpack.c.l.s4 1983009808
        %v5124 = vunpack.c.0.s8 %v5123
        %v5125 = vlaneseq
        %v5126 = vshrl.u32 %v5125, 7
        %v5127 = vsub.s32 %v5124, %v5126
        %v5128 = vrot.slane %v5114, %v5127
        %v5129 = vcombine.high %v5121, %v5121
        %v5130 = vcombine.high %v5128, %v5128
        %v5163 = vrot.slane %v5002, 7
        %v5164 = vrot.slane %v5163, 2
        %v5165 = vrot.slane %v5010, 7
        %v5166 = vrot.slane %v5165, 2
        %v5167 = vrot.slane %v5009, 7
        %v5168 = vrot.slane %v5167, 2
        %v5169 = vrot.slane %v5011, 7
        %v5170 = vrot.slane %v5169, 2
        %v5171 = vrot.slane %v5036, 7
        %v5172 = vrot.slane %v5171, 2
        %v5173 = vrot.slane %v5044, 7
        %v5174 = vrot.slane %v5173, 2
        %v5175 = vrot.slane %v5043, 7
        %v5176 = vrot.slane %v5175, 2
        %v5177 = vrot.slane %v5045, 7
        %v5178 = vrot.slane %v5177, 2
        %v5179 = vrot.slane %v5070, 7
        %v5180 = vrot.slane %v5179, 2
        %v5181 = vrot.slane %v5078, 7
        %v5182 = vrot.slane %v5181, 2
        %v5183 = vrot.slane %v5077, 7
        %v5184 = vrot.slane %v5183, 2
        %v5185 = vrot.slane %v5079, 7
        %v5186 = vrot.slane %v5185, 2
        %v5187 = vrot.slane %v5104, 7
        %v5188 = vrot.slane %v5187, 2
        %v5189 = vrot.slane %v5112, 7
        %v5190 = vrot.slane %v5189, 2
        %v5191 = vrot.slane %v5111, 7
        %v5192 = vrot.slane %v5191, 2
        %v5193 = vrot.slane %v5113, 7
        %v5194 = vrot.slane %v5193, 2
        %v5211 = vmax.f32 %v5002, %v5164
        %v5212 = vmax.f32 %v5010, %v5166
        %v5213 = vmax.f32 %v5009, %v5168
        %v5214 = vmax.f32 %v5011, %v5170
        %v5215 = vmax.f32 %v5036, %v5172
        %v5216 = vmax.f32 %v5044, %v5174
        %v5217 = vmax.f32 %v5043, %v5176
        %v5218 = vmax.f32 %v5045, %v5178
        %v5219 = vmax.f32 %v5070, %v5180
        %v5220 = vmax.f32 %v5078, %v5182
        %v5221 = vmax.f32 %v5077, %v5184
        %v5222 = vmax.f32 %v5079, %v5186
        %v5223 = vmax.f32 %v5104, %v5188
        %v5224 = vmax.f32 %v5112, %v5190
        %v5225 = vmax.f32 %v5111, %v5192
        %v5226 = vmax.f32 %v5113, %v5194
        %v5227 = vrot.slane %v5019, 7
        %v5228 = vrot.slane %v5227, 2
        %v5229 = vrot.slane %v5027, 7
        %v5230 = vrot.slane %v5229, 2
        %v5231 = vrot.slane %v5026, 7
        %v5232 = vrot.slane %v5231, 2
        %v5233 = vrot.slane %v5028, 7
        %v5234 = vrot.slane %v5233, 2
        %v5235 = vrot.slane %v5053, 7
        %v5236 = vrot.slane %v5235, 2
        %v5237 = vrot.slane %v5061, 7
        %v5238 = vrot.slane %v5237, 2
        %v5239 = vrot.slane %v5060, 7
        %v5240 = vrot.slane %v5239, 2
        %v5241 = vrot.slane %v5062, 7
        %v5242 = vrot.slane %v5241, 2
        %v5243 = vrot.slane %v5087, 7
        %v5244 = vrot.slane %v5243, 2
        %v5245 = vrot.slane %v5095, 7
        %v5246 = vrot.slane %v5245, 2
        %v5247 = vrot.slane %v5094, 7
        %v5248 = vrot.slane %v5247, 2
        %v5249 = vrot.slane %v5096, 7
        %v5250 = vrot.slane %v5249, 2
        %v5251 = vrot.slane %v5121, 7
        %v5252 = vrot.slane %v5251, 2
        %v5253 = vrot.slane %v5129, 7
        %v5254 = vrot.slane %v5253, 2
        %v5255 = vrot.slane %v5128, 7
        %v5256 = vrot.slane %v5255, 2
        %v5257 = vrot.slane %v5130, 7
        %v5258 = vrot.slane %v5257, 2
        %v5275 = vmax.f32 %v5019, %v5228
        %v5276 = vmax.f32 %v5027, %v5230
        %v5277 = vmax.f32 %v5026, %v5232
        %v5278 = vmax.f32 %v5028, %v5234
        %v5279 = vmax.f32 %v5053, %v5236
        %v5280 = vmax.f32 %v5061, %v5238
        %v5281 = vmax.f32 %v5060, %v5240
        %v5282 = vmax.f32 %v5062, %v5242
        %v5283 = vmax.f32 %v5087, %v5244
        %v5284 = vmax.f32 %v5095, %v5246
        %v5285 = vmax.f32 %v5094, %v5248
        %v5286 = vmax.f32 %v5096, %v5250
        %v5287 = vmax.f32 %v5121, %v5252
        %v5288 = vmax.f32 %v5129, %v5254
        %v5289 = vmax.f32 %v5128, %v5256
        %v5290 = vmax.f32 %v5130, %v5258
        %v5291 = vmax.f32 %v5211, %v5275
        %v5292 = vmax.f32 %v5212, %v5276
        %v5293 = vmax.f32 %v5213, %v5277
        %v5294 = vmax.f32 %v5214, %v5278
        %v5295 = vmax.f32 %v5215, %v5279
        %v5296 = vmax.f32 %v5216, %v5280
        %v5297 = vmax.f32 %v5217, %v5281
        %v5298 = vmax.f32 %v5218, %v5282
        %v5299 = vmax.f32 %v5219, %v5283
        %v5300 = vmax.f32 %v5220, %v5284
        %v5301 = vmax.f32 %v5221, %v5285
        %v5302 = vmax.f32 %v5222, %v5286
        %v5303 = vmax.f32 %v5223, %v5287
        %v5304 = vmax.f32 %v5224, %v5288
        %v5305 = vmax.f32 %v5225, %v5289
        %v5306 = vmax.f32 %v5226, %v5290
        %v5311 = vlaneseq
        %v5312 = vshrl.u32 %v5311, 7
        %v5313 = vsub.s32 0, %v5312
        %v5314 = vrot.slane %v5291, %v5313
        %v5315 = vlaneseq
        %v5316 = vshrl.u32 %v5315, 7
        %v5317 = vsub.s32 0, %v5316
        %v5318 = vrot.slane %v5295, %v5317
        %v5319 = vlaneseq
        %v5320 = vshrl.u32 %v5319, 7
        %v5321 = vsub.s32 0, %v5320
        %v5322 = vrot.slane %v5299, %v5321
        %v5323 = vlaneseq
        %v5324 = vshrl.u32 %v5323, 7
        %v5325 = vsub.s32 0, %v5324
        %v5326 = vrot.slane %v5303, %v5325
        %vm5327 = vcmask 1041409
        %v5328 = vsel %vm5327, %v5318, %v5314
        %v5329 = vsel %vm4259, %v5322, %v5328
        %v5330 = vsel %vm4262, %v5326, %v5329
        %v5336 = vlaneseq
        %v5337 = vshrl.u32 %v5336, 7
        %v5338 = vsub.s32 0, %v5337
        %v5339 = vrot.slane %v5292, %v5338
        %v5340 = vlaneseq
        %v5341 = vshrl.u32 %v5340, 7
        %v5342 = vsub.s32 0, %v5341
        %v5343 = vrot.slane %v5296, %v5342
        %v5344 = vlaneseq
        %v5345 = vshrl.u32 %v5344, 7
        %v5346 = vsub.s32 0, %v5345
        %v5347 = vrot.slane %v5300, %v5346
        %v5348 = vlaneseq
        %v5349 = vshrl.u32 %v5348, 7
        %v5350 = vsub.s32 0, %v5349
        %v5351 = vrot.slane %v5304, %v5350
        %v5352 = vsel %vm5327, %v5343, %v5339
        %v5353 = vsel %vm4259, %v5347, %v5352
        %v5354 = vsel %vm4262, %v5351, %v5353
        %5355 = vrot.lane.b32.xlu0 %v5354, 64
        %v5356 = vpop.permute.xlu0 %5355
        %v5362 = vlaneseq
        %v5363 = vshrl.u32 %v5362, 7
        %v5364 = vsub.s32 0, %v5363
        %v5365 = vrot.slane %v5293, %v5364
        %v5366 = vlaneseq
        %v5367 = vshrl.u32 %v5366, 7
        %v5368 = vsub.s32 0, %v5367
        %v5369 = vrot.slane %v5297, %v5368
        %v5370 = vlaneseq
        %v5371 = vshrl.u32 %v5370, 7
        %v5372 = vsub.s32 0, %v5371
        %v5373 = vrot.slane %v5301, %v5372
        %v5374 = vlaneseq
        %v5375 = vshrl.u32 %v5374, 7
        %v5376 = vsub.s32 0, %v5375
        %v5377 = vrot.slane %v5305, %v5376
        %v5378 = vsel %vm5327, %v5369, %v5365
        %v5379 = vsel %vm4259, %v5373, %v5378
        %v5380 = vsel %vm4262, %v5377, %v5379
        %v5386 = vlaneseq
        %v5387 = vshrl.u32 %v5386, 7
        %v5388 = vsub.s32 0, %v5387
        %v5389 = vrot.slane %v5294, %v5388
        %v5390 = vlaneseq
        %v5391 = vshrl.u32 %v5390, 7
        %v5392 = vsub.s32 0, %v5391
        %v5393 = vrot.slane %v5298, %v5392
        %v5394 = vlaneseq
        %v5395 = vshrl.u32 %v5394, 7
        %v5396 = vsub.s32 0, %v5395
        %v5397 = vrot.slane %v5302, %v5396
        %v5398 = vlaneseq
        %v5399 = vshrl.u32 %v5398, 7
        %v5400 = vsub.s32 0, %v5399
        %v5401 = vrot.slane %v5306, %v5400
        %v5402 = vsel %vm5327, %v5393, %v5389
        %v5403 = vsel %vm4259, %v5397, %v5402
        %v5404 = vsel %vm4262, %v5401, %v5403
        %5405 = vrot.lane.b32.xlu0 %v5404, 64
        %v5406 = vpop.permute.xlu0 %5405
        %v5408 = vsel %vm4526, %v5330, %v5356
        %v5409 = vsel %vm4526, %v5380, %v5406
        %v5410 = vpack.c.bf16 %v5408, %v5408
        %v5411 = vpack.c.bf16 %v5409, %v5409
        %v5414 = vcombine.low %v5410, %v5411
        %v5416 = vunpack.c.l.s4 1983009808
        %v5417 = vunpack.c.0.s8 %v5416
        %v5418 = vlaneseq
        %v5419 = vshrl.u32 %v5418, 7
        %v5420 = vsub.s32 %v5417, %v5419
        %v5421 = vrot.slane %v5414, %v5420
        %5423 = vst [vmem:[%s217] sm:$0xf] %v5421
        %s5424 = sand.u32 %s137, 1
        %s5425 = scalar_lea.sflag [#allocation3], %s5424
        %s5426 = sand.u32 %s137, 1
        %s5427 = smul.addr %s5426, 4
        %s5428 = scalar_lea.vmem [#allocation2], %s5427
        // Predicated region
        $region41: #{tpu_custom_call.1} parent=39 // pred_check
          %p5429 = pneg %p147
        $region42: #{tpu_custom_call.1} parent=39 // pred_check_branch
          %5431 = sbr.rel (%p5429) target = $region44
        $region43: #{tpu_custom_call.1} parent=39 // pred_region
          %s5433 = ssub.s32 64, 64
          %5434 = vsyncadd %s5425, %s5433
          %s5435 = smul.addr %s19, 2
          %s5436 = smul.addr %s5435, 32
          %s5437 = scalar_lea.hbm %s5, %s5436
          %s5439 = sshll.u32 %s5428, 4
          %s5440 = int_to_ptr.vmem [resolvable:$true] %s5439
          %5442 = dma.vmem_to_hbm [thread:$0]  %s5440, 64, %s5437, %s5425
        $region44: #{tpu_custom_call.1} parent=39 // pred_fallthru
          _
      $region40: #{tpu_custom_call.1} parent=5 // pred_fallthru
        _
      %p5443 = scmp.le.s32.totalorder 2, %s14
      // Predicated region
      $region45: #{tpu_custom_call.1} parent=5 // pred_check
        %p5444 = pneg %p5443
      $region46: #{tpu_custom_call.1} parent=5 // pred_check_branch
        %5446 = sbr.rel (%p5444) target = $region48
      $region47: #{tpu_custom_call.1} parent=5 // pred_region
        %s5447 = ssub.s32 %s14, 2
        // Predicated region
        $region49: #{tpu_custom_call.1} parent=47 // pred_check
          %p5448 = pneg %p153
        $region50: #{tpu_custom_call.1} parent=47 // pred_check_branch
          %5450 = sbr.rel (%p5448) target = $region52
        $region51: #{tpu_custom_call.1} parent=47 // pred_region
          %s5451 = sand.u32 %s138, 1
          %s5452 = scalar_lea.sflag [#allocation3], %s5451
          %s5453 = sand.u32 %s138, 1
          %s5454 = smul.addr %s5453, 4
          %s5455 = scalar_lea.vmem [#allocation2], %s5454
          %5456 = dma.done %s5452, 64
        $region52: #{tpu_custom_call.1} parent=47 // pred_fallthru
          _
      $region48: #{tpu_custom_call.1} parent=5 // pred_fallthru
        _
    $region6: #{tpu_custom_call.1} parent=1 // loop_footer
      %s18 = sadd.s32 1, %s14
    $region7: #{tpu_custom_call.1} parent=1 // loop_footer_branch
      %13 = sbr.rel target = $region3
    $region8: #{tpu_custom_call.1} parent=1 // loop_exit
      _
    %5457 = vsyncpa [#allocation3], 1
    %s5458 = scalar_lea.sflag [#allocation3], 1
    %5459 = vsyncpa %s5458, 1

</llo_original>
